<compile_context>
chip_gen: v7x
topology: tpu7x:2x2x1
jax: 0.10.0
libtpu: 0.0.40
codegen_flags: <defaults>
</compile_context>

<pallas_src>
import jax
import jax.numpy as jnp
from jax import lax
from jax.experimental import pallas as pl
from jax.experimental.pallas import tpu as pltpu


def _make_kernel(T, bb, Hp, n_chains):
    TB = T * bb
    bbh = bb // n_chains

    def kernel(tok_sref,     # (B*T,)    i32  SMEM (scalar prefetch, full array)
               emb_hbm,      # (V, E)    f32  HBM (memory_space=pl.ANY)
               lens_ref,     # (bb, 1)   i32  VMEM
               w_ih_ref,     # (E, 3Hp)  bf16 W_ih^T (gate-padded)
               w_hh_ref,     # (Hp, 3Hp) bf16 W_hh^T (gate-padded)
               b_gi_ref,     # (1, 3Hp)  f32  b_ih + b_hh[r|z] (n-block: b_ih only)
               b_hhn_ref,    # (1, Hp)   f32  b_hh n-gate block
               noise_ref,    # (bb, Hp)  f32  pre-sampled N(0, std)
               out_ref,      # (bb, Hp)  f32
               x_vmem,       # (TB, E)   f32  gathered embeddings (scratch)
               gi_vmem,      # (TB, 3Hp) f32  hoisted GI projection (scratch)
               sem):         # DMA semaphore
        b0 = pl.program_id(0) * bb            # global batch offset of this block

        # ---- 1) embedding row gather: HBM -> VMEM, one DMA per (t, b) ------
        # x_vmem rows are time-major: row = t*bb + b_local.
        @pl.loop(0, T)
        def _(t):
            @pl.loop(0, bb)
            def _(b):
                tok = tok_sref[(b0 + b) * T + t]
                pltpu.make_async_copy(
                    emb_hbm.at[pl.ds(tok, 1), :],
                    x_vmem.at[pl.ds(t * bb + b, 1), :],
                    sem).start()

        # all row copies share one semaphore and have identical sizes, so
        # waiting TB times with a same-sized descriptor drains them all.
        @pl.loop(0, TB)
        def _(r):
            pltpu.make_async_copy(emb_hbm.at[pl.ds(0, 1), :],
                                  x_vmem.at[pl.ds(0, 1), :],
                                  sem).wait()

        # functional.dropout(x, 0.5, training=False) is the identity (eval).

        # ---- 2) hoisted input-side projection: one big bf16 MXU matmul -----
        x_bf16 = x_vmem[...].astype(jnp.bfloat16)                      # (TB, E)
        gi_vmem[...] = (jnp.dot(x_bf16, w_ih_ref[...],
                                preferred_element_type=jnp.float32)
                        + b_gi_ref[...])                               # (TB, 3Hp)

        w_hh = w_hh_ref[...]                                           # (Hp, 3Hp) bf16
        b_hhn = jnp.broadcast_to(b_hhn_ref[...], (bbh, Hp))            # hoisted
        lens = lens_ref[...]                                           # (bb, 1) i32
        lens_c = [lens[c * bbh:(c + 1) * bbh, :] for c in range(n_chains)]

        # ---- 3) GRU recurrence: n_chains independent sub-batch chains ------
        hs = [jnp.zeros((bbh, Hp), jnp.float32) for _ in range(n_chains)]
        for t in range(T):                      # static small T (see TODO)
            for c in range(n_chains):
                h = hs[c]
                row0 = t * bb + c * bbh         # static, multiple of 8
                gi = gi_vmem[row0:row0 + bbh, :]                       # (bbh, 3Hp)
                gh = jnp.dot(h.astype(jnp.bfloat16), w_hh,
                             preferred_element_type=jnp.float32)       # (bbh, 3Hp)
                r = jax.nn.sigmoid(gi[:, 0:Hp] + gh[:, 0:Hp])
                z = jax.nn.sigmoid(gi[:, Hp:2 * Hp] + gh[:, Hp:2 * Hp])
                n = jnp.tanh(gi[:, 2 * Hp:] + r * (gh[:, 2 * Hp:] + b_hhn))
                h_new = n + z * (h - n)         # == (1-z)*n + z*h
                # pack_padded_sequence semantics: freeze h once t >= utt_len
                hs[c] = jnp.where(lens_c[c] > t, h_new, h)

        # enc_utts = enc_utts + normal(0, noise_std); dense (bbh, Hp) stores
        for c in range(n_chains):
            sl = slice(c * bbh, (c + 1) * bbh)
            out_ref[sl, :] = hs[c] + noise_ref[sl, :]

    return kernel


def _round_up(x, m):
    return (x + m - 1) // m * m


def _pad_gates(w, H, Hp):
    """Pad each of the 3 gate blocks [r|z|n] on the last axis from H to Hp."""
    if Hp == H:
        return w
    parts = []
    for g in range(3):
        blk = w[..., g * H:(g + 1) * H]
        pad = [(0, 0)] * (w.ndim - 1) + [(0, Hp - H)]
        parts.append(jnp.pad(blk, pad))
    return jnp.concatenate(parts, axis=-1)


def utterance_encoder(tokens, utt_lens, emb_table, w_ih, w_hh, b_ih, b_hh,
                      noise, *, block_b=None):
    """tokens (B,T) i32; w_ih (E,3H)=W_ih^T; w_hh (H,3H)=W_hh^T; noise (B,H)."""
    B, T = tokens.shape
    V, E = emb_table.shape
    H = w_hh.shape[0]
    Hp = _round_up(H, 128)
    G3 = 3 * Hp

    if block_b is None:
        # >=2 grid entries when B allows (v7x megacore).  For very large B
        # pass block_b explicitly (128-256 fills the MXU M dimension).
        block_b = B // 2 if (B % 16 == 0) else B
    assert B % block_b == 0 and block_b % 8 == 0, \
        "block_b must divide B and be a multiple of 8"
    n_chains = 2 if block_b % 16 == 0 else 1
    TB = T * block_b

    # glue: clamped flat ids (SMEM), 2-D lengths, gate-padded bf16 weights,
    # folded biases, padded noise
    tok_flat = jnp.clip(tokens.astype(jnp.int32), 0, V - 1).reshape(B * T)
    lens2d = utt_lens.astype(jnp.int32).reshape(B, 1)
    w_ih_p = _pad_gates(w_ih, H, Hp).astype(jnp.bfloat16)                   # (E, 3Hp)
    w_hh_p = jnp.pad(_pad_gates(w_hh, H, Hp),
                     ((0, Hp - H), (0, 0))).astype(jnp.bfloat16)            # (Hp, 3Hp)
    b_ih_p = _pad_gates(b_ih, H, Hp).astype(jnp.float32)                    # (1, 3Hp)
    b_hh_p = _pad_gates(b_hh, H, Hp).astype(jnp.float32)                    # (1, 3Hp)
    b_gi_p = b_ih_p.at[:, :2 * Hp].add(b_hh_p[:, :2 * Hp])                  # fold r,z
    b_hhn_p = b_hh_p[:, 2 * Hp:]                                            # (1, Hp)
    noise_p = jnp.pad(noise, ((0, 0), (0, Hp - H))).astype(jnp.float32)     # (B, Hp)
    emb_f32 = emb_table.astype(jnp.float32)

    kernel = _make_kernel(T, block_b, Hp, n_chains)
    const = lambda i, *_: (0, 0)
    out_p = pl.pallas_call(
        kernel,
        out_shape=jax.ShapeDtypeStruct((B, Hp), jnp.float32),
        grid_spec=pltpu.PrefetchScalarGridSpec(
            num_scalar_prefetch=1,
            grid=(B // block_b,),
            in_specs=[
                pl.BlockSpec(memory_space=pl.ANY),                     # emb (HBM)
                pl.BlockSpec((block_b, 1), lambda i, *_: (i, 0)),      # lengths
                pl.BlockSpec((E, G3), const),                          # W_ih^T (bf16)
                pl.BlockSpec((Hp, G3), const),                         # W_hh^T (bf16)
                pl.BlockSpec((1, G3), const),                          # b_gi
                pl.BlockSpec((1, Hp), const),                          # b_hh n-gate
                pl.BlockSpec((block_b, Hp), lambda i, *_: (i, 0)),     # noise
            ],
            out_specs=pl.BlockSpec((block_b, Hp), lambda i, *_: (i, 0)),
            scratch_shapes=[
                pltpu.VMEM((TB, E), jnp.float32),       # gathered embeddings
                pltpu.VMEM((TB, G3), jnp.float32),      # staged GI projection
                pltpu.SemaphoreType.DMA(()),            # gather semaphore
            ]),
        compiler_params=pltpu.CompilerParams(
            dimension_semantics=("parallel",),
            vmem_limit_bytes=32 * 1024 * 1024),
    )(tok_flat, emb_f32, lens2d, w_ih_p, w_hh_p, b_gi_p, b_hhn_p, noise_p)
    return out_p[:, :H]


if __name__ == "__main__":
    B, T, V, E, H = 32, 8, 64, 32, 32
    noise_std = 0.1

    key = jax.random.PRNGKey(0)
    ks = jax.random.split(key, 8)
    tokens = jax.random.randint(ks[0], (B, T), 0, V, dtype=jnp.int32)
    utt_lens = jax.random.randint(ks[1], (B,), 1, T + 1, dtype=jnp.int32)
    emb_table = jax.random.normal(ks[2], (V, E), jnp.float32) * 0.1
    w_ih = jax.random.normal(ks[3], (E, 3 * H), jnp.float32) * 0.1   # W_ih^T
    w_hh = jax.random.normal(ks[4], (H, 3 * H), jnp.float32) * 0.1   # W_hh^T
    b_ih = jax.random.normal(ks[5], (1, 3 * H), jnp.float32) * 0.1
    b_hh = jax.random.normal(ks[6], (1, 3 * H), jnp.float32) * 0.1
    # torch.normal(zeros, noise_std) equivalent, pre-sampled with JAX's PRNG
    noise = jax.random.normal(ks[7], (B, H), jnp.float32) * noise_std

    out = utterance_encoder(tokens, utt_lens, emb_table, w_ih, w_hh,
                            b_ih, b_hh, noise)
    out = jax.block_until_ready(out)

    # pure-JAX f32 reference (unpadded H) for a correctness sanity check
    def reference():
        x = emb_table[tokens]                                        # (B, T, E)
        h = jnp.zeros((B, H), jnp.float32)
        for t in range(T):
            gi = x[:, t] @ w_ih + b_ih
            gh = h @ w_hh + b_hh
            r = jax.nn.sigmoid(gi[:, :H] + gh[:, :H])
            z = jax.nn.sigmoid(gi[:, H:2 * H] + gh[:, H:2 * H])
            n = jnp.tanh(gi[:, 2 * H:] + r * gh[:, 2 * H:])
            h_new = (1.0 - z) * n + z * h
            m = (utt_lens > t)[:, None]
            h = jnp.where(m, h_new, h)
        return h + noise

    assert out.shape == (B, H)
    # bf16 matmul operands (MXU-native) -> relaxed tolerance vs. the f32 ref
    assert jnp.allclose(out, reference(), atol=2e-2, rtol=2e-2)
    print("KERNEL_OK")
</pallas_src>

<mosaic_0001>
module attributes {stable_mosaic.version = 11 : i64} {
  func.func @kernel(%arg0: i32, %arg1: memref<256xi32, #tpu.memory_space<smem>>, %arg2: memref<64x32xf32, #tpu.memory_space<any>>, %arg3: memref<16x1xi32, #tpu.memory_space<vmem>>, %arg4: memref<32x384xbf16, #tpu.memory_space<vmem>>, %arg5: memref<128x384xbf16, #tpu.memory_space<vmem>>, %arg6: memref<1x384xf32, #tpu.memory_space<vmem>>, %arg7: memref<1x128xf32, #tpu.memory_space<vmem>>, %arg8: memref<16x128xf32, #tpu.memory_space<vmem>>, %arg9: memref<16x128xf32, #tpu.memory_space<vmem>>, %arg10: memref<128x32xf32, #tpu.memory_space<vmem>>, %arg11: memref<128x384xf32, #tpu.memory_space<vmem>>, %arg12: memref<!tpu.dma_semaphore, #tpu.memory_space<semaphore_mem>>) attributes {dimension_semantics = [#tpu.dimension_semantics<parallel>], iteration_bounds = array<i64: 2>, scalar_prefetch = 1 : i64, scratch_operands = 3 : i64, tpu.core_type = #tpu.core_type<tc>, window_params = [{}, {transform_indices = @transform_1, window_bounds = array<i64: 16, 1>}, {pipeline_mode = #tpu.pipeline_mode<synchronous>, transform_indices = @transform_2, window_bounds = array<i64: 32, 384>}, {pipeline_mode = #tpu.pipeline_mode<synchronous>, transform_indices = @transform_3, window_bounds = array<i64: 128, 384>}, {pipeline_mode = #tpu.pipeline_mode<synchronous>, transform_indices = @transform_4, window_bounds = array<i64: 1, 384>}, {pipeline_mode = #tpu.pipeline_mode<synchronous>, transform_indices = @transform_5, window_bounds = array<i64: 1, 128>}, {transform_indices = @transform_6, window_bounds = array<i64: 16, 128>}, {transform_indices = @transform_7, window_bounds = array<i64: 16, 128>}]} {
    %c16_i32 = arith.constant 16 : i32
    %0 = arith.muli %arg0, %c16_i32 : i32
    %c0_i32 = arith.constant 0 : i32
    %c8_i32 = arith.constant 8 : i32
    %1 = arith.addi %c0_i32, %c8_i32 : i32
    %c1_i32 = arith.constant 1 : i32
    scf.for %arg13 = %c0_i32 to %1 step %c1_i32  : i32 {
      %c1_i32_101 = arith.constant 1 : i32
      %554 = arith.muli %arg13, %c1_i32_101 : i32
      %c0_i32_102 = arith.constant 0 : i32
      %555 = arith.addi %c0_i32_102, %554 : i32
      %c0_i32_103 = arith.constant 0 : i32
      %c16_i32_104 = arith.constant 16 : i32
      %556 = arith.addi %c0_i32_103, %c16_i32_104 : i32
      %c1_i32_105 = arith.constant 1 : i32
      scf.for %arg14 = %c0_i32_103 to %556 step %c1_i32_105  : i32 {
        %c1_i32_107 = arith.constant 1 : i32
        %557 = arith.muli %arg14, %c1_i32_107 : i32
        %c0_i32_108 = arith.constant 0 : i32
        %558 = arith.addi %c0_i32_108, %557 : i32
        %559 = arith.addi %0, %558 : i32
        %c8_i32_109 = arith.constant 8 : i32
        %560 = arith.muli %559, %c8_i32_109 : i32
        %561 = arith.addi %560, %555 : i32
        %562 = arith.index_cast %561 : i32 to index
        %563 = memref.load %arg1[%562] : memref<256xi32, #tpu.memory_space<smem>>
        %c16_i32_110 = arith.constant 16 : i32
        %564 = arith.muli %555, %c16_i32_110 : i32
        %565 = arith.addi %564, %558 : i32
        %c0_i32_111 = arith.constant 0 : i32
        %566 = tpu.memref_slice %arg2[%563, %c0_i32_111] : memref<64x32xf32, #tpu.memory_space<any>> -> memref<1x32xf32, #tpu.memory_space<any>>
        %c0_i32_112 = arith.constant 0 : i32
        %567 = tpu.memref_slice %arg10[%565, %c0_i32_112] : memref<128x32xf32, #tpu.memory_space<vmem>> -> memref<1x32xf32, #tpu.memory_space<vmem>>
        tpu.enqueue_dma source(%566 : memref<1x32xf32, #tpu.memory_space<any>>) target(%567 : memref<1x32xf32, #tpu.memory_space<vmem>>) target_semaphore(%arg12 : memref<!tpu.dma_semaphore, #tpu.memory_space<semaphore_mem>>)
      }
      %c16_i32_106 = arith.constant 16 : i32
    }
    %c8_i32_0 = arith.constant 8 : i32
    %c0_i32_1 = arith.constant 0 : i32
    %c128_i32 = arith.constant 128 : i32
    %2 = arith.addi %c0_i32_1, %c128_i32 : i32
    %c1_i32_2 = arith.constant 1 : i32
    scf.for %arg13 = %c0_i32_1 to %2 step %c1_i32_2  : i32 {
      %c0_i32_101 = arith.constant 0 : i32
      %c0_i32_102 = arith.constant 0 : i32
      %554 = tpu.memref_slice %arg2[%c0_i32_101, %c0_i32_102] : memref<64x32xf32, #tpu.memory_space<any>> -> memref<1x32xf32, #tpu.memory_space<any>>
      %c0_i32_103 = arith.constant 0 : i32
      %c0_i32_104 = arith.constant 0 : i32
      %555 = tpu.memref_slice %arg10[%c0_i32_103, %c0_i32_104] : memref<128x32xf32, #tpu.memory_space<vmem>> -> memref<1x32xf32, #tpu.memory_space<vmem>>
      tpu.wait_dma2 semaphore(%arg12 : memref<!tpu.dma_semaphore, #tpu.memory_space<semaphore_mem>>) src(%554 : memref<1x32xf32, #tpu.memory_space<any>>) dst(%555 : memref<1x32xf32, #tpu.memory_space<vmem>>)
    }
    %c0 = arith.constant 0 : index
    %c0_3 = arith.constant 0 : index
    %3 = vector.load %arg10[%c0, %c0_3] : memref<128x32xf32, #tpu.memory_space<vmem>>, vector<128x32xf32>
    %4 = arith.truncf %3 : vector<128x32xf32> to vector<128x32xbf16>
    %c0_4 = arith.constant 0 : index
    %c0_5 = arith.constant 0 : index
    %5 = vector.load %arg4[%c0_4, %c0_5] : memref<32x384xbf16, #tpu.memory_space<vmem>>, vector<32x384xbf16>
    %cst = arith.constant dense<0.000000e+00> : vector<128x384xf32>
    %6 = tpu.matmul %4, %5, %cst {dimension_numbers = #tpu.dot_dimension_numbers<[1], [0], [0], [1], [0, 0, 1, 1], [], []>} : vector<128x32xbf16>, vector<32x384xbf16>, vector<128x384xf32> -> vector<128x384xf32>
    %c0_6 = arith.constant 0 : index
    %c0_7 = arith.constant 0 : index
    %7 = vector.load %arg6[%c0_6, %c0_7] : memref<1x384xf32, #tpu.memory_space<vmem>>, vector<1x384xf32>
    %8 = vector.broadcast %7 : vector<1x384xf32> to vector<128x384xf32>
    %9 = arith.addf %6, %8 : vector<128x384xf32>
    %c0_8 = arith.constant 0 : index
    %c0_9 = arith.constant 0 : index
    %10 = vector.load %arg11[%c0_8, %c0_9] : memref<128x384xf32, #tpu.memory_space<vmem>>, vector<128x384xf32>
    tpu.vector_store %arg11[%c0_8, %c0_9], %9 {strides = array<i32>} : memref<128x384xf32, #tpu.memory_space<vmem>>, vector<128x384xf32>,
    %c0_10 = arith.constant 0 : index
    %c0_11 = arith.constant 0 : index
    %11 = vector.load %arg5[%c0_10, %c0_11] : memref<128x384xbf16, #tpu.memory_space<vmem>>, vector<128x384xbf16>
    %c0_12 = arith.constant 0 : index
    %c0_13 = arith.constant 0 : index
    %12 = vector.load %arg7[%c0_12, %c0_13] : memref<1x128xf32, #tpu.memory_space<vmem>>, vector<1x128xf32>
    %13 = vector.shape_cast %12 : vector<1x128xf32> to vector<1x128xf32>
    %14 = vector.broadcast %13 : vector<1x128xf32> to vector<8x128xf32>
    %c0_14 = arith.constant 0 : index
    %c0_15 = arith.constant 0 : index
    %15 = vector.load %arg3[%c0_14, %c0_15] : memref<16x1xi32, #tpu.memory_space<vmem>>, vector<16x1xi32>
    %16 = vector.extract_strided_slice %15 {offsets = [0, 0], sizes = [8, 1], strides = [1, 1]} : vector<16x1xi32> to vector<8x1xi32>
    %17 = vector.extract_strided_slice %15 {offsets = [8, 0], sizes = [8, 1], strides = [1, 1]} : vector<16x1xi32> to vector<8x1xi32>
    %cst_16 = arith.constant 0.000000e+00 : f32
    %18 = vector.broadcast %cst_16 : f32 to vector<8x128xf32>
    %cst_17 = arith.constant 0.000000e+00 : f32
    %19 = vector.broadcast %cst_17 : f32 to vector<8x128xf32>
    %c0_18 = arith.constant 0 : index
    %c0_19 = arith.constant 0 : index
    %20 = vector.load %arg11[%c0_18, %c0_19] : memref<128x384xf32, #tpu.memory_space<vmem>>, vector<8x384xf32>
    %21 = arith.truncf %18 : vector<8x128xf32> to vector<8x128xbf16>
    %cst_20 = arith.constant dense<0.000000e+00> : vector<8x384xf32>
    %22 = tpu.matmul %21, %11, %cst_20 {dimension_numbers = #tpu.dot_dimension_numbers<[1], [0], [0], [1], [0, 0, 1, 1], [], []>} : vector<8x128xbf16>, vector<128x384xbf16>, vector<8x384xf32> -> vector<8x384xf32>
    %23 = vector.extract_strided_slice %20 {offsets = [0, 0], sizes = [8, 128], strides = [1, 1]} : vector<8x384xf32> to vector<8x128xf32>
    %24 = vector.extract_strided_slice %22 {offsets = [0, 0], sizes = [8, 128], strides = [1, 1]} : vector<8x384xf32> to vector<8x128xf32>
    %25 = arith.addf %23, %24 : vector<8x128xf32>
    %26 = arith.negf %25 : vector<8x128xf32>
    %27 = math.exp %26 : vector<8x128xf32>
    %cst_21 = arith.constant 1.000000e+00 : f32
    %28 = vector.broadcast %cst_21 : f32 to vector<8x128xf32>
    %29 = arith.addf %28, %27 : vector<8x128xf32>
    %30 = arith.divf %28, %29 : vector<8x128xf32>
    %31 = vector.extract_strided_slice %20 {offsets = [0, 128], sizes = [8, 128], strides = [1, 1]} : vector<8x384xf32> to vector<8x128xf32>
    %32 = vector.extract_strided_slice %22 {offsets = [0, 128], sizes = [8, 128], strides = [1, 1]} : vector<8x384xf32> to vector<8x128xf32>
    %33 = arith.addf %31, %32 : vector<8x128xf32>
    %34 = arith.negf %33 : vector<8x128xf32>
    %35 = math.exp %34 : vector<8x128xf32>
    %cst_22 = arith.constant 1.000000e+00 : f32
    %36 = vector.broadcast %cst_22 : f32 to vector<8x128xf32>
    %37 = arith.addf %36, %35 : vector<8x128xf32>
    %38 = arith.divf %36, %37 : vector<8x128xf32>
    %39 = vector.extract_strided_slice %20 {offsets = [0, 256], sizes = [8, 128], strides = [1, 1]} : vector<8x384xf32> to vector<8x128xf32>
    %40 = vector.extract_strided_slice %22 {offsets = [0, 256], sizes = [8, 128], strides = [1, 1]} : vector<8x384xf32> to vector<8x128xf32>
    %41 = arith.addf %40, %14 : vector<8x128xf32>
    %42 = arith.mulf %30, %41 : vector<8x128xf32>
    %43 = arith.addf %39, %42 : vector<8x128xf32>
    %44 = math.tanh %43 : vector<8x128xf32>
    %45 = arith.subf %18, %44 : vector<8x128xf32>
    %46 = arith.mulf %38, %45 : vector<8x128xf32>
    %47 = arith.addf %44, %46 : vector<8x128xf32>
    %c0_i32_23 = arith.constant 0 : i32
    %48 = vector.broadcast %c0_i32_23 : i32 to vector<8x1xi32>
    %49 = arith.cmpi sgt, %16, %48 : vector<8x1xi32>
    %50 = vector.shape_cast %49 : vector<8x1xi1> to vector<8x1xi1>
    %51 = vector.broadcast %50 : vector<8x1xi1> to vector<8x128xi1>
    %52 = arith.select %51, %47, %18 : vector<8x128xi1>, vector<8x128xf32>
    %c8 = arith.constant 8 : index
    %c0_24 = arith.constant 0 : index
    %53 = vector.load %arg11[%c8, %c0_24] : memref<128x384xf32, #tpu.memory_space<vmem>>, vector<8x384xf32>
    %54 = arith.truncf %19 : vector<8x128xf32> to vector<8x128xbf16>
    %cst_25 = arith.constant dense<0.000000e+00> : vector<8x384xf32>
    %55 = tpu.matmul %54, %11, %cst_25 {dimension_numbers = #tpu.dot_dimension_numbers<[1], [0], [0], [1], [0, 0, 1, 1], [], []>} : vector<8x128xbf16>, vector<128x384xbf16>, vector<8x384xf32> -> vector<8x384xf32>
    %56 = vector.extract_strided_slice %53 {offsets = [0, 0], sizes = [8, 128], strides = [1, 1]} : vector<8x384xf32> to vector<8x128xf32>
    %57 = vector.extract_strided_slice %55 {offsets = [0, 0], sizes = [8, 128], strides = [1, 1]} : vector<8x384xf32> to vector<8x128xf32>
    %58 = arith.addf %56, %57 : vector<8x128xf32>
    %59 = arith.negf %58 : vector<8x128xf32>
    %60 = math.exp %59 : vector<8x128xf32>
    %cst_26 = arith.constant 1.000000e+00 : f32
    %61 = vector.broadcast %cst_26 : f32 to vector<8x128xf32>
    %62 = arith.addf %61, %60 : vector<8x128xf32>
    %63 = arith.divf %61, %62 : vector<8x128xf32>
    %64 = vector.extract_strided_slice %53 {offsets = [0, 128], sizes = [8, 128], strides = [1, 1]} : vector<8x384xf32> to vector<8x128xf32>
    %65 = vector.extract_strided_slice %55 {offsets = [0, 128], sizes = [8, 128], strides = [1, 1]} : vector<8x384xf32> to vector<8x128xf32>
    %66 = arith.addf %64, %65 : vector<8x128xf32>
    %67 = arith.negf %66 : vector<8x128xf32>
    %68 = math.exp %67 : vector<8x128xf32>
    %cst_27 = arith.constant 1.000000e+00 : f32
    %69 = vector.broadcast %cst_27 : f32 to vector<8x128xf32>
    %70 = arith.addf %69, %68 : vector<8x128xf32>
    %71 = arith.divf %69, %70 : vector<8x128xf32>
    %72 = vector.extract_strided_slice %53 {offsets = [0, 256], sizes = [8, 128], strides = [1, 1]} : vector<8x384xf32> to vector<8x128xf32>
    %73 = vector.extract_strided_slice %55 {offsets = [0, 256], sizes = [8, 128], strides = [1, 1]} : vector<8x384xf32> to vector<8x128xf32>
    %74 = arith.addf %73, %14 : vector<8x128xf32>
    %75 = arith.mulf %63, %74 : vector<8x128xf32>
    %76 = arith.addf %72, %75 : vector<8x128xf32>
    %77 = math.tanh %76 : vector<8x128xf32>
    %78 = arith.subf %19, %77 : vector<8x128xf32>
    %79 = arith.mulf %71, %78 : vector<8x128xf32>
    %80 = arith.addf %77, %79 : vector<8x128xf32>
    %c0_i32_28 = arith.constant 0 : i32
    %81 = vector.broadcast %c0_i32_28 : i32 to vector<8x1xi32>
    %82 = arith.cmpi sgt, %17, %81 : vector<8x1xi32>
    %83 = vector.shape_cast %82 : vector<8x1xi1> to vector<8x1xi1>
    %84 = vector.broadcast %83 : vector<8x1xi1> to vector<8x128xi1>
    %85 = arith.select %84, %80, %19 : vector<8x128xi1>, vector<8x128xf32>
    %c16 = arith.constant 16 : index
    %c0_29 = arith.constant 0 : index
    %86 = vector.load %arg11[%c16, %c0_29] : memref<128x384xf32, #tpu.memory_space<vmem>>, vector<8x384xf32>
    %87 = arith.truncf %52 : vector<8x128xf32> to vector<8x128xbf16>
    %cst_30 = arith.constant dense<0.000000e+00> : vector<8x384xf32>
    %88 = tpu.matmul %87, %11, %cst_30 {dimension_numbers = #tpu.dot_dimension_numbers<[1], [0], [0], [1], [0, 0, 1, 1], [], []>} : vector<8x128xbf16>, vector<128x384xbf16>, vector<8x384xf32> -> vector<8x384xf32>
    %89 = vector.extract_strided_slice %86 {offsets = [0, 0], sizes = [8, 128], strides = [1, 1]} : vector<8x384xf32> to vector<8x128xf32>
    %90 = vector.extract_strided_slice %88 {offsets = [0, 0], sizes = [8, 128], strides = [1, 1]} : vector<8x384xf32> to vector<8x128xf32>
    %91 = arith.addf %89, %90 : vector<8x128xf32>
    %92 = arith.negf %91 : vector<8x128xf32>
    %93 = math.exp %92 : vector<8x128xf32>
    %cst_31 = arith.constant 1.000000e+00 : f32
    %94 = vector.broadcast %cst_31 : f32 to vector<8x128xf32>
    %95 = arith.addf %94, %93 : vector<8x128xf32>
    %96 = arith.divf %94, %95 : vector<8x128xf32>
    %97 = vector.extract_strided_slice %86 {offsets = [0, 128], sizes = [8, 128], strides = [1, 1]} : vector<8x384xf32> to vector<8x128xf32>
    %98 = vector.extract_strided_slice %88 {offsets = [0, 128], sizes = [8, 128], strides = [1, 1]} : vector<8x384xf32> to vector<8x128xf32>
    %99 = arith.addf %97, %98 : vector<8x128xf32>
    %100 = arith.negf %99 : vector<8x128xf32>
    %101 = math.exp %100 : vector<8x128xf32>
    %cst_32 = arith.constant 1.000000e+00 : f32
    %102 = vector.broadcast %cst_32 : f32 to vector<8x128xf32>
    %103 = arith.addf %102, %101 : vector<8x128xf32>
    %104 = arith.divf %102, %103 : vector<8x128xf32>
    %105 = vector.extract_strided_slice %86 {offsets = [0, 256], sizes = [8, 128], strides = [1, 1]} : vector<8x384xf32> to vector<8x128xf32>
    %106 = vector.extract_strided_slice %88 {offsets = [0, 256], sizes = [8, 128], strides = [1, 1]} : vector<8x384xf32> to vector<8x128xf32>
    %107 = arith.addf %106, %14 : vector<8x128xf32>
    %108 = arith.mulf %96, %107 : vector<8x128xf32>
    %109 = arith.addf %105, %108 : vector<8x128xf32>
    %110 = math.tanh %109 : vector<8x128xf32>
    %111 = arith.subf %52, %110 : vector<8x128xf32>
    %112 = arith.mulf %104, %111 : vector<8x128xf32>
    %113 = arith.addf %110, %112 : vector<8x128xf32>
    %c1_i32_33 = arith.constant 1 : i32
    %114 = vector.broadcast %c1_i32_33 : i32 to vector<8x1xi32>
    %115 = arith.cmpi sgt, %16, %114 : vector<8x1xi32>
    %116 = vector.shape_cast %115 : vector<8x1xi1> to vector<8x1xi1>
    %117 = vector.broadcast %116 : vector<8x1xi1> to vector<8x128xi1>
    %118 = arith.select %117, %113, %52 : vector<8x128xi1>, vector<8x128xf32>
    %c24 = arith.constant 24 : index
    %c0_34 = arith.constant 0 : index
    %119 = vector.load %arg11[%c24, %c0_34] : memref<128x384xf32, #tpu.memory_space<vmem>>, vector<8x384xf32>
    %120 = arith.truncf %85 : vector<8x128xf32> to vector<8x128xbf16>
    %cst_35 = arith.constant dense<0.000000e+00> : vector<8x384xf32>
    %121 = tpu.matmul %120, %11, %cst_35 {dimension_numbers = #tpu.dot_dimension_numbers<[1], [0], [0], [1], [0, 0, 1, 1], [], []>} : vector<8x128xbf16>, vector<128x384xbf16>, vector<8x384xf32> -> vector<8x384xf32>
    %122 = vector.extract_strided_slice %119 {offsets = [0, 0], sizes = [8, 128], strides = [1, 1]} : vector<8x384xf32> to vector<8x128xf32>
    %123 = vector.extract_strided_slice %121 {offsets = [0, 0], sizes = [8, 128], strides = [1, 1]} : vector<8x384xf32> to vector<8x128xf32>
    %124 = arith.addf %122, %123 : vector<8x128xf32>
    %125 = arith.negf %124 : vector<8x128xf32>
    %126 = math.exp %125 : vector<8x128xf32>
    %cst_36 = arith.constant 1.000000e+00 : f32
    %127 = vector.broadcast %cst_36 : f32 to vector<8x128xf32>
    %128 = arith.addf %127, %126 : vector<8x128xf32>
    %129 = arith.divf %127, %128 : vector<8x128xf32>
    %130 = vector.extract_strided_slice %119 {offsets = [0, 128], sizes = [8, 128], strides = [1, 1]} : vector<8x384xf32> to vector<8x128xf32>
    %131 = vector.extract_strided_slice %121 {offsets = [0, 128], sizes = [8, 128], strides = [1, 1]} : vector<8x384xf32> to vector<8x128xf32>
    %132 = arith.addf %130, %131 : vector<8x128xf32>
    %133 = arith.negf %132 : vector<8x128xf32>
    %134 = math.exp %133 : vector<8x128xf32>
    %cst_37 = arith.constant 1.000000e+00 : f32
    %135 = vector.broadcast %cst_37 : f32 to vector<8x128xf32>
    %136 = arith.addf %135, %134 : vector<8x128xf32>
    %137 = arith.divf %135, %136 : vector<8x128xf32>
    %138 = vector.extract_strided_slice %119 {offsets = [0, 256], sizes = [8, 128], strides = [1, 1]} : vector<8x384xf32> to vector<8x128xf32>
    %139 = vector.extract_strided_slice %121 {offsets = [0, 256], sizes = [8, 128], strides = [1, 1]} : vector<8x384xf32> to vector<8x128xf32>
    %140 = arith.addf %139, %14 : vector<8x128xf32>
    %141 = arith.mulf %129, %140 : vector<8x128xf32>
    %142 = arith.addf %138, %141 : vector<8x128xf32>
    %143 = math.tanh %142 : vector<8x128xf32>
    %144 = arith.subf %85, %143 : vector<8x128xf32>
    %145 = arith.mulf %137, %144 : vector<8x128xf32>
    %146 = arith.addf %143, %145 : vector<8x128xf32>
    %c1_i32_38 = arith.constant 1 : i32
    %147 = vector.broadcast %c1_i32_38 : i32 to vector<8x1xi32>
    %148 = arith.cmpi sgt, %17, %147 : vector<8x1xi32>
    %149 = vector.shape_cast %148 : vector<8x1xi1> to vector<8x1xi1>
    %150 = vector.broadcast %149 : vector<8x1xi1> to vector<8x128xi1>
    %151 = arith.select %150, %146, %85 : vector<8x128xi1>, vector<8x128xf32>
    %c32 = arith.constant 32 : index
    %c0_39 = arith.constant 0 : index
    %152 = vector.load %arg11[%c32, %c0_39] : memref<128x384xf32, #tpu.memory_space<vmem>>, vector<8x384xf32>
    %153 = arith.truncf %118 : vector<8x128xf32> to vector<8x128xbf16>
    %cst_40 = arith.constant dense<0.000000e+00> : vector<8x384xf32>
    %154 = tpu.matmul %153, %11, %cst_40 {dimension_numbers = #tpu.dot_dimension_numbers<[1], [0], [0], [1], [0, 0, 1, 1], [], []>} : vector<8x128xbf16>, vector<128x384xbf16>, vector<8x384xf32> -> vector<8x384xf32>
    %155 = vector.extract_strided_slice %152 {offsets = [0, 0], sizes = [8, 128], strides = [1, 1]} : vector<8x384xf32> to vector<8x128xf32>
    %156 = vector.extract_strided_slice %154 {offsets = [0, 0], sizes = [8, 128], strides = [1, 1]} : vector<8x384xf32> to vector<8x128xf32>
    %157 = arith.addf %155, %156 : vector<8x128xf32>
    %158 = arith.negf %157 : vector<8x128xf32>
    %159 = math.exp %158 : vector<8x128xf32>
    %cst_41 = arith.constant 1.000000e+00 : f32
    %160 = vector.broadcast %cst_41 : f32 to vector<8x128xf32>
    %161 = arith.addf %160, %159 : vector<8x128xf32>
    %162 = arith.divf %160, %161 : vector<8x128xf32>
    %163 = vector.extract_strided_slice %152 {offsets = [0, 128], sizes = [8, 128], strides = [1, 1]} : vector<8x384xf32> to vector<8x128xf32>
    %164 = vector.extract_strided_slice %154 {offsets = [0, 128], sizes = [8, 128], strides = [1, 1]} : vector<8x384xf32> to vector<8x128xf32>
    %165 = arith.addf %163, %164 : vector<8x128xf32>
    %166 = arith.negf %165 : vector<8x128xf32>
    %167 = math.exp %166 : vector<8x128xf32>
    %cst_42 = arith.constant 1.000000e+00 : f32
    %168 = vector.broadcast %cst_42 : f32 to vector<8x128xf32>
    %169 = arith.addf %168, %167 : vector<8x128xf32>
    %170 = arith.divf %168, %169 : vector<8x128xf32>
    %171 = vector.extract_strided_slice %152 {offsets = [0, 256], sizes = [8, 128], strides = [1, 1]} : vector<8x384xf32> to vector<8x128xf32>
    %172 = vector.extract_strided_slice %154 {offsets = [0, 256], sizes = [8, 128], strides = [1, 1]} : vector<8x384xf32> to vector<8x128xf32>
    %173 = arith.addf %172, %14 : vector<8x128xf32>
    %174 = arith.mulf %162, %173 : vector<8x128xf32>
    %175 = arith.addf %171, %174 : vector<8x128xf32>
    %176 = math.tanh %175 : vector<8x128xf32>
    %177 = arith.subf %118, %176 : vector<8x128xf32>
    %178 = arith.mulf %170, %177 : vector<8x128xf32>
    %179 = arith.addf %176, %178 : vector<8x128xf32>
    %c2_i32 = arith.constant 2 : i32
    %180 = vector.broadcast %c2_i32 : i32 to vector<8x1xi32>
    %181 = arith.cmpi sgt, %16, %180 : vector<8x1xi32>
    %182 = vector.shape_cast %181 : vector<8x1xi1> to vector<8x1xi1>
    %183 = vector.broadcast %182 : vector<8x1xi1> to vector<8x128xi1>
    %184 = arith.select %183, %179, %118 : vector<8x128xi1>, vector<8x128xf32>
    %c40 = arith.constant 40 : index
    %c0_43 = arith.constant 0 : index
    %185 = vector.load %arg11[%c40, %c0_43] : memref<128x384xf32, #tpu.memory_space<vmem>>, vector<8x384xf32>
    %186 = arith.truncf %151 : vector<8x128xf32> to vector<8x128xbf16>
    %cst_44 = arith.constant dense<0.000000e+00> : vector<8x384xf32>
    %187 = tpu.matmul %186, %11, %cst_44 {dimension_numbers = #tpu.dot_dimension_numbers<[1], [0], [0], [1], [0, 0, 1, 1], [], []>} : vector<8x128xbf16>, vector<128x384xbf16>, vector<8x384xf32> -> vector<8x384xf32>
    %188 = vector.extract_strided_slice %185 {offsets = [0, 0], sizes = [8, 128], strides = [1, 1]} : vector<8x384xf32> to vector<8x128xf32>
    %189 = vector.extract_strided_slice %187 {offsets = [0, 0], sizes = [8, 128], strides = [1, 1]} : vector<8x384xf32> to vector<8x128xf32>
    %190 = arith.addf %188, %189 : vector<8x128xf32>
    %191 = arith.negf %190 : vector<8x128xf32>
    %192 = math.exp %191 : vector<8x128xf32>
    %cst_45 = arith.constant 1.000000e+00 : f32
    %193 = vector.broadcast %cst_45 : f32 to vector<8x128xf32>
    %194 = arith.addf %193, %192 : vector<8x128xf32>
    %195 = arith.divf %193, %194 : vector<8x128xf32>
    %196 = vector.extract_strided_slice %185 {offsets = [0, 128], sizes = [8, 128], strides = [1, 1]} : vector<8x384xf32> to vector<8x128xf32>
    %197 = vector.extract_strided_slice %187 {offsets = [0, 128], sizes = [8, 128], strides = [1, 1]} : vector<8x384xf32> to vector<8x128xf32>
    %198 = arith.addf %196, %197 : vector<8x128xf32>
    %199 = arith.negf %198 : vector<8x128xf32>
    %200 = math.exp %199 : vector<8x128xf32>
    %cst_46 = arith.constant 1.000000e+00 : f32
    %201 = vector.broadcast %cst_46 : f32 to vector<8x128xf32>
    %202 = arith.addf %201, %200 : vector<8x128xf32>
    %203 = arith.divf %201, %202 : vector<8x128xf32>
    %204 = vector.extract_strided_slice %185 {offsets = [0, 256], sizes = [8, 128], strides = [1, 1]} : vector<8x384xf32> to vector<8x128xf32>
    %205 = vector.extract_strided_slice %187 {offsets = [0, 256], sizes = [8, 128], strides = [1, 1]} : vector<8x384xf32> to vector<8x128xf32>
    %206 = arith.addf %205, %14 : vector<8x128xf32>
    %207 = arith.mulf %195, %206 : vector<8x128xf32>
    %208 = arith.addf %204, %207 : vector<8x128xf32>
    %209 = math.tanh %208 : vector<8x128xf32>
    %210 = arith.subf %151, %209 : vector<8x128xf32>
    %211 = arith.mulf %203, %210 : vector<8x128xf32>
    %212 = arith.addf %209, %211 : vector<8x128xf32>
    %c2_i32_47 = arith.constant 2 : i32
    %213 = vector.broadcast %c2_i32_47 : i32 to vector<8x1xi32>
    %214 = arith.cmpi sgt, %17, %213 : vector<8x1xi32>
    %215 = vector.shape_cast %214 : vector<8x1xi1> to vector<8x1xi1>
    %216 = vector.broadcast %215 : vector<8x1xi1> to vector<8x128xi1>
    %217 = arith.select %216, %212, %151 : vector<8x128xi1>, vector<8x128xf32>
    %c48 = arith.constant 48 : index
    %c0_48 = arith.constant 0 : index
    %218 = vector.load %arg11[%c48, %c0_48] : memref<128x384xf32, #tpu.memory_space<vmem>>, vector<8x384xf32>
    %219 = arith.truncf %184 : vector<8x128xf32> to vector<8x128xbf16>
    %cst_49 = arith.constant dense<0.000000e+00> : vector<8x384xf32>
    %220 = tpu.matmul %219, %11, %cst_49 {dimension_numbers = #tpu.dot_dimension_numbers<[1], [0], [0], [1], [0, 0, 1, 1], [], []>} : vector<8x128xbf16>, vector<128x384xbf16>, vector<8x384xf32> -> vector<8x384xf32>
    %221 = vector.extract_strided_slice %218 {offsets = [0, 0], sizes = [8, 128], strides = [1, 1]} : vector<8x384xf32> to vector<8x128xf32>
    %222 = vector.extract_strided_slice %220 {offsets = [0, 0], sizes = [8, 128], strides = [1, 1]} : vector<8x384xf32> to vector<8x128xf32>
    %223 = arith.addf %221, %222 : vector<8x128xf32>
    %224 = arith.negf %223 : vector<8x128xf32>
    %225 = math.exp %224 : vector<8x128xf32>
    %cst_50 = arith.constant 1.000000e+00 : f32
    %226 = vector.broadcast %cst_50 : f32 to vector<8x128xf32>
    %227 = arith.addf %226, %225 : vector<8x128xf32>
    %228 = arith.divf %226, %227 : vector<8x128xf32>
    %229 = vector.extract_strided_slice %218 {offsets = [0, 128], sizes = [8, 128], strides = [1, 1]} : vector<8x384xf32> to vector<8x128xf32>
    %230 = vector.extract_strided_slice %220 {offsets = [0, 128], sizes = [8, 128], strides = [1, 1]} : vector<8x384xf32> to vector<8x128xf32>
    %231 = arith.addf %229, %230 : vector<8x128xf32>
    %232 = arith.negf %231 : vector<8x128xf32>
    %233 = math.exp %232 : vector<8x128xf32>
    %cst_51 = arith.constant 1.000000e+00 : f32
    %234 = vector.broadcast %cst_51 : f32 to vector<8x128xf32>
    %235 = arith.addf %234, %233 : vector<8x128xf32>
    %236 = arith.divf %234, %235 : vector<8x128xf32>
    %237 = vector.extract_strided_slice %218 {offsets = [0, 256], sizes = [8, 128], strides = [1, 1]} : vector<8x384xf32> to vector<8x128xf32>
    %238 = vector.extract_strided_slice %220 {offsets = [0, 256], sizes = [8, 128], strides = [1, 1]} : vector<8x384xf32> to vector<8x128xf32>
    %239 = arith.addf %238, %14 : vector<8x128xf32>
    %240 = arith.mulf %228, %239 : vector<8x128xf32>
    %241 = arith.addf %237, %240 : vector<8x128xf32>
    %242 = math.tanh %241 : vector<8x128xf32>
    %243 = arith.subf %184, %242 : vector<8x128xf32>
    %244 = arith.mulf %236, %243 : vector<8x128xf32>
    %245 = arith.addf %242, %244 : vector<8x128xf32>
    %c3_i32 = arith.constant 3 : i32
    %246 = vector.broadcast %c3_i32 : i32 to vector<8x1xi32>
    %247 = arith.cmpi sgt, %16, %246 : vector<8x1xi32>
    %248 = vector.shape_cast %247 : vector<8x1xi1> to vector<8x1xi1>
    %249 = vector.broadcast %248 : vector<8x1xi1> to vector<8x128xi1>
    %250 = arith.select %249, %245, %184 : vector<8x128xi1>, vector<8x128xf32>
    %c56 = arith.constant 56 : index
    %c0_52 = arith.constant 0 : index
    %251 = vector.load %arg11[%c56, %c0_52] : memref<128x384xf32, #tpu.memory_space<vmem>>, vector<8x384xf32>
    %252 = arith.truncf %217 : vector<8x128xf32> to vector<8x128xbf16>
    %cst_53 = arith.constant dense<0.000000e+00> : vector<8x384xf32>
    %253 = tpu.matmul %252, %11, %cst_53 {dimension_numbers = #tpu.dot_dimension_numbers<[1], [0], [0], [1], [0, 0, 1, 1], [], []>} : vector<8x128xbf16>, vector<128x384xbf16>, vector<8x384xf32> -> vector<8x384xf32>
    %254 = vector.extract_strided_slice %251 {offsets = [0, 0], sizes = [8, 128], strides = [1, 1]} : vector<8x384xf32> to vector<8x128xf32>
    %255 = vector.extract_strided_slice %253 {offsets = [0, 0], sizes = [8, 128], strides = [1, 1]} : vector<8x384xf32> to vector<8x128xf32>
    %256 = arith.addf %254, %255 : vector<8x128xf32>
    %257 = arith.negf %256 : vector<8x128xf32>
    %258 = math.exp %257 : vector<8x128xf32>
    %cst_54 = arith.constant 1.000000e+00 : f32
    %259 = vector.broadcast %cst_54 : f32 to vector<8x128xf32>
    %260 = arith.addf %259, %258 : vector<8x128xf32>
    %261 = arith.divf %259, %260 : vector<8x128xf32>
    %262 = vector.extract_strided_slice %251 {offsets = [0, 128], sizes = [8, 128], strides = [1, 1]} : vector<8x384xf32> to vector<8x128xf32>
    %263 = vector.extract_strided_slice %253 {offsets = [0, 128], sizes = [8, 128], strides = [1, 1]} : vector<8x384xf32> to vector<8x128xf32>
    %264 = arith.addf %262, %263 : vector<8x128xf32>
    %265 = arith.negf %264 : vector<8x128xf32>
    %266 = math.exp %265 : vector<8x128xf32>
    %cst_55 = arith.constant 1.000000e+00 : f32
    %267 = vector.broadcast %cst_55 : f32 to vector<8x128xf32>
    %268 = arith.addf %267, %266 : vector<8x128xf32>
    %269 = arith.divf %267, %268 : vector<8x128xf32>
    %270 = vector.extract_strided_slice %251 {offsets = [0, 256], sizes = [8, 128], strides = [1, 1]} : vector<8x384xf32> to vector<8x128xf32>
    %271 = vector.extract_strided_slice %253 {offsets = [0, 256], sizes = [8, 128], strides = [1, 1]} : vector<8x384xf32> to vector<8x128xf32>
    %272 = arith.addf %271, %14 : vector<8x128xf32>
    %273 = arith.mulf %261, %272 : vector<8x128xf32>
    %274 = arith.addf %270, %273 : vector<8x128xf32>
    %275 = math.tanh %274 : vector<8x128xf32>
    %276 = arith.subf %217, %275 : vector<8x128xf32>
    %277 = arith.mulf %269, %276 : vector<8x128xf32>
    %278 = arith.addf %275, %277 : vector<8x128xf32>
    %c3_i32_56 = arith.constant 3 : i32
    %279 = vector.broadcast %c3_i32_56 : i32 to vector<8x1xi32>
    %280 = arith.cmpi sgt, %17, %279 : vector<8x1xi32>
    %281 = vector.shape_cast %280 : vector<8x1xi1> to vector<8x1xi1>
    %282 = vector.broadcast %281 : vector<8x1xi1> to vector<8x128xi1>
    %283 = arith.select %282, %278, %217 : vector<8x128xi1>, vector<8x128xf32>
    %c64 = arith.constant 64 : index
    %c0_57 = arith.constant 0 : index
    %284 = vector.load %arg11[%c64, %c0_57] : memref<128x384xf32, #tpu.memory_space<vmem>>, vector<8x384xf32>
    %285 = arith.truncf %250 : vector<8x128xf32> to vector<8x128xbf16>
    %cst_58 = arith.constant dense<0.000000e+00> : vector<8x384xf32>
    %286 = tpu.matmul %285, %11, %cst_58 {dimension_numbers = #tpu.dot_dimension_numbers<[1], [0], [0], [1], [0, 0, 1, 1], [], []>} : vector<8x128xbf16>, vector<128x384xbf16>, vector<8x384xf32> -> vector<8x384xf32>
    %287 = vector.extract_strided_slice %284 {offsets = [0, 0], sizes = [8, 128], strides = [1, 1]} : vector<8x384xf32> to vector<8x128xf32>
    %288 = vector.extract_strided_slice %286 {offsets = [0, 0], sizes = [8, 128], strides = [1, 1]} : vector<8x384xf32> to vector<8x128xf32>
    %289 = arith.addf %287, %288 : vector<8x128xf32>
    %290 = arith.negf %289 : vector<8x128xf32>
    %291 = math.exp %290 : vector<8x128xf32>
    %cst_59 = arith.constant 1.000000e+00 : f32
    %292 = vector.broadcast %cst_59 : f32 to vector<8x128xf32>
    %293 = arith.addf %292, %291 : vector<8x128xf32>
    %294 = arith.divf %292, %293 : vector<8x128xf32>
    %295 = vector.extract_strided_slice %284 {offsets = [0, 128], sizes = [8, 128], strides = [1, 1]} : vector<8x384xf32> to vector<8x128xf32>
    %296 = vector.extract_strided_slice %286 {offsets = [0, 128], sizes = [8, 128], strides = [1, 1]} : vector<8x384xf32> to vector<8x128xf32>
    %297 = arith.addf %295, %296 : vector<8x128xf32>
    %298 = arith.negf %297 : vector<8x128xf32>
    %299 = math.exp %298 : vector<8x128xf32>
    %cst_60 = arith.constant 1.000000e+00 : f32
    %300 = vector.broadcast %cst_60 : f32 to vector<8x128xf32>
    %301 = arith.addf %300, %299 : vector<8x128xf32>
    %302 = arith.divf %300, %301 : vector<8x128xf32>
    %303 = vector.extract_strided_slice %284 {offsets = [0, 256], sizes = [8, 128], strides = [1, 1]} : vector<8x384xf32> to vector<8x128xf32>
    %304 = vector.extract_strided_slice %286 {offsets = [0, 256], sizes = [8, 128], strides = [1, 1]} : vector<8x384xf32> to vector<8x128xf32>
    %305 = arith.addf %304, %14 : vector<8x128xf32>
    %306 = arith.mulf %294, %305 : vector<8x128xf32>
    %307 = arith.addf %303, %306 : vector<8x128xf32>
    %308 = math.tanh %307 : vector<8x128xf32>
    %309 = arith.subf %250, %308 : vector<8x128xf32>
    %310 = arith.mulf %302, %309 : vector<8x128xf32>
    %311 = arith.addf %308, %310 : vector<8x128xf32>
    %c4_i32 = arith.constant 4 : i32
    %312 = vector.broadcast %c4_i32 : i32 to vector<8x1xi32>
    %313 = arith.cmpi sgt, %16, %312 : vector<8x1xi32>
    %314 = vector.shape_cast %313 : vector<8x1xi1> to vector<8x1xi1>
    %315 = vector.broadcast %314 : vector<8x1xi1> to vector<8x128xi1>
    %316 = arith.select %315, %311, %250 : vector<8x128xi1>, vector<8x128xf32>
    %c72 = arith.constant 72 : index
    %c0_61 = arith.constant 0 : index
    %317 = vector.load %arg11[%c72, %c0_61] : memref<128x384xf32, #tpu.memory_space<vmem>>, vector<8x384xf32>
    %318 = arith.truncf %283 : vector<8x128xf32> to vector<8x128xbf16>
    %cst_62 = arith.constant dense<0.000000e+00> : vector<8x384xf32>
    %319 = tpu.matmul %318, %11, %cst_62 {dimension_numbers = #tpu.dot_dimension_numbers<[1], [0], [0], [1], [0, 0, 1, 1], [], []>} : vector<8x128xbf16>, vector<128x384xbf16>, vector<8x384xf32> -> vector<8x384xf32>
    %320 = vector.extract_strided_slice %317 {offsets = [0, 0], sizes = [8, 128], strides = [1, 1]} : vector<8x384xf32> to vector<8x128xf32>
    %321 = vector.extract_strided_slice %319 {offsets = [0, 0], sizes = [8, 128], strides = [1, 1]} : vector<8x384xf32> to vector<8x128xf32>
    %322 = arith.addf %320, %321 : vector<8x128xf32>
    %323 = arith.negf %322 : vector<8x128xf32>
    %324 = math.exp %323 : vector<8x128xf32>
    %cst_63 = arith.constant 1.000000e+00 : f32
    %325 = vector.broadcast %cst_63 : f32 to vector<8x128xf32>
    %326 = arith.addf %325, %324 : vector<8x128xf32>
    %327 = arith.divf %325, %326 : vector<8x128xf32>
    %328 = vector.extract_strided_slice %317 {offsets = [0, 128], sizes = [8, 128], strides = [1, 1]} : vector<8x384xf32> to vector<8x128xf32>
    %329 = vector.extract_strided_slice %319 {offsets = [0, 128], sizes = [8, 128], strides = [1, 1]} : vector<8x384xf32> to vector<8x128xf32>
    %330 = arith.addf %328, %329 : vector<8x128xf32>
    %331 = arith.negf %330 : vector<8x128xf32>
    %332 = math.exp %331 : vector<8x128xf32>
    %cst_64 = arith.constant 1.000000e+00 : f32
    %333 = vector.broadcast %cst_64 : f32 to vector<8x128xf32>
    %334 = arith.addf %333, %332 : vector<8x128xf32>
    %335 = arith.divf %333, %334 : vector<8x128xf32>
    %336 = vector.extract_strided_slice %317 {offsets = [0, 256], sizes = [8, 128], strides = [1, 1]} : vector<8x384xf32> to vector<8x128xf32>
    %337 = vector.extract_strided_slice %319 {offsets = [0, 256], sizes = [8, 128], strides = [1, 1]} : vector<8x384xf32> to vector<8x128xf32>
    %338 = arith.addf %337, %14 : vector<8x128xf32>
    %339 = arith.mulf %327, %338 : vector<8x128xf32>
    %340 = arith.addf %336, %339 : vector<8x128xf32>
    %341 = math.tanh %340 : vector<8x128xf32>
    %342 = arith.subf %283, %341 : vector<8x128xf32>
    %343 = arith.mulf %335, %342 : vector<8x128xf32>
    %344 = arith.addf %341, %343 : vector<8x128xf32>
    %c4_i32_65 = arith.constant 4 : i32
    %345 = vector.broadcast %c4_i32_65 : i32 to vector<8x1xi32>
    %346 = arith.cmpi sgt, %17, %345 : vector<8x1xi32>
    %347 = vector.shape_cast %346 : vector<8x1xi1> to vector<8x1xi1>
    %348 = vector.broadcast %347 : vector<8x1xi1> to vector<8x128xi1>
    %349 = arith.select %348, %344, %283 : vector<8x128xi1>, vector<8x128xf32>
    %c80 = arith.constant 80 : index
    %c0_66 = arith.constant 0 : index
    %350 = vector.load %arg11[%c80, %c0_66] : memref<128x384xf32, #tpu.memory_space<vmem>>, vector<8x384xf32>
    %351 = arith.truncf %316 : vector<8x128xf32> to vector<8x128xbf16>
    %cst_67 = arith.constant dense<0.000000e+00> : vector<8x384xf32>
    %352 = tpu.matmul %351, %11, %cst_67 {dimension_numbers = #tpu.dot_dimension_numbers<[1], [0], [0], [1], [0, 0, 1, 1], [], []>} : vector<8x128xbf16>, vector<128x384xbf16>, vector<8x384xf32> -> vector<8x384xf32>
    %353 = vector.extract_strided_slice %350 {offsets = [0, 0], sizes = [8, 128], strides = [1, 1]} : vector<8x384xf32> to vector<8x128xf32>
    %354 = vector.extract_strided_slice %352 {offsets = [0, 0], sizes = [8, 128], strides = [1, 1]} : vector<8x384xf32> to vector<8x128xf32>
    %355 = arith.addf %353, %354 : vector<8x128xf32>
    %356 = arith.negf %355 : vector<8x128xf32>
    %357 = math.exp %356 : vector<8x128xf32>
    %cst_68 = arith.constant 1.000000e+00 : f32
    %358 = vector.broadcast %cst_68 : f32 to vector<8x128xf32>
    %359 = arith.addf %358, %357 : vector<8x128xf32>
    %360 = arith.divf %358, %359 : vector<8x128xf32>
    %361 = vector.extract_strided_slice %350 {offsets = [0, 128], sizes = [8, 128], strides = [1, 1]} : vector<8x384xf32> to vector<8x128xf32>
    %362 = vector.extract_strided_slice %352 {offsets = [0, 128], sizes = [8, 128], strides = [1, 1]} : vector<8x384xf32> to vector<8x128xf32>
    %363 = arith.addf %361, %362 : vector<8x128xf32>
    %364 = arith.negf %363 : vector<8x128xf32>
    %365 = math.exp %364 : vector<8x128xf32>
    %cst_69 = arith.constant 1.000000e+00 : f32
    %366 = vector.broadcast %cst_69 : f32 to vector<8x128xf32>
    %367 = arith.addf %366, %365 : vector<8x128xf32>
    %368 = arith.divf %366, %367 : vector<8x128xf32>
    %369 = vector.extract_strided_slice %350 {offsets = [0, 256], sizes = [8, 128], strides = [1, 1]} : vector<8x384xf32> to vector<8x128xf32>
    %370 = vector.extract_strided_slice %352 {offsets = [0, 256], sizes = [8, 128], strides = [1, 1]} : vector<8x384xf32> to vector<8x128xf32>
    %371 = arith.addf %370, %14 : vector<8x128xf32>
    %372 = arith.mulf %360, %371 : vector<8x128xf32>
    %373 = arith.addf %369, %372 : vector<8x128xf32>
    %374 = math.tanh %373 : vector<8x128xf32>
    %375 = arith.subf %316, %374 : vector<8x128xf32>
    %376 = arith.mulf %368, %375 : vector<8x128xf32>
    %377 = arith.addf %374, %376 : vector<8x128xf32>
    %c5_i32 = arith.constant 5 : i32
    %378 = vector.broadcast %c5_i32 : i32 to vector<8x1xi32>
    %379 = arith.cmpi sgt, %16, %378 : vector<8x1xi32>
    %380 = vector.shape_cast %379 : vector<8x1xi1> to vector<8x1xi1>
    %381 = vector.broadcast %380 : vector<8x1xi1> to vector<8x128xi1>
    %382 = arith.select %381, %377, %316 : vector<8x128xi1>, vector<8x128xf32>
    %c88 = arith.constant 88 : index
    %c0_70 = arith.constant 0 : index
    %383 = vector.load %arg11[%c88, %c0_70] : memref<128x384xf32, #tpu.memory_space<vmem>>, vector<8x384xf32>
    %384 = arith.truncf %349 : vector<8x128xf32> to vector<8x128xbf16>
    %cst_71 = arith.constant dense<0.000000e+00> : vector<8x384xf32>
    %385 = tpu.matmul %384, %11, %cst_71 {dimension_numbers = #tpu.dot_dimension_numbers<[1], [0], [0], [1], [0, 0, 1, 1], [], []>} : vector<8x128xbf16>, vector<128x384xbf16>, vector<8x384xf32> -> vector<8x384xf32>
    %386 = vector.extract_strided_slice %383 {offsets = [0, 0], sizes = [8, 128], strides = [1, 1]} : vector<8x384xf32> to vector<8x128xf32>
    %387 = vector.extract_strided_slice %385 {offsets = [0, 0], sizes = [8, 128], strides = [1, 1]} : vector<8x384xf32> to vector<8x128xf32>
    %388 = arith.addf %386, %387 : vector<8x128xf32>
    %389 = arith.negf %388 : vector<8x128xf32>
    %390 = math.exp %389 : vector<8x128xf32>
    %cst_72 = arith.constant 1.000000e+00 : f32
    %391 = vector.broadcast %cst_72 : f32 to vector<8x128xf32>
    %392 = arith.addf %391, %390 : vector<8x128xf32>
    %393 = arith.divf %391, %392 : vector<8x128xf32>
    %394 = vector.extract_strided_slice %383 {offsets = [0, 128], sizes = [8, 128], strides = [1, 1]} : vector<8x384xf32> to vector<8x128xf32>
    %395 = vector.extract_strided_slice %385 {offsets = [0, 128], sizes = [8, 128], strides = [1, 1]} : vector<8x384xf32> to vector<8x128xf32>
    %396 = arith.addf %394, %395 : vector<8x128xf32>
    %397 = arith.negf %396 : vector<8x128xf32>
    %398 = math.exp %397 : vector<8x128xf32>
    %cst_73 = arith.constant 1.000000e+00 : f32
    %399 = vector.broadcast %cst_73 : f32 to vector<8x128xf32>
    %400 = arith.addf %399, %398 : vector<8x128xf32>
    %401 = arith.divf %399, %400 : vector<8x128xf32>
    %402 = vector.extract_strided_slice %383 {offsets = [0, 256], sizes = [8, 128], strides = [1, 1]} : vector<8x384xf32> to vector<8x128xf32>
    %403 = vector.extract_strided_slice %385 {offsets = [0, 256], sizes = [8, 128], strides = [1, 1]} : vector<8x384xf32> to vector<8x128xf32>
    %404 = arith.addf %403, %14 : vector<8x128xf32>
    %405 = arith.mulf %393, %404 : vector<8x128xf32>
    %406 = arith.addf %402, %405 : vector<8x128xf32>
    %407 = math.tanh %406 : vector<8x128xf32>
    %408 = arith.subf %349, %407 : vector<8x128xf32>
    %409 = arith.mulf %401, %408 : vector<8x128xf32>
    %410 = arith.addf %407, %409 : vector<8x128xf32>
    %c5_i32_74 = arith.constant 5 : i32
    %411 = vector.broadcast %c5_i32_74 : i32 to vector<8x1xi32>
    %412 = arith.cmpi sgt, %17, %411 : vector<8x1xi32>
    %413 = vector.shape_cast %412 : vector<8x1xi1> to vector<8x1xi1>
    %414 = vector.broadcast %413 : vector<8x1xi1> to vector<8x128xi1>
    %415 = arith.select %414, %410, %349 : vector<8x128xi1>, vector<8x128xf32>
    %c96 = arith.constant 96 : index
    %c0_75 = arith.constant 0 : index
    %416 = vector.load %arg11[%c96, %c0_75] : memref<128x384xf32, #tpu.memory_space<vmem>>, vector<8x384xf32>
    %417 = arith.truncf %382 : vector<8x128xf32> to vector<8x128xbf16>
    %cst_76 = arith.constant dense<0.000000e+00> : vector<8x384xf32>
    %418 = tpu.matmul %417, %11, %cst_76 {dimension_numbers = #tpu.dot_dimension_numbers<[1], [0], [0], [1], [0, 0, 1, 1], [], []>} : vector<8x128xbf16>, vector<128x384xbf16>, vector<8x384xf32> -> vector<8x384xf32>
    %419 = vector.extract_strided_slice %416 {offsets = [0, 0], sizes = [8, 128], strides = [1, 1]} : vector<8x384xf32> to vector<8x128xf32>
    %420 = vector.extract_strided_slice %418 {offsets = [0, 0], sizes = [8, 128], strides = [1, 1]} : vector<8x384xf32> to vector<8x128xf32>
    %421 = arith.addf %419, %420 : vector<8x128xf32>
    %422 = arith.negf %421 : vector<8x128xf32>
    %423 = math.exp %422 : vector<8x128xf32>
    %cst_77 = arith.constant 1.000000e+00 : f32
    %424 = vector.broadcast %cst_77 : f32 to vector<8x128xf32>
    %425 = arith.addf %424, %423 : vector<8x128xf32>
    %426 = arith.divf %424, %425 : vector<8x128xf32>
    %427 = vector.extract_strided_slice %416 {offsets = [0, 128], sizes = [8, 128], strides = [1, 1]} : vector<8x384xf32> to vector<8x128xf32>
    %428 = vector.extract_strided_slice %418 {offsets = [0, 128], sizes = [8, 128], strides = [1, 1]} : vector<8x384xf32> to vector<8x128xf32>
    %429 = arith.addf %427, %428 : vector<8x128xf32>
    %430 = arith.negf %429 : vector<8x128xf32>
    %431 = math.exp %430 : vector<8x128xf32>
    %cst_78 = arith.constant 1.000000e+00 : f32
    %432 = vector.broadcast %cst_78 : f32 to vector<8x128xf32>
    %433 = arith.addf %432, %431 : vector<8x128xf32>
    %434 = arith.divf %432, %433 : vector<8x128xf32>
    %435 = vector.extract_strided_slice %416 {offsets = [0, 256], sizes = [8, 128], strides = [1, 1]} : vector<8x384xf32> to vector<8x128xf32>
    %436 = vector.extract_strided_slice %418 {offsets = [0, 256], sizes = [8, 128], strides = [1, 1]} : vector<8x384xf32> to vector<8x128xf32>
    %437 = arith.addf %436, %14 : vector<8x128xf32>
    %438 = arith.mulf %426, %437 : vector<8x128xf32>
    %439 = arith.addf %435, %438 : vector<8x128xf32>
    %440 = math.tanh %439 : vector<8x128xf32>
    %441 = arith.subf %382, %440 : vector<8x128xf32>
    %442 = arith.mulf %434, %441 : vector<8x128xf32>
    %443 = arith.addf %440, %442 : vector<8x128xf32>
    %c6_i32 = arith.constant 6 : i32
    %444 = vector.broadcast %c6_i32 : i32 to vector<8x1xi32>
    %445 = arith.cmpi sgt, %16, %444 : vector<8x1xi32>
    %446 = vector.shape_cast %445 : vector<8x1xi1> to vector<8x1xi1>
    %447 = vector.broadcast %446 : vector<8x1xi1> to vector<8x128xi1>
    %448 = arith.select %447, %443, %382 : vector<8x128xi1>, vector<8x128xf32>
    %c104 = arith.constant 104 : index
    %c0_79 = arith.constant 0 : index
    %449 = vector.load %arg11[%c104, %c0_79] : memref<128x384xf32, #tpu.memory_space<vmem>>, vector<8x384xf32>
    %450 = arith.truncf %415 : vector<8x128xf32> to vector<8x128xbf16>
    %cst_80 = arith.constant dense<0.000000e+00> : vector<8x384xf32>
    %451 = tpu.matmul %450, %11, %cst_80 {dimension_numbers = #tpu.dot_dimension_numbers<[1], [0], [0], [1], [0, 0, 1, 1], [], []>} : vector<8x128xbf16>, vector<128x384xbf16>, vector<8x384xf32> -> vector<8x384xf32>
    %452 = vector.extract_strided_slice %449 {offsets = [0, 0], sizes = [8, 128], strides = [1, 1]} : vector<8x384xf32> to vector<8x128xf32>
    %453 = vector.extract_strided_slice %451 {offsets = [0, 0], sizes = [8, 128], strides = [1, 1]} : vector<8x384xf32> to vector<8x128xf32>
    %454 = arith.addf %452, %453 : vector<8x128xf32>
    %455 = arith.negf %454 : vector<8x128xf32>
    %456 = math.exp %455 : vector<8x128xf32>
    %cst_81 = arith.constant 1.000000e+00 : f32
    %457 = vector.broadcast %cst_81 : f32 to vector<8x128xf32>
    %458 = arith.addf %457, %456 : vector<8x128xf32>
    %459 = arith.divf %457, %458 : vector<8x128xf32>
    %460 = vector.extract_strided_slice %449 {offsets = [0, 128], sizes = [8, 128], strides = [1, 1]} : vector<8x384xf32> to vector<8x128xf32>
    %461 = vector.extract_strided_slice %451 {offsets = [0, 128], sizes = [8, 128], strides = [1, 1]} : vector<8x384xf32> to vector<8x128xf32>
    %462 = arith.addf %460, %461 : vector<8x128xf32>
    %463 = arith.negf %462 : vector<8x128xf32>
    %464 = math.exp %463 : vector<8x128xf32>
    %cst_82 = arith.constant 1.000000e+00 : f32
    %465 = vector.broadcast %cst_82 : f32 to vector<8x128xf32>
    %466 = arith.addf %465, %464 : vector<8x128xf32>
    %467 = arith.divf %465, %466 : vector<8x128xf32>
    %468 = vector.extract_strided_slice %449 {offsets = [0, 256], sizes = [8, 128], strides = [1, 1]} : vector<8x384xf32> to vector<8x128xf32>
    %469 = vector.extract_strided_slice %451 {offsets = [0, 256], sizes = [8, 128], strides = [1, 1]} : vector<8x384xf32> to vector<8x128xf32>
    %470 = arith.addf %469, %14 : vector<8x128xf32>
    %471 = arith.mulf %459, %470 : vector<8x128xf32>
    %472 = arith.addf %468, %471 : vector<8x128xf32>
    %473 = math.tanh %472 : vector<8x128xf32>
    %474 = arith.subf %415, %473 : vector<8x128xf32>
    %475 = arith.mulf %467, %474 : vector<8x128xf32>
    %476 = arith.addf %473, %475 : vector<8x128xf32>
    %c6_i32_83 = arith.constant 6 : i32
    %477 = vector.broadcast %c6_i32_83 : i32 to vector<8x1xi32>
    %478 = arith.cmpi sgt, %17, %477 : vector<8x1xi32>
    %479 = vector.shape_cast %478 : vector<8x1xi1> to vector<8x1xi1>
    %480 = vector.broadcast %479 : vector<8x1xi1> to vector<8x128xi1>
    %481 = arith.select %480, %476, %415 : vector<8x128xi1>, vector<8x128xf32>
    %c112 = arith.constant 112 : index
    %c0_84 = arith.constant 0 : index
    %482 = vector.load %arg11[%c112, %c0_84] : memref<128x384xf32, #tpu.memory_space<vmem>>, vector<8x384xf32>
    %483 = arith.truncf %448 : vector<8x128xf32> to vector<8x128xbf16>
    %cst_85 = arith.constant dense<0.000000e+00> : vector<8x384xf32>
    %484 = tpu.matmul %483, %11, %cst_85 {dimension_numbers = #tpu.dot_dimension_numbers<[1], [0], [0], [1], [0, 0, 1, 1], [], []>} : vector<8x128xbf16>, vector<128x384xbf16>, vector<8x384xf32> -> vector<8x384xf32>
    %485 = vector.extract_strided_slice %482 {offsets = [0, 0], sizes = [8, 128], strides = [1, 1]} : vector<8x384xf32> to vector<8x128xf32>
    %486 = vector.extract_strided_slice %484 {offsets = [0, 0], sizes = [8, 128], strides = [1, 1]} : vector<8x384xf32> to vector<8x128xf32>
    %487 = arith.addf %485, %486 : vector<8x128xf32>
    %488 = arith.negf %487 : vector<8x128xf32>
    %489 = math.exp %488 : vector<8x128xf32>
    %cst_86 = arith.constant 1.000000e+00 : f32
    %490 = vector.broadcast %cst_86 : f32 to vector<8x128xf32>
    %491 = arith.addf %490, %489 : vector<8x128xf32>
    %492 = arith.divf %490, %491 : vector<8x128xf32>
    %493 = vector.extract_strided_slice %482 {offsets = [0, 128], sizes = [8, 128], strides = [1, 1]} : vector<8x384xf32> to vector<8x128xf32>
    %494 = vector.extract_strided_slice %484 {offsets = [0, 128], sizes = [8, 128], strides = [1, 1]} : vector<8x384xf32> to vector<8x128xf32>
    %495 = arith.addf %493, %494 : vector<8x128xf32>
    %496 = arith.negf %495 : vector<8x128xf32>
    %497 = math.exp %496 : vector<8x128xf32>
    %cst_87 = arith.constant 1.000000e+00 : f32
    %498 = vector.broadcast %cst_87 : f32 to vector<8x128xf32>
    %499 = arith.addf %498, %497 : vector<8x128xf32>
    %500 = arith.divf %498, %499 : vector<8x128xf32>
    %501 = vector.extract_strided_slice %482 {offsets = [0, 256], sizes = [8, 128], strides = [1, 1]} : vector<8x384xf32> to vector<8x128xf32>
    %502 = vector.extract_strided_slice %484 {offsets = [0, 256], sizes = [8, 128], strides = [1, 1]} : vector<8x384xf32> to vector<8x128xf32>
    %503 = arith.addf %502, %14 : vector<8x128xf32>
    %504 = arith.mulf %492, %503 : vector<8x128xf32>
    %505 = arith.addf %501, %504 : vector<8x128xf32>
    %506 = math.tanh %505 : vector<8x128xf32>
    %507 = arith.subf %448, %506 : vector<8x128xf32>
    %508 = arith.mulf %500, %507 : vector<8x128xf32>
    %509 = arith.addf %506, %508 : vector<8x128xf32>
    %c7_i32 = arith.constant 7 : i32
    %510 = vector.broadcast %c7_i32 : i32 to vector<8x1xi32>
    %511 = arith.cmpi sgt, %16, %510 : vector<8x1xi32>
    %512 = vector.shape_cast %511 : vector<8x1xi1> to vector<8x1xi1>
    %513 = vector.broadcast %512 : vector<8x1xi1> to vector<8x128xi1>
    %514 = arith.select %513, %509, %448 : vector<8x128xi1>, vector<8x128xf32>
    %c120 = arith.constant 120 : index
    %c0_88 = arith.constant 0 : index
    %515 = vector.load %arg11[%c120, %c0_88] : memref<128x384xf32, #tpu.memory_space<vmem>>, vector<8x384xf32>
    %516 = arith.truncf %481 : vector<8x128xf32> to vector<8x128xbf16>
    %cst_89 = arith.constant dense<0.000000e+00> : vector<8x384xf32>
    %517 = tpu.matmul %516, %11, %cst_89 {dimension_numbers = #tpu.dot_dimension_numbers<[1], [0], [0], [1], [0, 0, 1, 1], [], []>} : vector<8x128xbf16>, vector<128x384xbf16>, vector<8x384xf32> -> vector<8x384xf32>
    %518 = vector.extract_strided_slice %515 {offsets = [0, 0], sizes = [8, 128], strides = [1, 1]} : vector<8x384xf32> to vector<8x128xf32>
    %519 = vector.extract_strided_slice %517 {offsets = [0, 0], sizes = [8, 128], strides = [1, 1]} : vector<8x384xf32> to vector<8x128xf32>
    %520 = arith.addf %518, %519 : vector<8x128xf32>
    %521 = arith.negf %520 : vector<8x128xf32>
    %522 = math.exp %521 : vector<8x128xf32>
    %cst_90 = arith.constant 1.000000e+00 : f32
    %523 = vector.broadcast %cst_90 : f32 to vector<8x128xf32>
    %524 = arith.addf %523, %522 : vector<8x128xf32>
    %525 = arith.divf %523, %524 : vector<8x128xf32>
    %526 = vector.extract_strided_slice %515 {offsets = [0, 128], sizes = [8, 128], strides = [1, 1]} : vector<8x384xf32> to vector<8x128xf32>
    %527 = vector.extract_strided_slice %517 {offsets = [0, 128], sizes = [8, 128], strides = [1, 1]} : vector<8x384xf32> to vector<8x128xf32>
    %528 = arith.addf %526, %527 : vector<8x128xf32>
    %529 = arith.negf %528 : vector<8x128xf32>
    %530 = math.exp %529 : vector<8x128xf32>
    %cst_91 = arith.constant 1.000000e+00 : f32
    %531 = vector.broadcast %cst_91 : f32 to vector<8x128xf32>
    %532 = arith.addf %531, %530 : vector<8x128xf32>
    %533 = arith.divf %531, %532 : vector<8x128xf32>
    %534 = vector.extract_strided_slice %515 {offsets = [0, 256], sizes = [8, 128], strides = [1, 1]} : vector<8x384xf32> to vector<8x128xf32>
    %535 = vector.extract_strided_slice %517 {offsets = [0, 256], sizes = [8, 128], strides = [1, 1]} : vector<8x384xf32> to vector<8x128xf32>
    %536 = arith.addf %535, %14 : vector<8x128xf32>
    %537 = arith.mulf %525, %536 : vector<8x128xf32>
    %538 = arith.addf %534, %537 : vector<8x128xf32>
    %539 = math.tanh %538 : vector<8x128xf32>
    %540 = arith.subf %481, %539 : vector<8x128xf32>
    %541 = arith.mulf %533, %540 : vector<8x128xf32>
    %542 = arith.addf %539, %541 : vector<8x128xf32>
    %c7_i32_92 = arith.constant 7 : i32
    %543 = vector.broadcast %c7_i32_92 : i32 to vector<8x1xi32>
    %544 = arith.cmpi sgt, %17, %543 : vector<8x1xi32>
    %545 = vector.shape_cast %544 : vector<8x1xi1> to vector<8x1xi1>
    %546 = vector.broadcast %545 : vector<8x1xi1> to vector<8x128xi1>
    %547 = arith.select %546, %542, %481 : vector<8x128xi1>, vector<8x128xf32>
    %c0_93 = arith.constant 0 : index
    %c0_94 = arith.constant 0 : index
    %548 = vector.load %arg8[%c0_93, %c0_94] : memref<16x128xf32, #tpu.memory_space<vmem>>, vector<8x128xf32>
    %549 = arith.addf %514, %548 : vector<8x128xf32>
    %c0_95 = arith.constant 0 : index
    %c0_96 = arith.constant 0 : index
    %550 = vector.load %arg9[%c0_95, %c0_96] : memref<16x128xf32, #tpu.memory_space<vmem>>, vector<8x128xf32>
    tpu.vector_store %arg9[%c0_95, %c0_96], %549 {strides = array<i32>} : memref<16x128xf32, #tpu.memory_space<vmem>>, vector<8x128xf32>,
    %c8_97 = arith.constant 8 : index
    %c0_98 = arith.constant 0 : index
    %551 = vector.load %arg8[%c8_97, %c0_98] : memref<16x128xf32, #tpu.memory_space<vmem>>, vector<8x128xf32>
    %552 = arith.addf %547, %551 : vector<8x128xf32>
    %c8_99 = arith.constant 8 : index
    %c0_100 = arith.constant 0 : index
    %553 = vector.load %arg9[%c8_99, %c0_100] : memref<16x128xf32, #tpu.memory_space<vmem>>, vector<8x128xf32>
    tpu.vector_store %arg9[%c8_99, %c0_100], %552 {strides = array<i32>} : memref<16x128xf32, #tpu.memory_space<vmem>>, vector<8x128xf32>,
    return
  }
  func.func @transform_1(%arg0: i32, %arg1: memref<256xi32, #tpu.memory_space<smem>>) -> (i32, i32) {
    %c0_i32 = arith.constant 0 : i32
    %c0_i32_0 = arith.constant 0 : i32
    return %arg0, %c0_i32 : i32, i32
  }
  func.func @transform_2(%arg0: i32, %arg1: memref<256xi32, #tpu.memory_space<smem>>) -> (i32, i32) {
    %c0_i32 = arith.constant 0 : i32
    %c0_i32_0 = arith.constant 0 : i32
    %c0_i32_1 = arith.constant 0 : i32
    return %c0_i32, %c0_i32_0 : i32, i32
  }
  func.func @transform_3(%arg0: i32, %arg1: memref<256xi32, #tpu.memory_space<smem>>) -> (i32, i32) {
    %c0_i32 = arith.constant 0 : i32
    %c0_i32_0 = arith.constant 0 : i32
    %c0_i32_1 = arith.constant 0 : i32
    return %c0_i32, %c0_i32_0 : i32, i32
  }
  func.func @transform_4(%arg0: i32, %arg1: memref<256xi32, #tpu.memory_space<smem>>) -> (i32, i32) {
    %c0_i32 = arith.constant 0 : i32
    %c0_i32_0 = arith.constant 0 : i32
    %c0_i32_1 = arith.constant 0 : i32
    return %c0_i32, %c0_i32_0 : i32, i32
  }
  func.func @transform_5(%arg0: i32, %arg1: memref<256xi32, #tpu.memory_space<smem>>) -> (i32, i32) {
    %c0_i32 = arith.constant 0 : i32
    %c0_i32_0 = arith.constant 0 : i32
    %c0_i32_1 = arith.constant 0 : i32
    return %c0_i32, %c0_i32_0 : i32, i32
  }
  func.func @transform_6(%arg0: i32, %arg1: memref<256xi32, #tpu.memory_space<smem>>) -> (i32, i32) {
    %c0_i32 = arith.constant 0 : i32
    %c0_i32_0 = arith.constant 0 : i32
    return %arg0, %c0_i32 : i32, i32
  }
  func.func @transform_7(%arg0: i32, %arg1: memref<256xi32, #tpu.memory_space<smem>>) -> (i32, i32) {
    %c0_i32 = arith.constant 0 : i32
    %c0_i32_0 = arith.constant 0 : i32
    return %arg0, %c0_i32 : i32, i32
  }
}

</mosaic_0001>

<llo_original>
// kernel: tpu_custom_call.1
$region0: #{tpu_custom_call.1}
  #allocation0 [shape = 'u32[]', space=smem, size = 0x4, offset = 0x4, fixed_abs, tag = 'smem constant byte address 0x4 - core index']
  #allocation1 [shape = 'u32[144,128]{1,0:T(1,128)}', space=vmem, size = 0x12000, scoped, tag = 'internal scratch']
  #allocation2 [shape = 'f32[128,32]{1,0:T(8,128)}', space=vmem, size = 0x10000, scoped, tag = 'scratch operand']
  #allocation3 [shape = 'f32[128,384]{1,0:T(8,128)}', space=vmem, size = 0x30000, scoped, tag = 'scratch operand']
  #allocation4 [shape = 's32[1]{0}', space=sflag, size = 0x4, scoped, tag = 'scratch operand']
  #allocation5 [shape = 's32[1]{0}', space=sflag, size = 0x4, scoped, tag = 'scoped memory for tpu_custom_call.1']
  #allocation6 [shape = 'u8[1024]{0}', space=smem, size = 0x400, scoped, tag = 'prefetched SMEM operand 0']
  #allocation11 [shape = 's32[]', space=sflag, size = 0x4, offset = 0, fixed_abs, tag = 'sflag constant byte address 0x0 - dummy sync flag']
  %s0 = inlined_call_operand.vmem [shape: s32[256], index: 0, kind: input, shape index: {}]
  %s1 = inlined_call_operand.vmem [shape: f32[64,32], index: 1, kind: input, shape index: {}]
  %s2 = inlined_call_operand.vmem [shape: s32[32,1], index: 2, kind: input, shape index: {}]
  %s3 = inlined_call_operand.vmem [shape: bf16[32,384], index: 3, kind: input, shape index: {}]
  %s4 = inlined_call_operand.hbm [shape: bf16[128,384], index: 4, kind: input, shape index: {}]
  %s5 = inlined_call_operand.vmem [shape: f32[1,384], index: 5, kind: input, shape index: {}]
  %s6 = inlined_call_operand.vmem [shape: f32[1,128], index: 6, kind: input, shape index: {}]
  %s7 = inlined_call_operand.vmem [shape: f32[32,128], index: 7, kind: input, shape index: {}]
  %s8 = inlined_call_operand.hbm [shape: f32[32,128], index: 8, kind: output, shape index: {}]
  %s9 = sld [smem:[#allocation0]]
  $region112: #{tpu_custom_call.1} parent=0
    _
  %s11 = ssub.s32 1, %s9
  %s12 = scalar_select 0, %s11, %s9
  %s13 = sshll.u32 %s0, 4
  %s14 = int_to_ptr.vmem [resolvable:$true] %s13
  %16 = dma.vmem_to_smem %s14, 32, [#allocation6], [#allocation5]
  %17 = dma.done [#allocation5], 32
  %18 = sfence
  $region1: #{tpu_custom_call.1} parent=0
    #allocation7 [shape = 'u8[98304]{0}', space=vmem, size = 0x18000, scoped, tag = 'input window, operand 4, single buffered']
    #allocation8 [shape = 's32[2]{0}', space=sflag, size = 0x8, scoped, tag = 'scoped memory for tpu_custom_call.1']
    #allocation9 [shape = 's32[2]{0}', space=sflag, size = 0x8, scoped, tag = 'scoped memory for tpu_custom_call.1']
    #allocation10 [shape = 'u8[16384]{0}', space=vmem, size = 0x4000, scoped, tag = 'output window, operand 0']
    %19 = vsyncpa [#allocation8], 0
    %20 = vsyncpa [#allocation9], 0
    %s21 = scalar_lea.sflag [#allocation9], 1
    %22 = vsyncpa %s21, 0
    loop: start=0, step=1, limit=4
    $region2: #{tpu_custom_call.1} parent=1 // loop_pre_header
      _
    $region3: #{tpu_custom_call.1} parent=1 // loop_header
      %s24 = sphi 0, %s28
      %p25 = scmp.ge.s32.totalorder %s24, 4
      %s34 = sphi 0, %s36
      %s37 = sphi 0, %s34
      %s38 = sphi 0, %s37
      %s54 = sphi 0, %s38
      %s58 = sphi 0, %s58
      %s60 = sphi 0, %s58
      %s61 = sphi 0, %s60
      %s75 = sphi 0, %s61
      %s79 = sphi 0, %s79
      %s81 = sphi 0, %s79
      %s82 = sphi 0, %s81
      %s96 = sphi 0, %s82
      %s100 = sphi 0, %s100
      %s102 = sphi 0, %s100
      %s103 = sphi 0, %s102
      %s117 = sphi 0, %s103
      %s121 = sphi 0, %s121
      %s123 = sphi 0, %s121
      %s124 = sphi 0, %s123
      %s138 = sphi 0, %s124
      %s144 = sphi 0, %s146
      %s147 = sphi 0, %s144
      %s148 = sphi 0, %s147
      %s164 = sphi 0, %s148
      %s170 = sphi 0, %s172
      %s173 = sphi 0, %s170
      %s174 = sphi 0, %s173
      %s190 = sphi 0, %s174
    $region4: #{tpu_custom_call.1} parent=1 // loop_header_branch
      %27 = sbr.rel (%p25) target = $region8
    $region5: #{tpu_custom_call.1} parent=1 // loop_body
      %s29 = ssub.s32 %s24, 1
      %s30 = ssub.s32 %s24, 2
      %s31 = sadd.s32 %s24, 1
      %s32 = ssub.s32 %s24, %s31
      %p33 = scmp.eq.s32.totalorder %s32, 0
      %s35 = sadd.s32 %s34, 1
      %s36 = scalar_select %p33, %s34, %s35
      %p39 = pneg %p33
      %p40 = scmp.eq.s32.totalorder %s24, 1
      %p41 = por %p39, %p40
      %p42 = scmp.ne.s32.totalorder %s34, %s37
      %p43 = scmp.eq.s32.totalorder %s24, 0
      %p44 = por %p42, %p43
      %p45 = scmp.ne.s32.totalorder %s34, %s37
      %p46 = scmp.eq.s32.totalorder %s29, 1
      %p47 = por %p45, %p46
      %p48 = scmp.ne.s32.totalorder %s37, %s38
      %p49 = scmp.eq.s32.totalorder %s29, 0
      %p50 = por %p48, %p49
      %p51 = scmp.ne.s32.totalorder %s37, %s38
      %p52 = scmp.eq.s32.totalorder %s30, 1
      %p53 = por %p51, %p52
      %p55 = scmp.ne.s32.totalorder %s38, %s54
      %p56 = scmp.eq.s32.totalorder %s30, 0
      %p57 = por %p55, %p56
      %s59 = sadd.s32 %s58, 1
      %p62 = scmp.eq.s32.totalorder %s24, 1
      %p63 = scmp.ne.s32.totalorder %s58, %s60
      %p64 = scmp.eq.s32.totalorder %s24, 0
      %p65 = por %p63, %p64
      %p66 = scmp.ne.s32.totalorder %s58, %s60
      %p67 = scmp.eq.s32.totalorder %s29, 1
      %p68 = por %p66, %p67
      %p69 = scmp.ne.s32.totalorder %s60, %s61
      %p70 = scmp.eq.s32.totalorder %s29, 0
      %p71 = por %p69, %p70
      %p72 = scmp.ne.s32.totalorder %s60, %s61
      %p73 = scmp.eq.s32.totalorder %s30, 1
      %p74 = por %p72, %p73
      %p76 = scmp.ne.s32.totalorder %s61, %s75
      %p77 = scmp.eq.s32.totalorder %s30, 0
      %p78 = por %p76, %p77
      %s80 = sadd.s32 %s79, 1
      %p83 = scmp.eq.s32.totalorder %s24, 1
      %p84 = scmp.ne.s32.totalorder %s79, %s81
      %p85 = scmp.eq.s32.totalorder %s24, 0
      %p86 = por %p84, %p85
      %p87 = scmp.ne.s32.totalorder %s79, %s81
      %p88 = scmp.eq.s32.totalorder %s29, 1
      %p89 = por %p87, %p88
      %p90 = scmp.ne.s32.totalorder %s81, %s82
      %p91 = scmp.eq.s32.totalorder %s29, 0
      %p92 = por %p90, %p91
      %p93 = scmp.ne.s32.totalorder %s81, %s82
      %p94 = scmp.eq.s32.totalorder %s30, 1
      %p95 = por %p93, %p94
      %p97 = scmp.ne.s32.totalorder %s82, %s96
      %p98 = scmp.eq.s32.totalorder %s30, 0
      %p99 = por %p97, %p98
      %s101 = sadd.s32 %s100, 1
      %p104 = scmp.eq.s32.totalorder %s24, 1
      %p105 = scmp.ne.s32.totalorder %s100, %s102
      %p106 = scmp.eq.s32.totalorder %s24, 0
      %p107 = por %p105, %p106
      %p108 = scmp.ne.s32.totalorder %s100, %s102
      %p109 = scmp.eq.s32.totalorder %s29, 1
      %p110 = por %p108, %p109
      %p111 = scmp.ne.s32.totalorder %s102, %s103
      %p112 = scmp.eq.s32.totalorder %s29, 0
      %p113 = por %p111, %p112
      %p114 = scmp.ne.s32.totalorder %s102, %s103
      %p115 = scmp.eq.s32.totalorder %s30, 1
      %p116 = por %p114, %p115
      %p118 = scmp.ne.s32.totalorder %s103, %s117
      %p119 = scmp.eq.s32.totalorder %s30, 0
      %p120 = por %p118, %p119
      %s122 = sadd.s32 %s121, 1
      %p125 = scmp.eq.s32.totalorder %s24, 1
      %p126 = scmp.ne.s32.totalorder %s121, %s123
      %p127 = scmp.eq.s32.totalorder %s24, 0
      %p128 = por %p126, %p127
      %p129 = scmp.ne.s32.totalorder %s121, %s123
      %p130 = scmp.eq.s32.totalorder %s29, 1
      %p131 = por %p129, %p130
      %p132 = scmp.ne.s32.totalorder %s123, %s124
      %p133 = scmp.eq.s32.totalorder %s29, 0
      %p134 = por %p132, %p133
      %p135 = scmp.ne.s32.totalorder %s123, %s124
      %p136 = scmp.eq.s32.totalorder %s30, 1
      %p137 = por %p135, %p136
      %p139 = scmp.ne.s32.totalorder %s124, %s138
      %p140 = scmp.eq.s32.totalorder %s30, 0
      %p141 = por %p139, %p140
      %s142 = ssub.s32 %s24, %s31
      %p143 = scmp.eq.s32.totalorder %s142, 0
      %s145 = sadd.s32 %s144, 1
      %s146 = scalar_select %p143, %s144, %s145
      %p149 = pneg %p143
      %p150 = scmp.eq.s32.totalorder %s24, 1
      %p151 = por %p149, %p150
      %p152 = scmp.ne.s32.totalorder %s144, %s147
      %p153 = scmp.eq.s32.totalorder %s24, 0
      %p154 = por %p152, %p153
      %p155 = scmp.ne.s32.totalorder %s144, %s147
      %p156 = scmp.eq.s32.totalorder %s29, 1
      %p157 = por %p155, %p156
      %p158 = scmp.ne.s32.totalorder %s147, %s148
      %p159 = scmp.eq.s32.totalorder %s29, 0
      %p160 = por %p158, %p159
      %p161 = scmp.ne.s32.totalorder %s147, %s148
      %p162 = scmp.eq.s32.totalorder %s30, 1
      %p163 = por %p161, %p162
      %p165 = scmp.ne.s32.totalorder %s148, %s164
      %p166 = scmp.eq.s32.totalorder %s30, 0
      %p167 = por %p165, %p166
      %s168 = ssub.s32 %s24, %s31
      %p169 = scmp.eq.s32.totalorder %s168, 0
      %s171 = sadd.s32 %s170, 1
      %s172 = scalar_select %p169, %s170, %s171
      %p175 = pneg %p169
      %p176 = scmp.eq.s32.totalorder %s24, 1
      %p177 = por %p175, %p176
      %p178 = scmp.ne.s32.totalorder %s170, %s173
      %p179 = scmp.eq.s32.totalorder %s24, 0
      %p180 = por %p178, %p179
      %p181 = scmp.ne.s32.totalorder %s170, %s173
      %p182 = scmp.eq.s32.totalorder %s29, 1
      %p183 = por %p181, %p182
      %p184 = scmp.ne.s32.totalorder %s173, %s174
      %p185 = scmp.eq.s32.totalorder %s29, 0
      %p186 = por %p184, %p185
      %p187 = scmp.ne.s32.totalorder %s173, %s174
      %p188 = scmp.eq.s32.totalorder %s30, 1
      %p189 = por %p187, %p188
      %p191 = scmp.ne.s32.totalorder %s174, %s190
      %p192 = scmp.eq.s32.totalorder %s30, 0
      %p193 = por %p191, %p192
      %p194 = scmp.le.s32.totalorder 1, %s24
      %p195 = scmp.lt.s32.totalorder %s24, 3
      %p196 = pnand %p194, %p195
      %p197 = pneg %p196
      // Predicated region
      $region9: #{tpu_custom_call.1} parent=5 // pred_check
        _
      $region10: #{tpu_custom_call.1} parent=5 // pred_check_branch
        %199 = sbr.rel (%p196) target = $region12
      $region11: #{tpu_custom_call.1} parent=5 // pred_region
        %s200 = ssub.s32 %s24, 1
        // Predicated region
        $region13: #{tpu_custom_call.1} parent=11 // pred_check
          %p201 = pneg %p71
        $region14: #{tpu_custom_call.1} parent=11 // pred_check_branch
          %203 = sbr.rel (%p201) target = $region16
        $region15: #{tpu_custom_call.1} parent=11 // pred_region
          _
        $region16: #{tpu_custom_call.1} parent=11 // pred_fallthru
          _
        // Predicated region
        $region17: #{tpu_custom_call.1} parent=11 // pred_check
          %p204 = pneg %p92
        $region18: #{tpu_custom_call.1} parent=11 // pred_check_branch
          %206 = sbr.rel (%p204) target = $region20
        $region19: #{tpu_custom_call.1} parent=11 // pred_region
          %s208 = ssub.s32 3072, 3072
          %209 = vsyncadd [#allocation8], %s208
          %s210 = sshll.u32 [#allocation7], 4
          %s211 = int_to_ptr.vmem [resolvable:$true] %s210
          %216 = dma.hbm_to_vmem [thread:$0]  %s4, 3072, %s211, [#allocation8], 192, 192, 12
        $region20: #{tpu_custom_call.1} parent=11 // pred_fallthru
          _
        // Predicated region
        $region21: #{tpu_custom_call.1} parent=11 // pred_check
          %p217 = pneg %p113
        $region22: #{tpu_custom_call.1} parent=11 // pred_check_branch
          %219 = sbr.rel (%p217) target = $region24
        $region23: #{tpu_custom_call.1} parent=11 // pred_region
          _
        $region24: #{tpu_custom_call.1} parent=11 // pred_fallthru
          _
        // Predicated region
        $region25: #{tpu_custom_call.1} parent=11 // pred_check
          %p220 = pneg %p134
        $region26: #{tpu_custom_call.1} parent=11 // pred_check_branch
          %222 = sbr.rel (%p220) target = $region28
        $region27: #{tpu_custom_call.1} parent=11 // pred_region
          _
        $region28: #{tpu_custom_call.1} parent=11 // pred_fallthru
          _
      $region12: #{tpu_custom_call.1} parent=5 // pred_fallthru
        _
      %p223 = scmp.lt.s32.totalorder %s24, 2
      // Predicated region
      $region29: #{tpu_custom_call.1} parent=5 // pred_check
        %p224 = pneg %p223
      $region30: #{tpu_custom_call.1} parent=5 // pred_check_branch
        %226 = sbr.rel (%p224) target = $region32
      $region31: #{tpu_custom_call.1} parent=5 // pred_region
        // Predicated region
        $region33: #{tpu_custom_call.1} parent=31 // pred_check
          %p227 = pneg %p44
        $region34: #{tpu_custom_call.1} parent=31 // pred_check_branch
          %229 = sbr.rel (%p227) target = $region36
        $region35: #{tpu_custom_call.1} parent=31 // pred_region
          %s230 = smul.u32 2, %s24
          %p231 = scmp.lt.s32.totalorder %s230, 3
          %s232 = scalar_select %p231, %s230, 3
          %s233 = smul.addr %s232, 8
          %s234 = scalar_lea.vmem %s2, %s233
          %s235 = smul.u32 2, %s24
        $region36: #{tpu_custom_call.1} parent=31 // pred_fallthru
          _
        // Predicated region
        $region37: #{tpu_custom_call.1} parent=31 // pred_check
          %p236 = pneg %p154
        $region38: #{tpu_custom_call.1} parent=31 // pred_check_branch
          %238 = sbr.rel (%p236) target = $region40
        $region39: #{tpu_custom_call.1} parent=31 // pred_region
          %s239 = smul.u32 2, %s24
          %p240 = scmp.lt.s32.totalorder %s239, 3
          %s241 = scalar_select %p240, %s239, 3
          %s242 = smul.addr %s241, 8
          %s243 = scalar_lea.vmem %s7, %s242
          %s244 = smul.u32 2, %s24
        $region40: #{tpu_custom_call.1} parent=31 // pred_fallthru
          _
      $region32: #{tpu_custom_call.1} parent=5 // pred_fallthru
        _
      %p245 = scmp.le.s32.totalorder 1, %s24
      %p246 = scmp.lt.s32.totalorder %s24, 3
      %p247 = pnand %p245, %p246
      %p248 = pneg %p247
      // Predicated region
      $region41: #{tpu_custom_call.1} parent=5 // pred_check
        _
      $region42: #{tpu_custom_call.1} parent=5 // pred_check_branch
        %250 = sbr.rel (%p247) target = $region44
      $region43: #{tpu_custom_call.1} parent=5 // pred_region
        %s251 = ssub.s32 %s24, 1
        // Predicated region
        $region45: #{tpu_custom_call.1} parent=43 // pred_check
          %p252 = pneg %p92
        $region46: #{tpu_custom_call.1} parent=43 // pred_check_branch
          %254 = sbr.rel (%p252) target = $region48
        $region47: #{tpu_custom_call.1} parent=43 // pred_region
          %255 = dma.done [#allocation8], 3072
        $region48: #{tpu_custom_call.1} parent=43 // pred_fallthru
          _
        %s256 = smul.u32 2, %s29
        %p257 = scmp.lt.s32.totalorder %s256, 3
        %s258 = scalar_select %p257, %s256, 3
        %s259 = smul.addr %s258, 8
        %s260 = scalar_lea.vmem %s2, %s259
        %p261 = pneg %p50
        %p262 = pneg %p47
        %p263 = pneg %p71
        %p264 = pneg %p68
        %p265 = pneg %p92
        %p266 = pneg %p89
        %p267 = pneg %p113
        %p268 = pneg %p110
        %p269 = pneg %p134
        %p270 = pneg %p131
        %s271 = smul.u32 2, %s29
        %p272 = scmp.lt.s32.totalorder %s271, 3
        %s273 = scalar_select %p272, %s271, 3
        %s274 = smul.addr %s273, 8
        %s275 = scalar_lea.vmem %s7, %s274
        %p276 = pneg %p160
        %p277 = pneg %p157
        %p278 = pneg %p186
        %p279 = pneg %p183
        %s280 = sand.u32 %s173, 1
        %s281 = scalar_lea.sflag [#allocation9], %s280
        %s282 = sand.u32 %s173, 1
        %s283 = smul.addr %s282, 16
        %s284 = scalar_lea.vmem [#allocation10], %s283
        %s285 = smul.u32 2, %s29
        %p286 = scmp.lt.s32.totalorder %s285, 3
        %s287 = scalar_select %p286, %s285, 3
        %s288 = smul.addr %s287, 8
        %s289 = scalar_lea.vmem %s2, %s288
        %s290 = smul.u32 2, %s29
        %s291 = smul.u32 2, %s29
        %p292 = scmp.lt.s32.totalorder %s291, 3
        %s293 = scalar_select %p292, %s291, 3
        %s294 = smul.addr %s293, 8
        %s295 = scalar_lea.vmem %s7, %s294
        %s296 = smul.u32 2, %s29
        %s297 = smul.u32 2, %s29
        %s299 = smul.u32 %s29, 16
        loop: start=0, step=1, limit=8
        $region49: #{tpu_custom_call.1} parent=43 // loop_pre_header
          _
        $region50: #{tpu_custom_call.1} parent=43 // loop_header
          %s301 = sphi 0, %s305
          %p302 = scmp.ge.s32.totalorder %s301, 8
        $region51: #{tpu_custom_call.1} parent=43 // loop_header_branch
          %304 = sbr.rel (%p302) target = $region55
        $region52: #{tpu_custom_call.1} parent=43 // loop_body
          loop: start=0, step=1, limit=16
          $region56: #{tpu_custom_call.1} parent=52 // loop_pre_header
            _
          $region57: #{tpu_custom_call.1} parent=52 // loop_header
            %s307 = sphi 0, %s311
            %p308 = scmp.ge.s32.totalorder %s307, 16
          $region58: #{tpu_custom_call.1} parent=52 // loop_header_branch
            %310 = sbr.rel (%p308) target = $region62
          $region59: #{tpu_custom_call.1} parent=52 // loop_body
            %s312 = sadd.s32 %s299, %s307
            %s313 = smul.u32 %s312, 8
            %s314 = sadd.s32 %s313, %s301
            %s315 = sld [smem:[#allocation6 + %s314]]
            %s316 = smul.u32 %s301, 16
            %s317 = sadd.s32 %s316, %s307
            %s318 = scalar_lea.vmem %s1, %s315
            %s319 = scalar_lea.vmem [#allocation2], %s317
            %p321 = scmp.lt.u32.totalorder 1, 8
            %p322 = pneg %p321
            // Predicated region
            $region63: #{tpu_custom_call.1} parent=59 // pred_check
              _
            $region64: #{tpu_custom_call.1} parent=59 // pred_check_branch
              %324 = sbr.rel (%p321) target = $region66
            $region65: #{tpu_custom_call.1} parent=59 // pred_region
              %s339 = sand.u32 1, 7
              %p340 = scmp.eq.s32.totalorder %s339, 0
              %p341 = pneg %p340
              // Predicated region
              $region78: #{tpu_custom_call.1} parent=65 // pred_check
                _
              $region79: #{tpu_custom_call.1} parent=65 // pred_check_branch
                %343 = sbr.rel (%p340) target = $region81
              $region80: #{tpu_custom_call.1} parent=65 // pred_region
                %s344 = sand.u32 1, 7
                %s345 = ssub.s32 1, %s344
                %s346 = scalar_lea.vmem %s318, %s345
                %s347 = ssub.s32 1, %s344
                %s348 = scalar_lea.vmem %s319, %s347 [#allocation2]
                %s349 = sshllo.u32 0, %s344
                loop: start=0, step=1, limit=1
                $region82: #{tpu_custom_call.1} parent=80 // loop_pre_header
                  _
                $region83: #{tpu_custom_call.1} parent=80 // loop_header
                  %s351 = sphi 0, %s355
                  %p352 = scmp.ge.s32.totalorder %s351, 1
                  %s356 = sphi %s346, %s346
                  %s357 = sphi %s348, %s348
                $region84: #{tpu_custom_call.1} parent=80 // loop_header_branch
                  %354 = sbr.rel (%p352) target = $region88
                $region85: #{tpu_custom_call.1} parent=80 // loop_body
                  %v358 = vld [vmem:[%s356] sm:%s349]
                  %359 = vst [vmem:[%s357] sm:%s349] %v358
                $region86: #{tpu_custom_call.1} parent=80 // loop_footer
                  %s355 = sadd.s32 1, %s351
                $region87: #{tpu_custom_call.1} parent=80 // loop_footer_branch
                  %350 = sbr.rel target = $region83
                $region88: #{tpu_custom_call.1} parent=80 // loop_exit
                  _
              $region81: #{tpu_custom_call.1} parent=65 // pred_fallthru
                _
            $region66: #{tpu_custom_call.1} parent=59 // pred_fallthru
              _
            // Predicated region
            $region67: #{tpu_custom_call.1} parent=59 // pred_check
              %p325 = pneg %p321
            $region68: #{tpu_custom_call.1} parent=59 // pred_check_branch
              %327 = sbr.rel (%p325) target = $region70
            $region69: #{tpu_custom_call.1} parent=59 // pred_region
              %s328 = sshllo.u32 0, 1
              loop: start=0, step=1, limit=1
              $region71: #{tpu_custom_call.1} parent=69 // loop_pre_header
                _
              $region72: #{tpu_custom_call.1} parent=69 // loop_header
                %s330 = sphi 0, %s334
                %p331 = scmp.ge.s32.totalorder %s330, 1
                %s335 = sphi %s318, %s318
                %s336 = sphi %s319, %s319
              $region73: #{tpu_custom_call.1} parent=69 // loop_header_branch
                %333 = sbr.rel (%p331) target = $region77
              $region74: #{tpu_custom_call.1} parent=69 // loop_body
                %v337 = vld [vmem:[%s335] sm:%s328]
                %338 = vst [vmem:[%s336] sm:%s328] %v337
              $region75: #{tpu_custom_call.1} parent=69 // loop_footer
                %s334 = sadd.s32 1, %s330
              $region76: #{tpu_custom_call.1} parent=69 // loop_footer_branch
                %329 = sbr.rel target = $region72
              $region77: #{tpu_custom_call.1} parent=69 // loop_exit
                _
            $region70: #{tpu_custom_call.1} parent=59 // pred_fallthru
              _
            // Predicated region
            $region89: #{tpu_custom_call.1} parent=59 // pred_check
              _
            $region90: #{tpu_custom_call.1} parent=59 // pred_check_branch
              %362 = sbr.rel (0) target = $region92
            $region91: #{tpu_custom_call.1} parent=59 // pred_region
              %363 = vsyncadd [#allocation4], 16
            $region92: #{tpu_custom_call.1} parent=59 // pred_fallthru
              _
          $region60: #{tpu_custom_call.1} parent=52 // loop_footer
            %s311 = sadd.s32 1, %s307
          $region61: #{tpu_custom_call.1} parent=52 // loop_footer_branch
            %306 = sbr.rel target = $region57
          $region62: #{tpu_custom_call.1} parent=52 // loop_exit
            _
        $region53: #{tpu_custom_call.1} parent=43 // loop_footer
          %s305 = sadd.s32 1, %s301
        $region54: #{tpu_custom_call.1} parent=43 // loop_footer_branch
          %300 = sbr.rel target = $region50
        $region55: #{tpu_custom_call.1} parent=43 // loop_exit
          _
        loop: start=0, step=1, limit=128
        $region93: #{tpu_custom_call.1} parent=43 // loop_pre_header
          _
        $region94: #{tpu_custom_call.1} parent=43 // loop_header
          %s365 = sphi 0, %s369
          %p366 = scmp.ge.s32.totalorder %s365, 128
        $region95: #{tpu_custom_call.1} parent=43 // loop_header_branch
          %368 = sbr.rel (%p366) target = $region99
        $region96: #{tpu_custom_call.1} parent=43 // loop_body
          %s370 = smul.u32 1, 1
          %s371 = sshll.u32 %s370, 4
          %372 = dma.done [#allocation4], %s371
        $region97: #{tpu_custom_call.1} parent=43 // loop_footer
          %s369 = sadd.s32 1, %s365
        $region98: #{tpu_custom_call.1} parent=43 // loop_footer_branch
          %364 = sbr.rel target = $region94
        $region99: #{tpu_custom_call.1} parent=43 // loop_exit
          _
        %v373 = vld [vmem:[#allocation2] sm:$0xff]
        %v374 = vld [vmem:[#allocation2 + $0x8] sm:$0xff]
        %v375 = vld [vmem:[#allocation2 + $0x10] sm:$0xff]
        %v376 = vld [vmem:[#allocation2 + $0x18] sm:$0xff]
        %v377 = vld [vmem:[#allocation2 + $0x20] sm:$0xff]
        %v378 = vld [vmem:[#allocation2 + $0x28] sm:$0xff]
        %v379 = vld [vmem:[#allocation2 + $0x30] sm:$0xff]
        %v380 = vld [vmem:[#allocation2 + $0x38] sm:$0xff]
        %v381 = vld [vmem:[#allocation2 + $0x40] sm:$0xff]
        %v382 = vld [vmem:[#allocation2 + $0x48] sm:$0xff]
        %v383 = vld [vmem:[#allocation2 + $0x50] sm:$0xff]
        %v384 = vld [vmem:[#allocation2 + $0x58] sm:$0xff]
        %v385 = vld [vmem:[#allocation2 + $0x60] sm:$0xff]
        %v386 = vld [vmem:[#allocation2 + $0x68] sm:$0xff]
        %v387 = vld [vmem:[#allocation2 + $0x70] sm:$0xff]
        %v388 = vld [vmem:[#allocation2 + $0x78] sm:$0xff]
        %v389 = vpack.c.bf16 %v374, %v373
        %v390 = vpack.c.bf16 %v376, %v375
        %v391 = vpack.c.bf16 %v378, %v377
        %v392 = vpack.c.bf16 %v380, %v379
        %v393 = vpack.c.bf16 %v382, %v381
        %v394 = vpack.c.bf16 %v384, %v383
        %v395 = vpack.c.bf16 %v386, %v385
        %v396 = vpack.c.bf16 %v388, %v387
        %v397 = vld [vmem:[%s3] sm:$0xff]
        %v398 = vld [vmem:[%s3 + $0x8] sm:$0xf]
        %v399 = vld [vmem:[%s3 + $0xc] sm:$0xff]
        %v400 = vld [vmem:[%s3 + $0x14] sm:$0xf]
        %v401 = vld [vmem:[%s3 + $0x18] sm:$0xff]
        %v402 = vld [vmem:[%s3 + $0x20] sm:$0xf]
        %v403 = vld [vmem:[%s3 + $0x24] sm:$0xff]
        %v404 = vld [vmem:[%s3 + $0x2c] sm:$0xf]
        %v405 = vld [vmem:[%s5] sm:$0x7]
        %v407 = vlaneseq
        %v408 = vshrl.u32 %v407, 7
        %v409 = vsub.s32 0, %v408
        %v410 = vrot.slane %v405, %v409
        %v411 = vlaneseq
        %v412 = vshrl.u32 %v411, 7
        %v413 = vsub.s32 1, %v412
        %v414 = vrot.slane %v405, %v413
        %v415 = vlaneseq
        %v416 = vshrl.u32 %v415, 7
        %v417 = vsub.s32 2, %v416
        %v418 = vrot.slane %v405, %v417
        %v430 = vunpack.c.l.b16 %v397
        %v431 = vunpack.c.h.b16 %v397
        %v432 = vunpack.c.l.b16 %v398
        %v433 = vunpack.c.l.b16 %v399
        %v434 = vunpack.c.h.b16 %v399
        %v435 = vunpack.c.l.b16 %v400
        %v436 = vunpack.c.l.b16 %v401
        %v437 = vunpack.c.h.b16 %v401
        %v438 = vunpack.c.l.b16 %v402
        %v439 = vunpack.c.l.b16 %v403
        %v440 = vunpack.c.h.b16 %v403
        %v441 = vunpack.c.l.b16 %v404
        %v442 = vpack.c.b16 %v433, %v430
        %v443 = vpack.c.b16 %v434, %v431
        %v444 = vpack.c.b16 %v435, %v432
        %v445 = vpack.c.b16 %v439, %v436
        %v446 = vpack.c.b16 %v440, %v437
        %v447 = vpack.c.b16 %v441, %v438
        %vm454 = vcmask 261120
        %v456 = vsel %vm454, %v389, 0
        %v459 = vsel %vm454, %v390, 0
        %v462 = vsel %vm454, %v391, 0
        %v465 = vsel %vm454, %v392, 0
        %v468 = vsel %vm454, %v393, 0
        %v471 = vsel %vm454, %v394, 0
        %v474 = vsel %vm454, %v395, 0
        %v477 = vsel %vm454, %v396, 0
        %479 = vmatprep.subr.bf16.mxu0 %v443
        %480 = vmatpush1.bf16.msra.mxu0 %v442
        %481 = vmatprep.subr.bf16.mxu0 %v446
        %482 = vmatpush1.bf16.msra.mxu0 %v445
        %483 = vmatprep.subr.bf16.mxu0 0
        %484 = vmatpush1.bf16.msra.mxu0 0
        %485 = vmatprep.subr.bf16.mxu0 0
        %486 = vmatpush1.bf16.msra.mxu0 0
        %487 = vmatprep.subr.bf16.mxu0 0
        %488 = vmatpush1.bf16.msra.mxu0 0
        %489 = vmatprep.subr.bf16.mxu0 0
        %490 = vmatpush1.bf16.msra.mxu0 0
        %491 = vmatprep.subr.bf16.mxu0 0
        %492 = vmatpush1.bf16.msra.mxu0 0
        %493 = vmatprep.subr.bf16.mxu0 0
        %494 = vmatpush1.bf16.msra.mxu0 0
        %495 = vmatprep.subr.bf16.mxu0 0
        %496 = vmatpush1.bf16.msra.mxu0 0
        %497 = vmatprep.subr.bf16.mxu0 0
        %498 = vmatpush1.bf16.msra.mxu0 0
        %499 = vmatprep.subr.bf16.mxu0 0
        %500 = vmatpush1.bf16.msra.mxu0 0
        %501 = vmatprep.subr.bf16.mxu0 0
        %502 = vmatpush1.bf16.msra.mxu0 0
        %503 = vmatprep.subr.bf16.mxu0 0
        %504 = vmatpush1.bf16.msra.mxu0 0
        %505 = vmatprep.subr.bf16.mxu0 0
        %506 = vmatpush1.bf16.msra.mxu0 0
        %507 = vmatprep.subr.bf16.mxu0 0
        %508 = vmatpush1.bf16.msra.mxu0 0
        %509 = vmatprep.subr.bf16.mxu0 0
        %510 = vmatpush1.bf16.msra.mxu0 0
        %511 = vmatprep.mubr.bf16.mxu0 0
        %512 = vmatmul.mubr.bf16.gmra.mrb[0].mxu0 %v456
        %v513 = vpop.f32.mrb[0].mxu0
        %v514 = vadd.f32 %v410, %v513
        %v515 = vpop.f32.mrb[0].mxu0
        %v516 = vadd.f32 %v414, %v515
        %v517 = vpop.f32.mrb[0].mxu0
        %v518 = vadd.f32 %v410, %v517
        %v519 = vpop.f32.mrb[0].mxu0
        %v520 = vadd.f32 %v414, %v519
        %521 = vmatprep.mubr.bf16.mxu0 0
        %522 = vmatmul.mubr.bf16.gmra.mrb[0].mxu0 %v459
        %v523 = vpop.f32.mrb[0].mxu0
        %v524 = vadd.f32 %v410, %v523
        %v525 = vpop.f32.mrb[0].mxu0
        %v526 = vadd.f32 %v414, %v525
        %v527 = vpop.f32.mrb[0].mxu0
        %v528 = vadd.f32 %v410, %v527
        %v529 = vpop.f32.mrb[0].mxu0
        %v530 = vadd.f32 %v414, %v529
        %531 = vmatprep.mubr.bf16.mxu0 0
        %532 = vmatmul.mubr.bf16.gmra.mrb[0].mxu0 %v462
        %v533 = vpop.f32.mrb[0].mxu0
        %v534 = vadd.f32 %v410, %v533
        %v535 = vpop.f32.mrb[0].mxu0
        %v536 = vadd.f32 %v414, %v535
        %v537 = vpop.f32.mrb[0].mxu0
        %v538 = vadd.f32 %v410, %v537
        %v539 = vpop.f32.mrb[0].mxu0
        %v540 = vadd.f32 %v414, %v539
        %541 = vmatprep.mubr.bf16.mxu0 0
        %542 = vmatmul.mubr.bf16.gmra.mrb[0].mxu0 %v465
        %v543 = vpop.f32.mrb[0].mxu0
        %v544 = vadd.f32 %v410, %v543
        %v545 = vpop.f32.mrb[0].mxu0
        %v546 = vadd.f32 %v414, %v545
        %v547 = vpop.f32.mrb[0].mxu0
        %v548 = vadd.f32 %v410, %v547
        %v549 = vpop.f32.mrb[0].mxu0
        %v550 = vadd.f32 %v414, %v549
        %551 = vmatprep.mubr.bf16.mxu0 0
        %552 = vmatmul.mubr.bf16.gmra.mrb[0].mxu0 %v468
        %v553 = vpop.f32.mrb[0].mxu0
        %v554 = vadd.f32 %v410, %v553
        %v555 = vpop.f32.mrb[0].mxu0
        %v556 = vadd.f32 %v414, %v555
        %v557 = vpop.f32.mrb[0].mxu0
        %v558 = vadd.f32 %v410, %v557
        %v559 = vpop.f32.mrb[0].mxu0
        %v560 = vadd.f32 %v414, %v559
        %561 = vmatprep.mubr.bf16.mxu0 0
        %562 = vmatmul.mubr.bf16.gmra.mrb[0].mxu0 %v471
        %v563 = vpop.f32.mrb[0].mxu0
        %v564 = vadd.f32 %v410, %v563
        %v565 = vpop.f32.mrb[0].mxu0
        %v566 = vadd.f32 %v414, %v565
        %v567 = vpop.f32.mrb[0].mxu0
        %v568 = vadd.f32 %v410, %v567
        %v569 = vpop.f32.mrb[0].mxu0
        %v570 = vadd.f32 %v414, %v569
        %571 = vmatprep.mubr.bf16.mxu0 0
        %572 = vmatmul.mubr.bf16.gmra.mrb[0].mxu0 %v474
        %v573 = vpop.f32.mrb[0].mxu0
        %v574 = vadd.f32 %v410, %v573
        %v575 = vpop.f32.mrb[0].mxu0
        %v576 = vadd.f32 %v414, %v575
        %v577 = vpop.f32.mrb[0].mxu0
        %v578 = vadd.f32 %v410, %v577
        %v579 = vpop.f32.mrb[0].mxu0
        %v580 = vadd.f32 %v414, %v579
        %581 = vmatprep.mubr.bf16.mxu0 0
        %582 = vmatmul.mubr.bf16.gmra.mrb[0].mxu0 %v477
        %v583 = vpop.f32.mrb[0].mxu0
        %v584 = vadd.f32 %v410, %v583
        %v585 = vpop.f32.mrb[0].mxu0
        %v586 = vadd.f32 %v414, %v585
        %v587 = vpop.f32.mrb[0].mxu0
        %v588 = vadd.f32 %v410, %v587
        %v589 = vpop.f32.mrb[0].mxu0
        %v590 = vadd.f32 %v414, %v589
        %591 = vdwg.mxu0
        %592 = vmatprep.subr.bf16.mxu0 0
        %593 = vmatpush1.bf16.msra.mxu0 %v444
        %594 = vmatprep.subr.bf16.mxu0 0
        %595 = vmatpush1.bf16.msra.mxu0 %v447
        %596 = vmatprep.subr.bf16.mxu0 0
        %597 = vmatpush1.bf16.msra.mxu0 0
        %598 = vmatprep.subr.bf16.mxu0 0
        %599 = vmatpush1.bf16.msra.mxu0 0
        %600 = vmatprep.subr.bf16.mxu0 0
        %601 = vmatpush1.bf16.msra.mxu0 0
        %602 = vmatprep.subr.bf16.mxu0 0
        %603 = vmatpush1.bf16.msra.mxu0 0
        %604 = vmatprep.subr.bf16.mxu0 0
        %605 = vmatpush1.bf16.msra.mxu0 0
        %606 = vmatprep.subr.bf16.mxu0 0
        %607 = vmatpush1.bf16.msra.mxu0 0
        %608 = vmatprep.subr.bf16.mxu0 0
        %609 = vmatpush1.bf16.msra.mxu0 0
        %610 = vmatprep.subr.bf16.mxu0 0
        %611 = vmatpush1.bf16.msra.mxu0 0
        %612 = vmatprep.subr.bf16.mxu0 0
        %613 = vmatpush1.bf16.msra.mxu0 0
        %614 = vmatprep.subr.bf16.mxu0 0
        %615 = vmatpush1.bf16.msra.mxu0 0
        %616 = vmatprep.subr.bf16.mxu0 0
        %617 = vmatpush1.bf16.msra.mxu0 0
        %618 = vmatprep.subr.bf16.mxu0 0
        %619 = vmatpush1.bf16.msra.mxu0 0
        %620 = vmatprep.subr.bf16.mxu0 0
        %621 = vmatpush1.bf16.msra.mxu0 0
        %622 = vmatprep.subr.bf16.mxu0 0
        %623 = vmatpush1.bf16.msra.mxu0 0
        %624 = vmatprep.mubr.bf16.mxu0 0
        %625 = vmatmul.mubr.bf16.gmra.mrb[0].mxu0 %v456
        %v626 = vpop.f32.mrb[0].mxu0
        %v627 = vadd.f32 %v418, %v626
        %v628 = vpop.f32.mrb[0].mxu0
        %v629 = vpop.f32.mrb[0].mxu0
        %v630 = vadd.f32 %v418, %v629
        %v631 = vpop.f32.mrb[0].mxu0
        %632 = vmatprep.mubr.bf16.mxu0 0
        %633 = vmatmul.mubr.bf16.gmra.mrb[0].mxu0 %v459
        %v634 = vpop.f32.mrb[0].mxu0
        %v635 = vadd.f32 %v418, %v634
        %v636 = vpop.f32.mrb[0].mxu0
        %v637 = vpop.f32.mrb[0].mxu0
        %v638 = vadd.f32 %v418, %v637
        %v639 = vpop.f32.mrb[0].mxu0
        %640 = vmatprep.mubr.bf16.mxu0 0
        %641 = vmatmul.mubr.bf16.gmra.mrb[0].mxu0 %v462
        %v642 = vpop.f32.mrb[0].mxu0
        %v643 = vadd.f32 %v418, %v642
        %v644 = vpop.f32.mrb[0].mxu0
        %v645 = vpop.f32.mrb[0].mxu0
        %v646 = vadd.f32 %v418, %v645
        %v647 = vpop.f32.mrb[0].mxu0
        %648 = vmatprep.mubr.bf16.mxu0 0
        %649 = vmatmul.mubr.bf16.gmra.mrb[0].mxu0 %v465
        %v650 = vpop.f32.mrb[0].mxu0
        %v651 = vadd.f32 %v418, %v650
        %v652 = vpop.f32.mrb[0].mxu0
        %v653 = vpop.f32.mrb[0].mxu0
        %v654 = vadd.f32 %v418, %v653
        %v655 = vpop.f32.mrb[0].mxu0
        %656 = vmatprep.mubr.bf16.mxu0 0
        %657 = vmatmul.mubr.bf16.gmra.mrb[0].mxu0 %v468
        %v658 = vpop.f32.mrb[0].mxu0
        %v659 = vadd.f32 %v418, %v658
        %v660 = vpop.f32.mrb[0].mxu0
        %v661 = vpop.f32.mrb[0].mxu0
        %v662 = vadd.f32 %v418, %v661
        %v663 = vpop.f32.mrb[0].mxu0
        %664 = vmatprep.mubr.bf16.mxu0 0
        %665 = vmatmul.mubr.bf16.gmra.mrb[0].mxu0 %v471
        %v666 = vpop.f32.mrb[0].mxu0
        %v667 = vadd.f32 %v418, %v666
        %v668 = vpop.f32.mrb[0].mxu0
        %v669 = vpop.f32.mrb[0].mxu0
        %v670 = vadd.f32 %v418, %v669
        %v671 = vpop.f32.mrb[0].mxu0
        %672 = vmatprep.mubr.bf16.mxu0 0
        %673 = vmatmul.mubr.bf16.gmra.mrb[0].mxu0 %v474
        %v674 = vpop.f32.mrb[0].mxu0
        %v675 = vadd.f32 %v418, %v674
        %v676 = vpop.f32.mrb[0].mxu0
        %v677 = vpop.f32.mrb[0].mxu0
        %v678 = vadd.f32 %v418, %v677
        %v679 = vpop.f32.mrb[0].mxu0
        %680 = vmatprep.mubr.bf16.mxu0 0
        %681 = vmatmul.mubr.bf16.gmra.mrb[0].mxu0 %v477
        %v682 = vpop.f32.mrb[0].mxu0
        %v683 = vadd.f32 %v418, %v682
        %v684 = vpop.f32.mrb[0].mxu0
        %v685 = vpop.f32.mrb[0].mxu0
        %v686 = vadd.f32 %v418, %v685
        %v687 = vpop.f32.mrb[0].mxu0
        %688 = vdwg.mxu0
        %689 = vst [vmem:[#allocation3] sm:$0xff] %v514
        %690 = vst [vmem:[#allocation3 + $0x8] sm:$0xff] %v516
        %691 = vst [vmem:[#allocation3 + $0x10] sm:$0xff] %v627
        %692 = vst [vmem:[#allocation3 + $0x18] sm:$0xff] %v518
        %693 = vst [vmem:[#allocation3 + $0x20] sm:$0xff] %v520
        %694 = vst [vmem:[#allocation3 + $0x28] sm:$0xff] %v630
        %695 = vst [vmem:[#allocation3 + $0x30] sm:$0xff] %v524
        %696 = vst [vmem:[#allocation3 + $0x38] sm:$0xff] %v526
        %697 = vst [vmem:[#allocation3 + $0x40] sm:$0xff] %v635
        %698 = vst [vmem:[#allocation3 + $0x48] sm:$0xff] %v528
        %699 = vst [vmem:[#allocation3 + $0x50] sm:$0xff] %v530
        %700 = vst [vmem:[#allocation3 + $0x58] sm:$0xff] %v638
        %701 = vst [vmem:[#allocation3 + $0x60] sm:$0xff] %v534
        %702 = vst [vmem:[#allocation3 + $0x68] sm:$0xff] %v536
        %703 = vst [vmem:[#allocation3 + $0x70] sm:$0xff] %v643
        %704 = vst [vmem:[#allocation3 + $0x78] sm:$0xff] %v538
        %705 = vst [vmem:[#allocation3 + $0x80] sm:$0xff] %v540
        %706 = vst [vmem:[#allocation3 + $0x88] sm:$0xff] %v646
        %707 = vst [vmem:[#allocation3 + $0x90] sm:$0xff] %v544
        %708 = vst [vmem:[#allocation3 + $0x98] sm:$0xff] %v546
        %709 = vst [vmem:[#allocation3 + $0xa0] sm:$0xff] %v651
        %710 = vst [vmem:[#allocation3 + $0xa8] sm:$0xff] %v548
        %711 = vst [vmem:[#allocation3 + $0xb0] sm:$0xff] %v550
        %712 = vst [vmem:[#allocation3 + $0xb8] sm:$0xff] %v654
        %713 = vst [vmem:[#allocation3 + $0xc0] sm:$0xff] %v554
        %714 = vst [vmem:[#allocation3 + $0xc8] sm:$0xff] %v556
        %715 = vst [vmem:[#allocation3 + $0xd0] sm:$0xff] %v659
        %716 = vst [vmem:[#allocation3 + $0xd8] sm:$0xff] %v558
        %717 = vst [vmem:[#allocation3 + $0xe0] sm:$0xff] %v560
        %718 = vst [vmem:[#allocation3 + $0xe8] sm:$0xff] %v662
        %719 = vst [vmem:[#allocation3 + $0xf0] sm:$0xff] %v564
        %720 = vst [vmem:[#allocation3 + $0xf8] sm:$0xff] %v566
        %721 = vst [vmem:[#allocation3 + $0x100] sm:$0xff] %v667
        %722 = vst [vmem:[#allocation3 + $0x108] sm:$0xff] %v568
        %723 = vst [vmem:[#allocation3 + $0x110] sm:$0xff] %v570
        %724 = vst [vmem:[#allocation3 + $0x118] sm:$0xff] %v670
        %725 = vst [vmem:[#allocation3 + $0x120] sm:$0xff] %v574
        %726 = vst [vmem:[#allocation3 + $0x128] sm:$0xff] %v576
        %727 = vst [vmem:[#allocation3 + $0x130] sm:$0xff] %v675
        %728 = vst [vmem:[#allocation3 + $0x138] sm:$0xff] %v578
        %729 = vst [vmem:[#allocation3 + $0x140] sm:$0xff] %v580
        %730 = vst [vmem:[#allocation3 + $0x148] sm:$0xff] %v678
        %731 = vst [vmem:[#allocation3 + $0x150] sm:$0xff] %v584
        %732 = vst [vmem:[#allocation3 + $0x158] sm:$0xff] %v586
        %733 = vst [vmem:[#allocation3 + $0x160] sm:$0xff] %v683
        %734 = vst [vmem:[#allocation3 + $0x168] sm:$0xff] %v588
        %735 = vst [vmem:[#allocation3 + $0x170] sm:$0xff] %v590
        %736 = vst [vmem:[#allocation3 + $0x178] sm:$0xff] %v686
        %v737 = vld [vmem:[#allocation7] sm:$0xff]
        %v738 = vld [vmem:[#allocation7 + $0x8] sm:$0xf]
        %v739 = vld [vmem:[#allocation7 + $0xc] sm:$0xff]
        %v740 = vld [vmem:[#allocation7 + $0x14] sm:$0xf]
        %v741 = vld [vmem:[#allocation7 + $0x18] sm:$0xff]
        %v742 = vld [vmem:[#allocation7 + $0x20] sm:$0xf]
        %v743 = vld [vmem:[#allocation7 + $0x24] sm:$0xff]
        %v744 = vld [vmem:[#allocation7 + $0x2c] sm:$0xf]
        %v745 = vld [vmem:[#allocation7 + $0x30] sm:$0xff]
        %v746 = vld [vmem:[#allocation7 + $0x38] sm:$0xf]
        %v747 = vld [vmem:[#allocation7 + $0x3c] sm:$0xff]
        %v748 = vld [vmem:[#allocation7 + $0x44] sm:$0xf]
        %v749 = vld [vmem:[#allocation7 + $0x48] sm:$0xff]
        %v750 = vld [vmem:[#allocation7 + $0x50] sm:$0xf]
        %v751 = vld [vmem:[#allocation7 + $0x54] sm:$0xff]
        %v752 = vld [vmem:[#allocation7 + $0x5c] sm:$0xf]
        %v753 = vld [vmem:[#allocation7 + $0x60] sm:$0xff]
        %v754 = vld [vmem:[#allocation7 + $0x68] sm:$0xf]
        %v755 = vld [vmem:[#allocation7 + $0x6c] sm:$0xff]
        %v756 = vld [vmem:[#allocation7 + $0x74] sm:$0xf]
        %v757 = vld [vmem:[#allocation7 + $0x78] sm:$0xff]
        %v758 = vld [vmem:[#allocation7 + $0x80] sm:$0xf]
        %v759 = vld [vmem:[#allocation7 + $0x84] sm:$0xff]
        %v760 = vld [vmem:[#allocation7 + $0x8c] sm:$0xf]
        %v761 = vld [vmem:[#allocation7 + $0x90] sm:$0xff]
        %v762 = vld [vmem:[#allocation7 + $0x98] sm:$0xf]
        %v763 = vld [vmem:[#allocation7 + $0x9c] sm:$0xff]
        %v764 = vld [vmem:[#allocation7 + $0xa4] sm:$0xf]
        %v765 = vld [vmem:[#allocation7 + $0xa8] sm:$0xff]
        %v766 = vld [vmem:[#allocation7 + $0xb0] sm:$0xf]
        %v767 = vld [vmem:[#allocation7 + $0xb4] sm:$0xff]
        %v768 = vld [vmem:[#allocation7 + $0xbc] sm:$0xf]
        %v769 = vld [vmem:[%s6] sm:$0x1]
        %v771 = vlaneseq
        %v772 = vshrl.u32 %v771, 7
        %v773 = vsub.s32 0, %v772
        %v774 = vrot.slane %v769, %v773
        %v776 = vld [vmem:[%s289] sm:$0xff]
        %v777 = vld [vmem:[%s289 + $0x8] sm:$0xff]
        %v778 = vld [vmem:[#allocation3] sm:$0xff]
        %v779 = vld [vmem:[#allocation3 + $0x8] sm:$0xff]
        %v780 = vld [vmem:[#allocation3 + $0x10] sm:$0xff]
        %v813 = vunpack.c.l.b16 %v737
        %v814 = vunpack.c.h.b16 %v737
        %v815 = vunpack.c.l.b16 %v738
        %v816 = vunpack.c.l.b16 %v739
        %v817 = vunpack.c.h.b16 %v739
        %v818 = vunpack.c.l.b16 %v740
        %v819 = vunpack.c.l.b16 %v741
        %v820 = vunpack.c.h.b16 %v741
        %v821 = vunpack.c.l.b16 %v742
        %v822 = vunpack.c.l.b16 %v743
        %v823 = vunpack.c.h.b16 %v743
        %v824 = vunpack.c.l.b16 %v744
        %v825 = vunpack.c.l.b16 %v745
        %v826 = vunpack.c.h.b16 %v745
        %v827 = vunpack.c.l.b16 %v746
        %v828 = vunpack.c.l.b16 %v747
        %v829 = vunpack.c.h.b16 %v747
        %v830 = vunpack.c.l.b16 %v748
        %v831 = vunpack.c.l.b16 %v749
        %v832 = vunpack.c.h.b16 %v749
        %v833 = vunpack.c.l.b16 %v750
        %v834 = vunpack.c.l.b16 %v751
        %v835 = vunpack.c.h.b16 %v751
        %v836 = vunpack.c.l.b16 %v752
        %v837 = vunpack.c.l.b16 %v753
        %v838 = vunpack.c.h.b16 %v753
        %v839 = vunpack.c.l.b16 %v754
        %v840 = vunpack.c.l.b16 %v755
        %v841 = vunpack.c.h.b16 %v755
        %v842 = vunpack.c.l.b16 %v756
        %v843 = vunpack.c.l.b16 %v757
        %v844 = vunpack.c.h.b16 %v757
        %v845 = vunpack.c.l.b16 %v758
        %v846 = vunpack.c.l.b16 %v759
        %v847 = vunpack.c.h.b16 %v759
        %v848 = vunpack.c.l.b16 %v760
        %v849 = vunpack.c.l.b16 %v761
        %v850 = vunpack.c.h.b16 %v761
        %v851 = vunpack.c.l.b16 %v762
        %v852 = vunpack.c.l.b16 %v763
        %v853 = vunpack.c.h.b16 %v763
        %v854 = vunpack.c.l.b16 %v764
        %v855 = vunpack.c.l.b16 %v765
        %v856 = vunpack.c.h.b16 %v765
        %v857 = vunpack.c.l.b16 %v766
        %v858 = vunpack.c.l.b16 %v767
        %v859 = vunpack.c.h.b16 %v767
        %v860 = vunpack.c.l.b16 %v768
        %v861 = vpack.c.b16 %v816, %v813
        %v862 = vpack.c.b16 %v817, %v814
        %v863 = vpack.c.b16 %v818, %v815
        %v864 = vpack.c.b16 %v822, %v819
        %v865 = vpack.c.b16 %v823, %v820
        %v866 = vpack.c.b16 %v824, %v821
        %v867 = vpack.c.b16 %v828, %v825
        %v868 = vpack.c.b16 %v829, %v826
        %v869 = vpack.c.b16 %v830, %v827
        %v870 = vpack.c.b16 %v834, %v831
        %v871 = vpack.c.b16 %v835, %v832
        %v872 = vpack.c.b16 %v836, %v833
        %v873 = vpack.c.b16 %v840, %v837
        %v874 = vpack.c.b16 %v841, %v838
        %v875 = vpack.c.b16 %v842, %v839
        %v876 = vpack.c.b16 %v846, %v843
        %v877 = vpack.c.b16 %v847, %v844
        %v878 = vpack.c.b16 %v848, %v845
        %v879 = vpack.c.b16 %v852, %v849
        %v880 = vpack.c.b16 %v853, %v850
        %v881 = vpack.c.b16 %v854, %v851
        %v882 = vpack.c.b16 %v858, %v855
        %v883 = vpack.c.b16 %v859, %v856
        %v884 = vpack.c.b16 %v860, %v857
        %909 = vmatprep.subr.bf16.mxu0 %v862
        %910 = vmatpush1.bf16.msra.mxu0 %v861
        %911 = vmatprep.subr.bf16.mxu0 %v865
        %912 = vmatpush1.bf16.msra.mxu0 %v864
        %913 = vmatprep.subr.bf16.mxu0 %v868
        %914 = vmatpush1.bf16.msra.mxu0 %v867
        %915 = vmatprep.subr.bf16.mxu0 %v871
        %916 = vmatpush1.bf16.msra.mxu0 %v870
        %917 = vmatprep.subr.bf16.mxu0 %v874
        %918 = vmatpush1.bf16.msra.mxu0 %v873
        %919 = vmatprep.subr.bf16.mxu0 %v877
        %920 = vmatpush1.bf16.msra.mxu0 %v876
        %921 = vmatprep.subr.bf16.mxu0 %v880
        %922 = vmatpush1.bf16.msra.mxu0 %v879
        %923 = vmatprep.subr.bf16.mxu0 %v883
        %924 = vmatpush1.bf16.msra.mxu0 %v882
        %925 = vmatprep.subr.bf16.mxu0 0
        %926 = vmatpush1.bf16.msra.mxu0 0
        %927 = vmatprep.subr.bf16.mxu0 0
        %928 = vmatpush1.bf16.msra.mxu0 0
        %929 = vmatprep.subr.bf16.mxu0 0
        %930 = vmatpush1.bf16.msra.mxu0 0
        %931 = vmatprep.subr.bf16.mxu0 0
        %932 = vmatpush1.bf16.msra.mxu0 0
        %933 = vmatprep.subr.bf16.mxu0 0
        %934 = vmatpush1.bf16.msra.mxu0 0
        %935 = vmatprep.subr.bf16.mxu0 0
        %936 = vmatpush1.bf16.msra.mxu0 0
        %937 = vmatprep.subr.bf16.mxu0 0
        %938 = vmatpush1.bf16.msra.mxu0 0
        %939 = vmatprep.subr.bf16.mxu0 0
        %940 = vmatpush1.bf16.msra.mxu0 0
        %941 = vmatprep.mubr.bf16.mxu0 0
        %942 = vmatmul.mubr.bf16.gmra.mrb[0].mxu0 0
        %v943 = vpop.f32.mrb[0].mxu0
        %v944 = vadd.f32 0.0, %v943
        %v945 = vpop.f32.mrb[0].mxu0
        %v946 = vadd.f32 0.0, %v945
        %v947 = vpop.f32.mrb[0].mxu0
        %v948 = vpop.f32.mrb[0].mxu0
        %949 = vdwg.mxu0
        %950 = vmatprep.subr.bf16.mxu0 0
        %951 = vmatpush1.bf16.msra.mxu0 %v863
        %952 = vmatprep.subr.bf16.mxu0 0
        %953 = vmatpush1.bf16.msra.mxu0 %v866
        %954 = vmatprep.subr.bf16.mxu0 0
        %955 = vmatpush1.bf16.msra.mxu0 %v869
        %956 = vmatprep.subr.bf16.mxu0 0
        %957 = vmatpush1.bf16.msra.mxu0 %v872
        %958 = vmatprep.subr.bf16.mxu0 0
        %959 = vmatpush1.bf16.msra.mxu0 %v875
        %960 = vmatprep.subr.bf16.mxu0 0
        %961 = vmatpush1.bf16.msra.mxu0 %v878
        %962 = vmatprep.subr.bf16.mxu0 0
        %963 = vmatpush1.bf16.msra.mxu0 %v881
        %964 = vmatprep.subr.bf16.mxu0 0
        %965 = vmatpush1.bf16.msra.mxu0 %v884
        %966 = vmatprep.subr.bf16.mxu0 0
        %967 = vmatpush1.bf16.msra.mxu0 0
        %968 = vmatprep.subr.bf16.mxu0 0
        %969 = vmatpush1.bf16.msra.mxu0 0
        %970 = vmatprep.subr.bf16.mxu0 0
        %971 = vmatpush1.bf16.msra.mxu0 0
        %972 = vmatprep.subr.bf16.mxu0 0
        %973 = vmatpush1.bf16.msra.mxu0 0
        %974 = vmatprep.subr.bf16.mxu0 0
        %975 = vmatpush1.bf16.msra.mxu0 0
        %976 = vmatprep.subr.bf16.mxu0 0
        %977 = vmatpush1.bf16.msra.mxu0 0
        %978 = vmatprep.subr.bf16.mxu0 0
        %979 = vmatpush1.bf16.msra.mxu0 0
        %980 = vmatprep.subr.bf16.mxu0 0
        %981 = vmatpush1.bf16.msra.mxu0 0
        %982 = vmatprep.mubr.bf16.mxu0 0
        %983 = vmatmul.mubr.bf16.gmra.mrb[0].mxu0 0
        %v984 = vpop.f32.mrb[0].mxu0
        %v985 = vadd.f32 0.0, %v984
        %v986 = vpop.f32.mrb[0].mxu0
        %v987 = vpop.f32.mrb[0].mxu0
        %v988 = vpop.f32.mrb[0].mxu0
        %989 = vdwg.mxu0
        %v990 = vadd.f32 %v778, %v944
        %v991 = vxor.u32 %v990, 2147483648
        %v992 = vmul.f32 %v991, 1.442695
        %v993 = vpow.pop %v992
        %v994 = vadd.f32 %v993, 1.0
        %v995 = vrcp.pop %v994
        %v996 = vmul.f32 1.0, %v995
        %v997 = vadd.f32 %v779, %v946
        %v998 = vxor.u32 %v997, 2147483648
        %v999 = vmul.f32 %v998, 1.442695
        %v1000 = vpow.pop %v999
        %v1001 = vadd.f32 %v1000, 1.0
        %v1002 = vrcp.pop %v1001
        %v1003 = vmul.f32 1.0, %v1002
        %v1004 = vadd.f32 %v985, %v774
        %v1005 = vmul.f32 %v996, %v1004
        %v1006 = vadd.f32 %v780, %v1005
        %v1007 = vtanh.pop %v1006
        %v1008 = vsub.f32 0.0, %v1007
        %v1009 = vmul.f32 %v1003, %v1008
        %v1010 = vadd.f32 %v1007, %v1009
        %vm1011 = vcmp.gt.s32.totalorder %v776, 0
        %v1012 = vsel %vm1011, 1, 0
        %1013 = vset.pattern.permute.xlu0 0
        %1014 = vperm.xlu0 %1013, %v1012
        %v1015 = vpop.permute.xlu0 %1014
        %vm1016 = vcmp.eq.s32.totalorder %v1015, 1
        %v1017 = vsel %vm1016, %v1010, 0.0
        %v1018 = vld [vmem:[#allocation3 + $0x18] sm:$0xff]
        %v1019 = vld [vmem:[#allocation3 + $0x20] sm:$0xff]
        %v1020 = vld [vmem:[#allocation3 + $0x28] sm:$0xff]
        %v1021 = vadd.f32 %v1018, %v944
        %v1022 = vxor.u32 %v1021, 2147483648
        %v1023 = vmul.f32 %v1022, 1.442695
        %v1024 = vpow.pop %v1023
        %v1025 = vadd.f32 %v1024, 1.0
        %v1026 = vrcp.pop %v1025
        %v1027 = vmul.f32 1.0, %v1026
        %v1028 = vadd.f32 %v1019, %v946
        %v1029 = vxor.u32 %v1028, 2147483648
        %v1030 = vmul.f32 %v1029, 1.442695
        %v1031 = vpow.pop %v1030
        %v1032 = vadd.f32 %v1031, 1.0
        %v1033 = vrcp.pop %v1032
        %v1034 = vmul.f32 1.0, %v1033
        %v1035 = vmul.f32 %v1027, %v1004
        %v1036 = vadd.f32 %v1020, %v1035
        %v1037 = vtanh.pop %v1036
        %v1038 = vsub.f32 0.0, %v1037
        %v1039 = vmul.f32 %v1034, %v1038
        %v1040 = vadd.f32 %v1037, %v1039
        %vm1041 = vcmp.gt.s32.totalorder %v777, 0
        %v1042 = vsel %vm1041, 1, 0
        %1043 = vset.pattern.permute.xlu0 0
        %1044 = vperm.xlu0 %1043, %v1042
        %v1045 = vpop.permute.xlu0 %1044
        %vm1046 = vcmp.eq.s32.totalorder %v1045, 1
        %v1047 = vsel %vm1046, %v1040, 0.0
        %v1048 = vld [vmem:[#allocation3 + $0x30] sm:$0xff]
        %v1049 = vld [vmem:[#allocation3 + $0x38] sm:$0xff]
        %v1050 = vld [vmem:[#allocation3 + $0x40] sm:$0xff]
        %v1051 = vpack.c.bf16 %v1017, %v1017
        %1052 = vmatprep.subr.bf16.mxu0 %v862
        %1053 = vmatpush1.bf16.msra.mxu0 %v861
        %1054 = vmatprep.subr.bf16.mxu0 %v865
        %1055 = vmatpush1.bf16.msra.mxu0 %v864
        %1056 = vmatprep.subr.bf16.mxu0 %v868
        %1057 = vmatpush1.bf16.msra.mxu0 %v867
        %1058 = vmatprep.subr.bf16.mxu0 %v871
        %1059 = vmatpush1.bf16.msra.mxu0 %v870
        %1060 = vmatprep.subr.bf16.mxu0 %v874
        %1061 = vmatpush1.bf16.msra.mxu0 %v873
        %1062 = vmatprep.subr.bf16.mxu0 %v877
        %1063 = vmatpush1.bf16.msra.mxu0 %v876
        %1064 = vmatprep.subr.bf16.mxu0 %v880
        %1065 = vmatpush1.bf16.msra.mxu0 %v879
        %1066 = vmatprep.subr.bf16.mxu0 %v883
        %1067 = vmatpush1.bf16.msra.mxu0 %v882
        %1068 = vmatprep.subr.bf16.mxu0 0
        %1069 = vmatpush1.bf16.msra.mxu0 0
        %1070 = vmatprep.subr.bf16.mxu0 0
        %1071 = vmatpush1.bf16.msra.mxu0 0
        %1072 = vmatprep.subr.bf16.mxu0 0
        %1073 = vmatpush1.bf16.msra.mxu0 0
        %1074 = vmatprep.subr.bf16.mxu0 0
        %1075 = vmatpush1.bf16.msra.mxu0 0
        %1076 = vmatprep.subr.bf16.mxu0 0
        %1077 = vmatpush1.bf16.msra.mxu0 0
        %1078 = vmatprep.subr.bf16.mxu0 0
        %1079 = vmatpush1.bf16.msra.mxu0 0
        %1080 = vmatprep.subr.bf16.mxu0 0
        %1081 = vmatpush1.bf16.msra.mxu0 0
        %1082 = vmatprep.subr.bf16.mxu0 0
        %1083 = vmatpush1.bf16.msra.mxu0 0
        %1084 = vmatprep.mubr.bf16.mxu0 0
        %1085 = vmatmul.mubr.bf16.gmra.mrb[0].mxu0 %v1051
        %v1086 = vpop.f32.mrb[0].mxu0
        %v1087 = vadd.f32 0.0, %v1086
        %v1088 = vpop.f32.mrb[0].mxu0
        %v1089 = vadd.f32 0.0, %v1088
        %v1090 = vpop.f32.mrb[0].mxu0
        %v1091 = vpop.f32.mrb[0].mxu0
        %1092 = vdwg.mxu0
        %1093 = vmatprep.subr.bf16.mxu0 0
        %1094 = vmatpush1.bf16.msra.mxu0 %v863
        %1095 = vmatprep.subr.bf16.mxu0 0
        %1096 = vmatpush1.bf16.msra.mxu0 %v866
        %1097 = vmatprep.subr.bf16.mxu0 0
        %1098 = vmatpush1.bf16.msra.mxu0 %v869
        %1099 = vmatprep.subr.bf16.mxu0 0
        %1100 = vmatpush1.bf16.msra.mxu0 %v872
        %1101 = vmatprep.subr.bf16.mxu0 0
        %1102 = vmatpush1.bf16.msra.mxu0 %v875
        %1103 = vmatprep.subr.bf16.mxu0 0
        %1104 = vmatpush1.bf16.msra.mxu0 %v878
        %1105 = vmatprep.subr.bf16.mxu0 0
        %1106 = vmatpush1.bf16.msra.mxu0 %v881
        %1107 = vmatprep.subr.bf16.mxu0 0
        %1108 = vmatpush1.bf16.msra.mxu0 %v884
        %1109 = vmatprep.subr.bf16.mxu0 0
        %1110 = vmatpush1.bf16.msra.mxu0 0
        %1111 = vmatprep.subr.bf16.mxu0 0
        %1112 = vmatpush1.bf16.msra.mxu0 0
        %1113 = vmatprep.subr.bf16.mxu0 0
        %1114 = vmatpush1.bf16.msra.mxu0 0
        %1115 = vmatprep.subr.bf16.mxu0 0
        %1116 = vmatpush1.bf16.msra.mxu0 0
        %1117 = vmatprep.subr.bf16.mxu0 0
        %1118 = vmatpush1.bf16.msra.mxu0 0
        %1119 = vmatprep.subr.bf16.mxu0 0
        %1120 = vmatpush1.bf16.msra.mxu0 0
        %1121 = vmatprep.subr.bf16.mxu0 0
        %1122 = vmatpush1.bf16.msra.mxu0 0
        %1123 = vmatprep.subr.bf16.mxu0 0
        %1124 = vmatpush1.bf16.msra.mxu0 0
        %1125 = vmatprep.mubr.bf16.mxu0 0
        %1126 = vmatmul.mubr.bf16.gmra.mrb[0].mxu0 %v1051
        %v1127 = vpop.f32.mrb[0].mxu0
        %v1128 = vadd.f32 0.0, %v1127
        %v1129 = vpop.f32.mrb[0].mxu0
        %v1130 = vpop.f32.mrb[0].mxu0
        %v1131 = vpop.f32.mrb[0].mxu0
        %1132 = vdwg.mxu0
        %v1133 = vadd.f32 %v1048, %v1087
        %v1134 = vxor.u32 %v1133, 2147483648
        %v1135 = vmul.f32 %v1134, 1.442695
        %v1136 = vpow.pop %v1135
        %v1137 = vadd.f32 %v1136, 1.0
        %v1138 = vrcp.pop %v1137
        %v1139 = vmul.f32 1.0, %v1138
        %v1140 = vadd.f32 %v1049, %v1089
        %v1141 = vxor.u32 %v1140, 2147483648
        %v1142 = vmul.f32 %v1141, 1.442695
        %v1143 = vpow.pop %v1142
        %v1144 = vadd.f32 %v1143, 1.0
        %v1145 = vrcp.pop %v1144
        %v1146 = vmul.f32 1.0, %v1145
        %v1147 = vadd.f32 %v1128, %v774
        %v1148 = vmul.f32 %v1139, %v1147
        %v1149 = vadd.f32 %v1050, %v1148
        %v1150 = vtanh.pop %v1149
        %v1151 = vsub.f32 %v1017, %v1150
        %v1152 = vmul.f32 %v1146, %v1151
        %v1153 = vadd.f32 %v1150, %v1152
        %vm1154 = vcmp.gt.s32.totalorder %v776, 1
        %v1155 = vsel %vm1154, 1, 0
        %1156 = vset.pattern.permute.xlu0 0
        %1157 = vperm.xlu0 %1156, %v1155
        %v1158 = vpop.permute.xlu0 %1157
        %vm1159 = vcmp.eq.s32.totalorder %v1158, 1
        %v1160 = vsel %vm1159, %v1153, %v1017
        %v1161 = vld [vmem:[#allocation3 + $0x48] sm:$0xff]
        %v1162 = vld [vmem:[#allocation3 + $0x50] sm:$0xff]
        %v1163 = vld [vmem:[#allocation3 + $0x58] sm:$0xff]
        %v1164 = vpack.c.bf16 %v1047, %v1047
        %1165 = vmatprep.subr.bf16.mxu0 %v862
        %1166 = vmatpush1.bf16.msra.mxu0 %v861
        %1167 = vmatprep.subr.bf16.mxu0 %v865
        %1168 = vmatpush1.bf16.msra.mxu0 %v864
        %1169 = vmatprep.subr.bf16.mxu0 %v868
        %1170 = vmatpush1.bf16.msra.mxu0 %v867
        %1171 = vmatprep.subr.bf16.mxu0 %v871
        %1172 = vmatpush1.bf16.msra.mxu0 %v870
        %1173 = vmatprep.subr.bf16.mxu0 %v874
        %1174 = vmatpush1.bf16.msra.mxu0 %v873
        %1175 = vmatprep.subr.bf16.mxu0 %v877
        %1176 = vmatpush1.bf16.msra.mxu0 %v876
        %1177 = vmatprep.subr.bf16.mxu0 %v880
        %1178 = vmatpush1.bf16.msra.mxu0 %v879
        %1179 = vmatprep.subr.bf16.mxu0 %v883
        %1180 = vmatpush1.bf16.msra.mxu0 %v882
        %1181 = vmatprep.subr.bf16.mxu0 0
        %1182 = vmatpush1.bf16.msra.mxu0 0
        %1183 = vmatprep.subr.bf16.mxu0 0
        %1184 = vmatpush1.bf16.msra.mxu0 0
        %1185 = vmatprep.subr.bf16.mxu0 0
        %1186 = vmatpush1.bf16.msra.mxu0 0
        %1187 = vmatprep.subr.bf16.mxu0 0
        %1188 = vmatpush1.bf16.msra.mxu0 0
        %1189 = vmatprep.subr.bf16.mxu0 0
        %1190 = vmatpush1.bf16.msra.mxu0 0
        %1191 = vmatprep.subr.bf16.mxu0 0
        %1192 = vmatpush1.bf16.msra.mxu0 0
        %1193 = vmatprep.subr.bf16.mxu0 0
        %1194 = vmatpush1.bf16.msra.mxu0 0
        %1195 = vmatprep.subr.bf16.mxu0 0
        %1196 = vmatpush1.bf16.msra.mxu0 0
        %1197 = vmatprep.mubr.bf16.mxu0 0
        %1198 = vmatmul.mubr.bf16.gmra.mrb[0].mxu0 %v1164
        %v1199 = vpop.f32.mrb[0].mxu0
        %v1200 = vadd.f32 0.0, %v1199
        %v1201 = vpop.f32.mrb[0].mxu0
        %v1202 = vadd.f32 0.0, %v1201
        %v1203 = vpop.f32.mrb[0].mxu0
        %v1204 = vpop.f32.mrb[0].mxu0
        %1205 = vdwg.mxu0
        %1206 = vmatprep.subr.bf16.mxu0 0
        %1207 = vmatpush1.bf16.msra.mxu0 %v863
        %1208 = vmatprep.subr.bf16.mxu0 0
        %1209 = vmatpush1.bf16.msra.mxu0 %v866
        %1210 = vmatprep.subr.bf16.mxu0 0
        %1211 = vmatpush1.bf16.msra.mxu0 %v869
        %1212 = vmatprep.subr.bf16.mxu0 0
        %1213 = vmatpush1.bf16.msra.mxu0 %v872
        %1214 = vmatprep.subr.bf16.mxu0 0
        %1215 = vmatpush1.bf16.msra.mxu0 %v875
        %1216 = vmatprep.subr.bf16.mxu0 0
        %1217 = vmatpush1.bf16.msra.mxu0 %v878
        %1218 = vmatprep.subr.bf16.mxu0 0
        %1219 = vmatpush1.bf16.msra.mxu0 %v881
        %1220 = vmatprep.subr.bf16.mxu0 0
        %1221 = vmatpush1.bf16.msra.mxu0 %v884
        %1222 = vmatprep.subr.bf16.mxu0 0
        %1223 = vmatpush1.bf16.msra.mxu0 0
        %1224 = vmatprep.subr.bf16.mxu0 0
        %1225 = vmatpush1.bf16.msra.mxu0 0
        %1226 = vmatprep.subr.bf16.mxu0 0
        %1227 = vmatpush1.bf16.msra.mxu0 0
        %1228 = vmatprep.subr.bf16.mxu0 0
        %1229 = vmatpush1.bf16.msra.mxu0 0
        %1230 = vmatprep.subr.bf16.mxu0 0
        %1231 = vmatpush1.bf16.msra.mxu0 0
        %1232 = vmatprep.subr.bf16.mxu0 0
        %1233 = vmatpush1.bf16.msra.mxu0 0
        %1234 = vmatprep.subr.bf16.mxu0 0
        %1235 = vmatpush1.bf16.msra.mxu0 0
        %1236 = vmatprep.subr.bf16.mxu0 0
        %1237 = vmatpush1.bf16.msra.mxu0 0
        %1238 = vmatprep.mubr.bf16.mxu0 0
        %1239 = vmatmul.mubr.bf16.gmra.mrb[0].mxu0 %v1164
        %v1240 = vpop.f32.mrb[0].mxu0
        %v1241 = vadd.f32 0.0, %v1240
        %v1242 = vpop.f32.mrb[0].mxu0
        %v1243 = vpop.f32.mrb[0].mxu0
        %v1244 = vpop.f32.mrb[0].mxu0
        %1245 = vdwg.mxu0
        %v1246 = vadd.f32 %v1161, %v1200
        %v1247 = vxor.u32 %v1246, 2147483648
        %v1248 = vmul.f32 %v1247, 1.442695
        %v1249 = vpow.pop %v1248
        %v1250 = vadd.f32 %v1249, 1.0
        %v1251 = vrcp.pop %v1250
        %v1252 = vmul.f32 1.0, %v1251
        %v1253 = vadd.f32 %v1162, %v1202
        %v1254 = vxor.u32 %v1253, 2147483648
        %v1255 = vmul.f32 %v1254, 1.442695
        %v1256 = vpow.pop %v1255
        %v1257 = vadd.f32 %v1256, 1.0
        %v1258 = vrcp.pop %v1257
        %v1259 = vmul.f32 1.0, %v1258
        %v1260 = vadd.f32 %v1241, %v774
        %v1261 = vmul.f32 %v1252, %v1260
        %v1262 = vadd.f32 %v1163, %v1261
        %v1263 = vtanh.pop %v1262
        %v1264 = vsub.f32 %v1047, %v1263
        %v1265 = vmul.f32 %v1259, %v1264
        %v1266 = vadd.f32 %v1263, %v1265
        %vm1267 = vcmp.gt.s32.totalorder %v777, 1
        %v1268 = vsel %vm1267, 1, 0
        %1269 = vset.pattern.permute.xlu0 0
        %1270 = vperm.xlu0 %1269, %v1268
        %v1271 = vpop.permute.xlu0 %1270
        %vm1272 = vcmp.eq.s32.totalorder %v1271, 1
        %v1273 = vsel %vm1272, %v1266, %v1047
        %v1274 = vld [vmem:[#allocation3 + $0x60] sm:$0xff]
        %v1275 = vld [vmem:[#allocation3 + $0x68] sm:$0xff]
        %v1276 = vld [vmem:[#allocation3 + $0x70] sm:$0xff]
        %v1277 = vpack.c.bf16 %v1160, %v1160
        %1278 = vmatprep.subr.bf16.mxu0 %v862
        %1279 = vmatpush1.bf16.msra.mxu0 %v861
        %1280 = vmatprep.subr.bf16.mxu0 %v865
        %1281 = vmatpush1.bf16.msra.mxu0 %v864
        %1282 = vmatprep.subr.bf16.mxu0 %v868
        %1283 = vmatpush1.bf16.msra.mxu0 %v867
        %1284 = vmatprep.subr.bf16.mxu0 %v871
        %1285 = vmatpush1.bf16.msra.mxu0 %v870
        %1286 = vmatprep.subr.bf16.mxu0 %v874
        %1287 = vmatpush1.bf16.msra.mxu0 %v873
        %1288 = vmatprep.subr.bf16.mxu0 %v877
        %1289 = vmatpush1.bf16.msra.mxu0 %v876
        %1290 = vmatprep.subr.bf16.mxu0 %v880
        %1291 = vmatpush1.bf16.msra.mxu0 %v879
        %1292 = vmatprep.subr.bf16.mxu0 %v883
        %1293 = vmatpush1.bf16.msra.mxu0 %v882
        %1294 = vmatprep.subr.bf16.mxu0 0
        %1295 = vmatpush1.bf16.msra.mxu0 0
        %1296 = vmatprep.subr.bf16.mxu0 0
        %1297 = vmatpush1.bf16.msra.mxu0 0
        %1298 = vmatprep.subr.bf16.mxu0 0
        %1299 = vmatpush1.bf16.msra.mxu0 0
        %1300 = vmatprep.subr.bf16.mxu0 0
        %1301 = vmatpush1.bf16.msra.mxu0 0
        %1302 = vmatprep.subr.bf16.mxu0 0
        %1303 = vmatpush1.bf16.msra.mxu0 0
        %1304 = vmatprep.subr.bf16.mxu0 0
        %1305 = vmatpush1.bf16.msra.mxu0 0
        %1306 = vmatprep.subr.bf16.mxu0 0
        %1307 = vmatpush1.bf16.msra.mxu0 0
        %1308 = vmatprep.subr.bf16.mxu0 0
        %1309 = vmatpush1.bf16.msra.mxu0 0
        %1310 = vmatprep.mubr.bf16.mxu0 0
        %1311 = vmatmul.mubr.bf16.gmra.mrb[0].mxu0 %v1277
        %v1312 = vpop.f32.mrb[0].mxu0
        %v1313 = vadd.f32 0.0, %v1312
        %v1314 = vpop.f32.mrb[0].mxu0
        %v1315 = vadd.f32 0.0, %v1314
        %v1316 = vpop.f32.mrb[0].mxu0
        %v1317 = vpop.f32.mrb[0].mxu0
        %1318 = vdwg.mxu0
        %1319 = vmatprep.subr.bf16.mxu0 0
        %1320 = vmatpush1.bf16.msra.mxu0 %v863
        %1321 = vmatprep.subr.bf16.mxu0 0
        %1322 = vmatpush1.bf16.msra.mxu0 %v866
        %1323 = vmatprep.subr.bf16.mxu0 0
        %1324 = vmatpush1.bf16.msra.mxu0 %v869
        %1325 = vmatprep.subr.bf16.mxu0 0
        %1326 = vmatpush1.bf16.msra.mxu0 %v872
        %1327 = vmatprep.subr.bf16.mxu0 0
        %1328 = vmatpush1.bf16.msra.mxu0 %v875
        %1329 = vmatprep.subr.bf16.mxu0 0
        %1330 = vmatpush1.bf16.msra.mxu0 %v878
        %1331 = vmatprep.subr.bf16.mxu0 0
        %1332 = vmatpush1.bf16.msra.mxu0 %v881
        %1333 = vmatprep.subr.bf16.mxu0 0
        %1334 = vmatpush1.bf16.msra.mxu0 %v884
        %1335 = vmatprep.subr.bf16.mxu0 0
        %1336 = vmatpush1.bf16.msra.mxu0 0
        %1337 = vmatprep.subr.bf16.mxu0 0
        %1338 = vmatpush1.bf16.msra.mxu0 0
        %1339 = vmatprep.subr.bf16.mxu0 0
        %1340 = vmatpush1.bf16.msra.mxu0 0
        %1341 = vmatprep.subr.bf16.mxu0 0
        %1342 = vmatpush1.bf16.msra.mxu0 0
        %1343 = vmatprep.subr.bf16.mxu0 0
        %1344 = vmatpush1.bf16.msra.mxu0 0
        %1345 = vmatprep.subr.bf16.mxu0 0
        %1346 = vmatpush1.bf16.msra.mxu0 0
        %1347 = vmatprep.subr.bf16.mxu0 0
        %1348 = vmatpush1.bf16.msra.mxu0 0
        %1349 = vmatprep.subr.bf16.mxu0 0
        %1350 = vmatpush1.bf16.msra.mxu0 0
        %1351 = vmatprep.mubr.bf16.mxu0 0
        %1352 = vmatmul.mubr.bf16.gmra.mrb[0].mxu0 %v1277
        %v1353 = vpop.f32.mrb[0].mxu0
        %v1354 = vadd.f32 0.0, %v1353
        %v1355 = vpop.f32.mrb[0].mxu0
        %v1356 = vpop.f32.mrb[0].mxu0
        %v1357 = vpop.f32.mrb[0].mxu0
        %1358 = vdwg.mxu0
        %v1359 = vadd.f32 %v1274, %v1313
        %v1360 = vxor.u32 %v1359, 2147483648
        %v1361 = vmul.f32 %v1360, 1.442695
        %v1362 = vpow.pop %v1361
        %v1363 = vadd.f32 %v1362, 1.0
        %v1364 = vrcp.pop %v1363
        %v1365 = vmul.f32 1.0, %v1364
        %v1366 = vadd.f32 %v1275, %v1315
        %v1367 = vxor.u32 %v1366, 2147483648
        %v1368 = vmul.f32 %v1367, 1.442695
        %v1369 = vpow.pop %v1368
        %v1370 = vadd.f32 %v1369, 1.0
        %v1371 = vrcp.pop %v1370
        %v1372 = vmul.f32 1.0, %v1371
        %v1373 = vadd.f32 %v1354, %v774
        %v1374 = vmul.f32 %v1365, %v1373
        %v1375 = vadd.f32 %v1276, %v1374
        %v1376 = vtanh.pop %v1375
        %v1377 = vsub.f32 %v1160, %v1376
        %v1378 = vmul.f32 %v1372, %v1377
        %v1379 = vadd.f32 %v1376, %v1378
        %vm1380 = vcmp.gt.s32.totalorder %v776, 2
        %v1381 = vsel %vm1380, 1, 0
        %1382 = vset.pattern.permute.xlu0 0
        %1383 = vperm.xlu0 %1382, %v1381
        %v1384 = vpop.permute.xlu0 %1383
        %vm1385 = vcmp.eq.s32.totalorder %v1384, 1
        %v1386 = vsel %vm1385, %v1379, %v1160
        %v1387 = vld [vmem:[#allocation3 + $0x78] sm:$0xff]
        %v1388 = vld [vmem:[#allocation3 + $0x80] sm:$0xff]
        %v1389 = vld [vmem:[#allocation3 + $0x88] sm:$0xff]
        %v1390 = vpack.c.bf16 %v1273, %v1273
        %1391 = vmatprep.subr.bf16.mxu0 %v862
        %1392 = vmatpush1.bf16.msra.mxu0 %v861
        %1393 = vmatprep.subr.bf16.mxu0 %v865
        %1394 = vmatpush1.bf16.msra.mxu0 %v864
        %1395 = vmatprep.subr.bf16.mxu0 %v868
        %1396 = vmatpush1.bf16.msra.mxu0 %v867
        %1397 = vmatprep.subr.bf16.mxu0 %v871
        %1398 = vmatpush1.bf16.msra.mxu0 %v870
        %1399 = vmatprep.subr.bf16.mxu0 %v874
        %1400 = vmatpush1.bf16.msra.mxu0 %v873
        %1401 = vmatprep.subr.bf16.mxu0 %v877
        %1402 = vmatpush1.bf16.msra.mxu0 %v876
        %1403 = vmatprep.subr.bf16.mxu0 %v880
        %1404 = vmatpush1.bf16.msra.mxu0 %v879
        %1405 = vmatprep.subr.bf16.mxu0 %v883
        %1406 = vmatpush1.bf16.msra.mxu0 %v882
        %1407 = vmatprep.subr.bf16.mxu0 0
        %1408 = vmatpush1.bf16.msra.mxu0 0
        %1409 = vmatprep.subr.bf16.mxu0 0
        %1410 = vmatpush1.bf16.msra.mxu0 0
        %1411 = vmatprep.subr.bf16.mxu0 0
        %1412 = vmatpush1.bf16.msra.mxu0 0
        %1413 = vmatprep.subr.bf16.mxu0 0
        %1414 = vmatpush1.bf16.msra.mxu0 0
        %1415 = vmatprep.subr.bf16.mxu0 0
        %1416 = vmatpush1.bf16.msra.mxu0 0
        %1417 = vmatprep.subr.bf16.mxu0 0
        %1418 = vmatpush1.bf16.msra.mxu0 0
        %1419 = vmatprep.subr.bf16.mxu0 0
        %1420 = vmatpush1.bf16.msra.mxu0 0
        %1421 = vmatprep.subr.bf16.mxu0 0
        %1422 = vmatpush1.bf16.msra.mxu0 0
        %1423 = vmatprep.mubr.bf16.mxu0 0
        %1424 = vmatmul.mubr.bf16.gmra.mrb[0].mxu0 %v1390
        %v1425 = vpop.f32.mrb[0].mxu0
        %v1426 = vadd.f32 0.0, %v1425
        %v1427 = vpop.f32.mrb[0].mxu0
        %v1428 = vadd.f32 0.0, %v1427
        %v1429 = vpop.f32.mrb[0].mxu0
        %v1430 = vpop.f32.mrb[0].mxu0
        %1431 = vdwg.mxu0
        %1432 = vmatprep.subr.bf16.mxu0 0
        %1433 = vmatpush1.bf16.msra.mxu0 %v863
        %1434 = vmatprep.subr.bf16.mxu0 0
        %1435 = vmatpush1.bf16.msra.mxu0 %v866
        %1436 = vmatprep.subr.bf16.mxu0 0
        %1437 = vmatpush1.bf16.msra.mxu0 %v869
        %1438 = vmatprep.subr.bf16.mxu0 0
        %1439 = vmatpush1.bf16.msra.mxu0 %v872
        %1440 = vmatprep.subr.bf16.mxu0 0
        %1441 = vmatpush1.bf16.msra.mxu0 %v875
        %1442 = vmatprep.subr.bf16.mxu0 0
        %1443 = vmatpush1.bf16.msra.mxu0 %v878
        %1444 = vmatprep.subr.bf16.mxu0 0
        %1445 = vmatpush1.bf16.msra.mxu0 %v881
        %1446 = vmatprep.subr.bf16.mxu0 0
        %1447 = vmatpush1.bf16.msra.mxu0 %v884
        %1448 = vmatprep.subr.bf16.mxu0 0
        %1449 = vmatpush1.bf16.msra.mxu0 0
        %1450 = vmatprep.subr.bf16.mxu0 0
        %1451 = vmatpush1.bf16.msra.mxu0 0
        %1452 = vmatprep.subr.bf16.mxu0 0
        %1453 = vmatpush1.bf16.msra.mxu0 0
        %1454 = vmatprep.subr.bf16.mxu0 0
        %1455 = vmatpush1.bf16.msra.mxu0 0
        %1456 = vmatprep.subr.bf16.mxu0 0
        %1457 = vmatpush1.bf16.msra.mxu0 0
        %1458 = vmatprep.subr.bf16.mxu0 0
        %1459 = vmatpush1.bf16.msra.mxu0 0
        %1460 = vmatprep.subr.bf16.mxu0 0
        %1461 = vmatpush1.bf16.msra.mxu0 0
        %1462 = vmatprep.subr.bf16.mxu0 0
        %1463 = vmatpush1.bf16.msra.mxu0 0
        %1464 = vmatprep.mubr.bf16.mxu0 0
        %1465 = vmatmul.mubr.bf16.gmra.mrb[0].mxu0 %v1390
        %v1466 = vpop.f32.mrb[0].mxu0
        %v1467 = vadd.f32 0.0, %v1466
        %v1468 = vpop.f32.mrb[0].mxu0
        %v1469 = vpop.f32.mrb[0].mxu0
        %v1470 = vpop.f32.mrb[0].mxu0
        %1471 = vdwg.mxu0
        %v1472 = vadd.f32 %v1387, %v1426
        %v1473 = vxor.u32 %v1472, 2147483648
        %v1474 = vmul.f32 %v1473, 1.442695
        %v1475 = vpow.pop %v1474
        %v1476 = vadd.f32 %v1475, 1.0
        %v1477 = vrcp.pop %v1476
        %v1478 = vmul.f32 1.0, %v1477
        %v1479 = vadd.f32 %v1388, %v1428
        %v1480 = vxor.u32 %v1479, 2147483648
        %v1481 = vmul.f32 %v1480, 1.442695
        %v1482 = vpow.pop %v1481
        %v1483 = vadd.f32 %v1482, 1.0
        %v1484 = vrcp.pop %v1483
        %v1485 = vmul.f32 1.0, %v1484
        %v1486 = vadd.f32 %v1467, %v774
        %v1487 = vmul.f32 %v1478, %v1486
        %v1488 = vadd.f32 %v1389, %v1487
        %v1489 = vtanh.pop %v1488
        %v1490 = vsub.f32 %v1273, %v1489
        %v1491 = vmul.f32 %v1485, %v1490
        %v1492 = vadd.f32 %v1489, %v1491
        %vm1493 = vcmp.gt.s32.totalorder %v777, 2
        %v1494 = vsel %vm1493, 1, 0
        %1495 = vset.pattern.permute.xlu0 0
        %1496 = vperm.xlu0 %1495, %v1494
        %v1497 = vpop.permute.xlu0 %1496
        %vm1498 = vcmp.eq.s32.totalorder %v1497, 1
        %v1499 = vsel %vm1498, %v1492, %v1273
        %v1500 = vld [vmem:[#allocation3 + $0x90] sm:$0xff]
        %v1501 = vld [vmem:[#allocation3 + $0x98] sm:$0xff]
        %v1502 = vld [vmem:[#allocation3 + $0xa0] sm:$0xff]
        %v1503 = vpack.c.bf16 %v1386, %v1386
        %1504 = vmatprep.subr.bf16.mxu0 %v862
        %1505 = vmatpush1.bf16.msra.mxu0 %v861
        %1506 = vmatprep.subr.bf16.mxu0 %v865
        %1507 = vmatpush1.bf16.msra.mxu0 %v864
        %1508 = vmatprep.subr.bf16.mxu0 %v868
        %1509 = vmatpush1.bf16.msra.mxu0 %v867
        %1510 = vmatprep.subr.bf16.mxu0 %v871
        %1511 = vmatpush1.bf16.msra.mxu0 %v870
        %1512 = vmatprep.subr.bf16.mxu0 %v874
        %1513 = vmatpush1.bf16.msra.mxu0 %v873
        %1514 = vmatprep.subr.bf16.mxu0 %v877
        %1515 = vmatpush1.bf16.msra.mxu0 %v876
        %1516 = vmatprep.subr.bf16.mxu0 %v880
        %1517 = vmatpush1.bf16.msra.mxu0 %v879
        %1518 = vmatprep.subr.bf16.mxu0 %v883
        %1519 = vmatpush1.bf16.msra.mxu0 %v882
        %1520 = vmatprep.subr.bf16.mxu0 0
        %1521 = vmatpush1.bf16.msra.mxu0 0
        %1522 = vmatprep.subr.bf16.mxu0 0
        %1523 = vmatpush1.bf16.msra.mxu0 0
        %1524 = vmatprep.subr.bf16.mxu0 0
        %1525 = vmatpush1.bf16.msra.mxu0 0
        %1526 = vmatprep.subr.bf16.mxu0 0
        %1527 = vmatpush1.bf16.msra.mxu0 0
        %1528 = vmatprep.subr.bf16.mxu0 0
        %1529 = vmatpush1.bf16.msra.mxu0 0
        %1530 = vmatprep.subr.bf16.mxu0 0
        %1531 = vmatpush1.bf16.msra.mxu0 0
        %1532 = vmatprep.subr.bf16.mxu0 0
        %1533 = vmatpush1.bf16.msra.mxu0 0
        %1534 = vmatprep.subr.bf16.mxu0 0
        %1535 = vmatpush1.bf16.msra.mxu0 0
        %1536 = vmatprep.mubr.bf16.mxu0 0
        %1537 = vmatmul.mubr.bf16.gmra.mrb[0].mxu0 %v1503
        %v1538 = vpop.f32.mrb[0].mxu0
        %v1539 = vadd.f32 0.0, %v1538
        %v1540 = vpop.f32.mrb[0].mxu0
        %v1541 = vadd.f32 0.0, %v1540
        %v1542 = vpop.f32.mrb[0].mxu0
        %v1543 = vpop.f32.mrb[0].mxu0
        %1544 = vdwg.mxu0
        %1545 = vmatprep.subr.bf16.mxu0 0
        %1546 = vmatpush1.bf16.msra.mxu0 %v863
        %1547 = vmatprep.subr.bf16.mxu0 0
        %1548 = vmatpush1.bf16.msra.mxu0 %v866
        %1549 = vmatprep.subr.bf16.mxu0 0
        %1550 = vmatpush1.bf16.msra.mxu0 %v869
        %1551 = vmatprep.subr.bf16.mxu0 0
        %1552 = vmatpush1.bf16.msra.mxu0 %v872
        %1553 = vmatprep.subr.bf16.mxu0 0
        %1554 = vmatpush1.bf16.msra.mxu0 %v875
        %1555 = vmatprep.subr.bf16.mxu0 0
        %1556 = vmatpush1.bf16.msra.mxu0 %v878
        %1557 = vmatprep.subr.bf16.mxu0 0
        %1558 = vmatpush1.bf16.msra.mxu0 %v881
        %1559 = vmatprep.subr.bf16.mxu0 0
        %1560 = vmatpush1.bf16.msra.mxu0 %v884
        %1561 = vmatprep.subr.bf16.mxu0 0
        %1562 = vmatpush1.bf16.msra.mxu0 0
        %1563 = vmatprep.subr.bf16.mxu0 0
        %1564 = vmatpush1.bf16.msra.mxu0 0
        %1565 = vmatprep.subr.bf16.mxu0 0
        %1566 = vmatpush1.bf16.msra.mxu0 0
        %1567 = vmatprep.subr.bf16.mxu0 0
        %1568 = vmatpush1.bf16.msra.mxu0 0
        %1569 = vmatprep.subr.bf16.mxu0 0
        %1570 = vmatpush1.bf16.msra.mxu0 0
        %1571 = vmatprep.subr.bf16.mxu0 0
        %1572 = vmatpush1.bf16.msra.mxu0 0
        %1573 = vmatprep.subr.bf16.mxu0 0
        %1574 = vmatpush1.bf16.msra.mxu0 0
        %1575 = vmatprep.subr.bf16.mxu0 0
        %1576 = vmatpush1.bf16.msra.mxu0 0
        %1577 = vmatprep.mubr.bf16.mxu0 0
        %1578 = vmatmul.mubr.bf16.gmra.mrb[0].mxu0 %v1503
        %v1579 = vpop.f32.mrb[0].mxu0
        %v1580 = vadd.f32 0.0, %v1579
        %v1581 = vpop.f32.mrb[0].mxu0
        %v1582 = vpop.f32.mrb[0].mxu0
        %v1583 = vpop.f32.mrb[0].mxu0
        %1584 = vdwg.mxu0
        %v1585 = vadd.f32 %v1500, %v1539
        %v1586 = vxor.u32 %v1585, 2147483648
        %v1587 = vmul.f32 %v1586, 1.442695
        %v1588 = vpow.pop %v1587
        %v1589 = vadd.f32 %v1588, 1.0
        %v1590 = vrcp.pop %v1589
        %v1591 = vmul.f32 1.0, %v1590
        %v1592 = vadd.f32 %v1501, %v1541
        %v1593 = vxor.u32 %v1592, 2147483648
        %v1594 = vmul.f32 %v1593, 1.442695
        %v1595 = vpow.pop %v1594
        %v1596 = vadd.f32 %v1595, 1.0
        %v1597 = vrcp.pop %v1596
        %v1598 = vmul.f32 1.0, %v1597
        %v1599 = vadd.f32 %v1580, %v774
        %v1600 = vmul.f32 %v1591, %v1599
        %v1601 = vadd.f32 %v1502, %v1600
        %v1602 = vtanh.pop %v1601
        %v1603 = vsub.f32 %v1386, %v1602
        %v1604 = vmul.f32 %v1598, %v1603
        %v1605 = vadd.f32 %v1602, %v1604
        %vm1606 = vcmp.gt.s32.totalorder %v776, 3
        %v1607 = vsel %vm1606, 1, 0
        %1608 = vset.pattern.permute.xlu0 0
        %1609 = vperm.xlu0 %1608, %v1607
        %v1610 = vpop.permute.xlu0 %1609
        %vm1611 = vcmp.eq.s32.totalorder %v1610, 1
        %v1612 = vsel %vm1611, %v1605, %v1386
        %v1613 = vld [vmem:[#allocation3 + $0xa8] sm:$0xff]
        %v1614 = vld [vmem:[#allocation3 + $0xb0] sm:$0xff]
        %v1615 = vld [vmem:[#allocation3 + $0xb8] sm:$0xff]
        %v1616 = vpack.c.bf16 %v1499, %v1499
        %1617 = vmatprep.subr.bf16.mxu0 %v862
        %1618 = vmatpush1.bf16.msra.mxu0 %v861
        %1619 = vmatprep.subr.bf16.mxu0 %v865
        %1620 = vmatpush1.bf16.msra.mxu0 %v864
        %1621 = vmatprep.subr.bf16.mxu0 %v868
        %1622 = vmatpush1.bf16.msra.mxu0 %v867
        %1623 = vmatprep.subr.bf16.mxu0 %v871
        %1624 = vmatpush1.bf16.msra.mxu0 %v870
        %1625 = vmatprep.subr.bf16.mxu0 %v874
        %1626 = vmatpush1.bf16.msra.mxu0 %v873
        %1627 = vmatprep.subr.bf16.mxu0 %v877
        %1628 = vmatpush1.bf16.msra.mxu0 %v876
        %1629 = vmatprep.subr.bf16.mxu0 %v880
        %1630 = vmatpush1.bf16.msra.mxu0 %v879
        %1631 = vmatprep.subr.bf16.mxu0 %v883
        %1632 = vmatpush1.bf16.msra.mxu0 %v882
        %1633 = vmatprep.subr.bf16.mxu0 0
        %1634 = vmatpush1.bf16.msra.mxu0 0
        %1635 = vmatprep.subr.bf16.mxu0 0
        %1636 = vmatpush1.bf16.msra.mxu0 0
        %1637 = vmatprep.subr.bf16.mxu0 0
        %1638 = vmatpush1.bf16.msra.mxu0 0
        %1639 = vmatprep.subr.bf16.mxu0 0
        %1640 = vmatpush1.bf16.msra.mxu0 0
        %1641 = vmatprep.subr.bf16.mxu0 0
        %1642 = vmatpush1.bf16.msra.mxu0 0
        %1643 = vmatprep.subr.bf16.mxu0 0
        %1644 = vmatpush1.bf16.msra.mxu0 0
        %1645 = vmatprep.subr.bf16.mxu0 0
        %1646 = vmatpush1.bf16.msra.mxu0 0
        %1647 = vmatprep.subr.bf16.mxu0 0
        %1648 = vmatpush1.bf16.msra.mxu0 0
        %1649 = vmatprep.mubr.bf16.mxu0 0
        %1650 = vmatmul.mubr.bf16.gmra.mrb[0].mxu0 %v1616
        %v1651 = vpop.f32.mrb[0].mxu0
        %v1652 = vadd.f32 0.0, %v1651
        %v1653 = vpop.f32.mrb[0].mxu0
        %v1654 = vadd.f32 0.0, %v1653
        %v1655 = vpop.f32.mrb[0].mxu0
        %v1656 = vpop.f32.mrb[0].mxu0
        %1657 = vdwg.mxu0
        %1658 = vmatprep.subr.bf16.mxu0 0
        %1659 = vmatpush1.bf16.msra.mxu0 %v863
        %1660 = vmatprep.subr.bf16.mxu0 0
        %1661 = vmatpush1.bf16.msra.mxu0 %v866
        %1662 = vmatprep.subr.bf16.mxu0 0
        %1663 = vmatpush1.bf16.msra.mxu0 %v869
        %1664 = vmatprep.subr.bf16.mxu0 0
        %1665 = vmatpush1.bf16.msra.mxu0 %v872
        %1666 = vmatprep.subr.bf16.mxu0 0
        %1667 = vmatpush1.bf16.msra.mxu0 %v875
        %1668 = vmatprep.subr.bf16.mxu0 0
        %1669 = vmatpush1.bf16.msra.mxu0 %v878
        %1670 = vmatprep.subr.bf16.mxu0 0
        %1671 = vmatpush1.bf16.msra.mxu0 %v881
        %1672 = vmatprep.subr.bf16.mxu0 0
        %1673 = vmatpush1.bf16.msra.mxu0 %v884
        %1674 = vmatprep.subr.bf16.mxu0 0
        %1675 = vmatpush1.bf16.msra.mxu0 0
        %1676 = vmatprep.subr.bf16.mxu0 0
        %1677 = vmatpush1.bf16.msra.mxu0 0
        %1678 = vmatprep.subr.bf16.mxu0 0
        %1679 = vmatpush1.bf16.msra.mxu0 0
        %1680 = vmatprep.subr.bf16.mxu0 0
        %1681 = vmatpush1.bf16.msra.mxu0 0
        %1682 = vmatprep.subr.bf16.mxu0 0
        %1683 = vmatpush1.bf16.msra.mxu0 0
        %1684 = vmatprep.subr.bf16.mxu0 0
        %1685 = vmatpush1.bf16.msra.mxu0 0
        %1686 = vmatprep.subr.bf16.mxu0 0
        %1687 = vmatpush1.bf16.msra.mxu0 0
        %1688 = vmatprep.subr.bf16.mxu0 0
        %1689 = vmatpush1.bf16.msra.mxu0 0
        %1690 = vmatprep.mubr.bf16.mxu0 0
        %1691 = vmatmul.mubr.bf16.gmra.mrb[0].mxu0 %v1616
        %v1692 = vpop.f32.mrb[0].mxu0
        %v1693 = vadd.f32 0.0, %v1692
        %v1694 = vpop.f32.mrb[0].mxu0
        %v1695 = vpop.f32.mrb[0].mxu0
        %v1696 = vpop.f32.mrb[0].mxu0
        %1697 = vdwg.mxu0
        %v1698 = vadd.f32 %v1613, %v1652
        %v1699 = vxor.u32 %v1698, 2147483648
        %v1700 = vmul.f32 %v1699, 1.442695
        %v1701 = vpow.pop %v1700
        %v1702 = vadd.f32 %v1701, 1.0
        %v1703 = vrcp.pop %v1702
        %v1704 = vmul.f32 1.0, %v1703
        %v1705 = vadd.f32 %v1614, %v1654
        %v1706 = vxor.u32 %v1705, 2147483648
        %v1707 = vmul.f32 %v1706, 1.442695
        %v1708 = vpow.pop %v1707
        %v1709 = vadd.f32 %v1708, 1.0
        %v1710 = vrcp.pop %v1709
        %v1711 = vmul.f32 1.0, %v1710
        %v1712 = vadd.f32 %v1693, %v774
        %v1713 = vmul.f32 %v1704, %v1712
        %v1714 = vadd.f32 %v1615, %v1713
        %v1715 = vtanh.pop %v1714
        %v1716 = vsub.f32 %v1499, %v1715
        %v1717 = vmul.f32 %v1711, %v1716
        %v1718 = vadd.f32 %v1715, %v1717
        %vm1719 = vcmp.gt.s32.totalorder %v777, 3
        %v1720 = vsel %vm1719, 1, 0
        %1721 = vset.pattern.permute.xlu0 0
        %1722 = vperm.xlu0 %1721, %v1720
        %v1723 = vpop.permute.xlu0 %1722
        %vm1724 = vcmp.eq.s32.totalorder %v1723, 1
        %v1725 = vsel %vm1724, %v1718, %v1499
        %v1726 = vld [vmem:[#allocation3 + $0xc0] sm:$0xff]
        %v1727 = vld [vmem:[#allocation3 + $0xc8] sm:$0xff]
        %v1728 = vld [vmem:[#allocation3 + $0xd0] sm:$0xff]
        %v1729 = vpack.c.bf16 %v1612, %v1612
        %1730 = vmatprep.subr.bf16.mxu0 %v862
        %1731 = vmatpush1.bf16.msra.mxu0 %v861
        %1732 = vmatprep.subr.bf16.mxu0 %v865
        %1733 = vmatpush1.bf16.msra.mxu0 %v864
        %1734 = vmatprep.subr.bf16.mxu0 %v868
        %1735 = vmatpush1.bf16.msra.mxu0 %v867
        %1736 = vmatprep.subr.bf16.mxu0 %v871
        %1737 = vmatpush1.bf16.msra.mxu0 %v870
        %1738 = vmatprep.subr.bf16.mxu0 %v874
        %1739 = vmatpush1.bf16.msra.mxu0 %v873
        %1740 = vmatprep.subr.bf16.mxu0 %v877
        %1741 = vmatpush1.bf16.msra.mxu0 %v876
        %1742 = vmatprep.subr.bf16.mxu0 %v880
        %1743 = vmatpush1.bf16.msra.mxu0 %v879
        %1744 = vmatprep.subr.bf16.mxu0 %v883
        %1745 = vmatpush1.bf16.msra.mxu0 %v882
        %1746 = vmatprep.subr.bf16.mxu0 0
        %1747 = vmatpush1.bf16.msra.mxu0 0
        %1748 = vmatprep.subr.bf16.mxu0 0
        %1749 = vmatpush1.bf16.msra.mxu0 0
        %1750 = vmatprep.subr.bf16.mxu0 0
        %1751 = vmatpush1.bf16.msra.mxu0 0
        %1752 = vmatprep.subr.bf16.mxu0 0
        %1753 = vmatpush1.bf16.msra.mxu0 0
        %1754 = vmatprep.subr.bf16.mxu0 0
        %1755 = vmatpush1.bf16.msra.mxu0 0
        %1756 = vmatprep.subr.bf16.mxu0 0
        %1757 = vmatpush1.bf16.msra.mxu0 0
        %1758 = vmatprep.subr.bf16.mxu0 0
        %1759 = vmatpush1.bf16.msra.mxu0 0
        %1760 = vmatprep.subr.bf16.mxu0 0
        %1761 = vmatpush1.bf16.msra.mxu0 0
        %1762 = vmatprep.mubr.bf16.mxu0 0
        %1763 = vmatmul.mubr.bf16.gmra.mrb[0].mxu0 %v1729
        %v1764 = vpop.f32.mrb[0].mxu0
        %v1765 = vadd.f32 0.0, %v1764
        %v1766 = vpop.f32.mrb[0].mxu0
        %v1767 = vadd.f32 0.0, %v1766
        %v1768 = vpop.f32.mrb[0].mxu0
        %v1769 = vpop.f32.mrb[0].mxu0
        %1770 = vdwg.mxu0
        %1771 = vmatprep.subr.bf16.mxu0 0
        %1772 = vmatpush1.bf16.msra.mxu0 %v863
        %1773 = vmatprep.subr.bf16.mxu0 0
        %1774 = vmatpush1.bf16.msra.mxu0 %v866
        %1775 = vmatprep.subr.bf16.mxu0 0
        %1776 = vmatpush1.bf16.msra.mxu0 %v869
        %1777 = vmatprep.subr.bf16.mxu0 0
        %1778 = vmatpush1.bf16.msra.mxu0 %v872
        %1779 = vmatprep.subr.bf16.mxu0 0
        %1780 = vmatpush1.bf16.msra.mxu0 %v875
        %1781 = vmatprep.subr.bf16.mxu0 0
        %1782 = vmatpush1.bf16.msra.mxu0 %v878
        %1783 = vmatprep.subr.bf16.mxu0 0
        %1784 = vmatpush1.bf16.msra.mxu0 %v881
        %1785 = vmatprep.subr.bf16.mxu0 0
        %1786 = vmatpush1.bf16.msra.mxu0 %v884
        %1787 = vmatprep.subr.bf16.mxu0 0
        %1788 = vmatpush1.bf16.msra.mxu0 0
        %1789 = vmatprep.subr.bf16.mxu0 0
        %1790 = vmatpush1.bf16.msra.mxu0 0
        %1791 = vmatprep.subr.bf16.mxu0 0
        %1792 = vmatpush1.bf16.msra.mxu0 0
        %1793 = vmatprep.subr.bf16.mxu0 0
        %1794 = vmatpush1.bf16.msra.mxu0 0
        %1795 = vmatprep.subr.bf16.mxu0 0
        %1796 = vmatpush1.bf16.msra.mxu0 0
        %1797 = vmatprep.subr.bf16.mxu0 0
        %1798 = vmatpush1.bf16.msra.mxu0 0
        %1799 = vmatprep.subr.bf16.mxu0 0
        %1800 = vmatpush1.bf16.msra.mxu0 0
        %1801 = vmatprep.subr.bf16.mxu0 0
        %1802 = vmatpush1.bf16.msra.mxu0 0
        %1803 = vmatprep.mubr.bf16.mxu0 0
        %1804 = vmatmul.mubr.bf16.gmra.mrb[0].mxu0 %v1729
        %v1805 = vpop.f32.mrb[0].mxu0
        %v1806 = vadd.f32 0.0, %v1805
        %v1807 = vpop.f32.mrb[0].mxu0
        %v1808 = vpop.f32.mrb[0].mxu0
        %v1809 = vpop.f32.mrb[0].mxu0
        %1810 = vdwg.mxu0
        %v1811 = vadd.f32 %v1726, %v1765
        %v1812 = vxor.u32 %v1811, 2147483648
        %v1813 = vmul.f32 %v1812, 1.442695
        %v1814 = vpow.pop %v1813
        %v1815 = vadd.f32 %v1814, 1.0
        %v1816 = vrcp.pop %v1815
        %v1817 = vmul.f32 1.0, %v1816
        %v1818 = vadd.f32 %v1727, %v1767
        %v1819 = vxor.u32 %v1818, 2147483648
        %v1820 = vmul.f32 %v1819, 1.442695
        %v1821 = vpow.pop %v1820
        %v1822 = vadd.f32 %v1821, 1.0
        %v1823 = vrcp.pop %v1822
        %v1824 = vmul.f32 1.0, %v1823
        %v1825 = vadd.f32 %v1806, %v774
        %v1826 = vmul.f32 %v1817, %v1825
        %v1827 = vadd.f32 %v1728, %v1826
        %v1828 = vtanh.pop %v1827
        %v1829 = vsub.f32 %v1612, %v1828
        %v1830 = vmul.f32 %v1824, %v1829
        %v1831 = vadd.f32 %v1828, %v1830
        %vm1832 = vcmp.gt.s32.totalorder %v776, 4
        %v1833 = vsel %vm1832, 1, 0
        %1834 = vset.pattern.permute.xlu0 0
        %1835 = vperm.xlu0 %1834, %v1833
        %v1836 = vpop.permute.xlu0 %1835
        %vm1837 = vcmp.eq.s32.totalorder %v1836, 1
        %v1838 = vsel %vm1837, %v1831, %v1612
        %v1839 = vld [vmem:[#allocation3 + $0xd8] sm:$0xff]
        %v1840 = vld [vmem:[#allocation3 + $0xe0] sm:$0xff]
        %v1841 = vld [vmem:[#allocation3 + $0xe8] sm:$0xff]
        %v1842 = vpack.c.bf16 %v1725, %v1725
        %1843 = vmatprep.subr.bf16.mxu0 %v862
        %1844 = vmatpush1.bf16.msra.mxu0 %v861
        %1845 = vmatprep.subr.bf16.mxu0 %v865
        %1846 = vmatpush1.bf16.msra.mxu0 %v864
        %1847 = vmatprep.subr.bf16.mxu0 %v868
        %1848 = vmatpush1.bf16.msra.mxu0 %v867
        %1849 = vmatprep.subr.bf16.mxu0 %v871
        %1850 = vmatpush1.bf16.msra.mxu0 %v870
        %1851 = vmatprep.subr.bf16.mxu0 %v874
        %1852 = vmatpush1.bf16.msra.mxu0 %v873
        %1853 = vmatprep.subr.bf16.mxu0 %v877
        %1854 = vmatpush1.bf16.msra.mxu0 %v876
        %1855 = vmatprep.subr.bf16.mxu0 %v880
        %1856 = vmatpush1.bf16.msra.mxu0 %v879
        %1857 = vmatprep.subr.bf16.mxu0 %v883
        %1858 = vmatpush1.bf16.msra.mxu0 %v882
        %1859 = vmatprep.subr.bf16.mxu0 0
        %1860 = vmatpush1.bf16.msra.mxu0 0
        %1861 = vmatprep.subr.bf16.mxu0 0
        %1862 = vmatpush1.bf16.msra.mxu0 0
        %1863 = vmatprep.subr.bf16.mxu0 0
        %1864 = vmatpush1.bf16.msra.mxu0 0
        %1865 = vmatprep.subr.bf16.mxu0 0
        %1866 = vmatpush1.bf16.msra.mxu0 0
        %1867 = vmatprep.subr.bf16.mxu0 0
        %1868 = vmatpush1.bf16.msra.mxu0 0
        %1869 = vmatprep.subr.bf16.mxu0 0
        %1870 = vmatpush1.bf16.msra.mxu0 0
        %1871 = vmatprep.subr.bf16.mxu0 0
        %1872 = vmatpush1.bf16.msra.mxu0 0
        %1873 = vmatprep.subr.bf16.mxu0 0
        %1874 = vmatpush1.bf16.msra.mxu0 0
        %1875 = vmatprep.mubr.bf16.mxu0 0
        %1876 = vmatmul.mubr.bf16.gmra.mrb[0].mxu0 %v1842
        %v1877 = vpop.f32.mrb[0].mxu0
        %v1878 = vadd.f32 0.0, %v1877
        %v1879 = vpop.f32.mrb[0].mxu0
        %v1880 = vadd.f32 0.0, %v1879
        %v1881 = vpop.f32.mrb[0].mxu0
        %v1882 = vpop.f32.mrb[0].mxu0
        %1883 = vdwg.mxu0
        %1884 = vmatprep.subr.bf16.mxu0 0
        %1885 = vmatpush1.bf16.msra.mxu0 %v863
        %1886 = vmatprep.subr.bf16.mxu0 0
        %1887 = vmatpush1.bf16.msra.mxu0 %v866
        %1888 = vmatprep.subr.bf16.mxu0 0
        %1889 = vmatpush1.bf16.msra.mxu0 %v869
        %1890 = vmatprep.subr.bf16.mxu0 0
        %1891 = vmatpush1.bf16.msra.mxu0 %v872
        %1892 = vmatprep.subr.bf16.mxu0 0
        %1893 = vmatpush1.bf16.msra.mxu0 %v875
        %1894 = vmatprep.subr.bf16.mxu0 0
        %1895 = vmatpush1.bf16.msra.mxu0 %v878
        %1896 = vmatprep.subr.bf16.mxu0 0
        %1897 = vmatpush1.bf16.msra.mxu0 %v881
        %1898 = vmatprep.subr.bf16.mxu0 0
        %1899 = vmatpush1.bf16.msra.mxu0 %v884
        %1900 = vmatprep.subr.bf16.mxu0 0
        %1901 = vmatpush1.bf16.msra.mxu0 0
        %1902 = vmatprep.subr.bf16.mxu0 0
        %1903 = vmatpush1.bf16.msra.mxu0 0
        %1904 = vmatprep.subr.bf16.mxu0 0
        %1905 = vmatpush1.bf16.msra.mxu0 0
        %1906 = vmatprep.subr.bf16.mxu0 0
        %1907 = vmatpush1.bf16.msra.mxu0 0
        %1908 = vmatprep.subr.bf16.mxu0 0
        %1909 = vmatpush1.bf16.msra.mxu0 0
        %1910 = vmatprep.subr.bf16.mxu0 0
        %1911 = vmatpush1.bf16.msra.mxu0 0
        %1912 = vmatprep.subr.bf16.mxu0 0
        %1913 = vmatpush1.bf16.msra.mxu0 0
        %1914 = vmatprep.subr.bf16.mxu0 0
        %1915 = vmatpush1.bf16.msra.mxu0 0
        %1916 = vmatprep.mubr.bf16.mxu0 0
        %1917 = vmatmul.mubr.bf16.gmra.mrb[0].mxu0 %v1842
        %v1918 = vpop.f32.mrb[0].mxu0
        %v1919 = vadd.f32 0.0, %v1918
        %v1920 = vpop.f32.mrb[0].mxu0
        %v1921 = vpop.f32.mrb[0].mxu0
        %v1922 = vpop.f32.mrb[0].mxu0
        %1923 = vdwg.mxu0
        %v1924 = vadd.f32 %v1839, %v1878
        %v1925 = vxor.u32 %v1924, 2147483648
        %v1926 = vmul.f32 %v1925, 1.442695
        %v1927 = vpow.pop %v1926
        %v1928 = vadd.f32 %v1927, 1.0
        %v1929 = vrcp.pop %v1928
        %v1930 = vmul.f32 1.0, %v1929
        %v1931 = vadd.f32 %v1840, %v1880
        %v1932 = vxor.u32 %v1931, 2147483648
        %v1933 = vmul.f32 %v1932, 1.442695
        %v1934 = vpow.pop %v1933
        %v1935 = vadd.f32 %v1934, 1.0
        %v1936 = vrcp.pop %v1935
        %v1937 = vmul.f32 1.0, %v1936
        %v1938 = vadd.f32 %v1919, %v774
        %v1939 = vmul.f32 %v1930, %v1938
        %v1940 = vadd.f32 %v1841, %v1939
        %v1941 = vtanh.pop %v1940
        %v1942 = vsub.f32 %v1725, %v1941
        %v1943 = vmul.f32 %v1937, %v1942
        %v1944 = vadd.f32 %v1941, %v1943
        %vm1945 = vcmp.gt.s32.totalorder %v777, 4
        %v1946 = vsel %vm1945, 1, 0
        %1947 = vset.pattern.permute.xlu0 0
        %1948 = vperm.xlu0 %1947, %v1946
        %v1949 = vpop.permute.xlu0 %1948
        %vm1950 = vcmp.eq.s32.totalorder %v1949, 1
        %v1951 = vsel %vm1950, %v1944, %v1725
        %v1952 = vld [vmem:[#allocation3 + $0xf0] sm:$0xff]
        %v1953 = vld [vmem:[#allocation3 + $0xf8] sm:$0xff]
        %v1954 = vld [vmem:[#allocation3 + $0x100] sm:$0xff]
        %v1955 = vpack.c.bf16 %v1838, %v1838
        %1956 = vmatprep.subr.bf16.mxu0 %v862
        %1957 = vmatpush1.bf16.msra.mxu0 %v861
        %1958 = vmatprep.subr.bf16.mxu0 %v865
        %1959 = vmatpush1.bf16.msra.mxu0 %v864
        %1960 = vmatprep.subr.bf16.mxu0 %v868
        %1961 = vmatpush1.bf16.msra.mxu0 %v867
        %1962 = vmatprep.subr.bf16.mxu0 %v871
        %1963 = vmatpush1.bf16.msra.mxu0 %v870
        %1964 = vmatprep.subr.bf16.mxu0 %v874
        %1965 = vmatpush1.bf16.msra.mxu0 %v873
        %1966 = vmatprep.subr.bf16.mxu0 %v877
        %1967 = vmatpush1.bf16.msra.mxu0 %v876
        %1968 = vmatprep.subr.bf16.mxu0 %v880
        %1969 = vmatpush1.bf16.msra.mxu0 %v879
        %1970 = vmatprep.subr.bf16.mxu0 %v883
        %1971 = vmatpush1.bf16.msra.mxu0 %v882
        %1972 = vmatprep.subr.bf16.mxu0 0
        %1973 = vmatpush1.bf16.msra.mxu0 0
        %1974 = vmatprep.subr.bf16.mxu0 0
        %1975 = vmatpush1.bf16.msra.mxu0 0
        %1976 = vmatprep.subr.bf16.mxu0 0
        %1977 = vmatpush1.bf16.msra.mxu0 0
        %1978 = vmatprep.subr.bf16.mxu0 0
        %1979 = vmatpush1.bf16.msra.mxu0 0
        %1980 = vmatprep.subr.bf16.mxu0 0
        %1981 = vmatpush1.bf16.msra.mxu0 0
        %1982 = vmatprep.subr.bf16.mxu0 0
        %1983 = vmatpush1.bf16.msra.mxu0 0
        %1984 = vmatprep.subr.bf16.mxu0 0
        %1985 = vmatpush1.bf16.msra.mxu0 0
        %1986 = vmatprep.subr.bf16.mxu0 0
        %1987 = vmatpush1.bf16.msra.mxu0 0
        %1988 = vmatprep.mubr.bf16.mxu0 0
        %1989 = vmatmul.mubr.bf16.gmra.mrb[0].mxu0 %v1955
        %v1990 = vpop.f32.mrb[0].mxu0
        %v1991 = vadd.f32 0.0, %v1990
        %v1992 = vpop.f32.mrb[0].mxu0
        %v1993 = vadd.f32 0.0, %v1992
        %v1994 = vpop.f32.mrb[0].mxu0
        %v1995 = vpop.f32.mrb[0].mxu0
        %1996 = vdwg.mxu0
        %1997 = vmatprep.subr.bf16.mxu0 0
        %1998 = vmatpush1.bf16.msra.mxu0 %v863
        %1999 = vmatprep.subr.bf16.mxu0 0
        %2000 = vmatpush1.bf16.msra.mxu0 %v866
        %2001 = vmatprep.subr.bf16.mxu0 0
        %2002 = vmatpush1.bf16.msra.mxu0 %v869
        %2003 = vmatprep.subr.bf16.mxu0 0
        %2004 = vmatpush1.bf16.msra.mxu0 %v872
        %2005 = vmatprep.subr.bf16.mxu0 0
        %2006 = vmatpush1.bf16.msra.mxu0 %v875
        %2007 = vmatprep.subr.bf16.mxu0 0
        %2008 = vmatpush1.bf16.msra.mxu0 %v878
        %2009 = vmatprep.subr.bf16.mxu0 0
        %2010 = vmatpush1.bf16.msra.mxu0 %v881
        %2011 = vmatprep.subr.bf16.mxu0 0
        %2012 = vmatpush1.bf16.msra.mxu0 %v884
        %2013 = vmatprep.subr.bf16.mxu0 0
        %2014 = vmatpush1.bf16.msra.mxu0 0
        %2015 = vmatprep.subr.bf16.mxu0 0
        %2016 = vmatpush1.bf16.msra.mxu0 0
        %2017 = vmatprep.subr.bf16.mxu0 0
        %2018 = vmatpush1.bf16.msra.mxu0 0
        %2019 = vmatprep.subr.bf16.mxu0 0
        %2020 = vmatpush1.bf16.msra.mxu0 0
        %2021 = vmatprep.subr.bf16.mxu0 0
        %2022 = vmatpush1.bf16.msra.mxu0 0
        %2023 = vmatprep.subr.bf16.mxu0 0
        %2024 = vmatpush1.bf16.msra.mxu0 0
        %2025 = vmatprep.subr.bf16.mxu0 0
        %2026 = vmatpush1.bf16.msra.mxu0 0
        %2027 = vmatprep.subr.bf16.mxu0 0
        %2028 = vmatpush1.bf16.msra.mxu0 0
        %2029 = vmatprep.mubr.bf16.mxu0 0
        %2030 = vmatmul.mubr.bf16.gmra.mrb[0].mxu0 %v1955
        %v2031 = vpop.f32.mrb[0].mxu0
        %v2032 = vadd.f32 0.0, %v2031
        %v2033 = vpop.f32.mrb[0].mxu0
        %v2034 = vpop.f32.mrb[0].mxu0
        %v2035 = vpop.f32.mrb[0].mxu0
        %2036 = vdwg.mxu0
        %v2037 = vadd.f32 %v1952, %v1991
        %v2038 = vxor.u32 %v2037, 2147483648
        %v2039 = vmul.f32 %v2038, 1.442695
        %v2040 = vpow.pop %v2039
        %v2041 = vadd.f32 %v2040, 1.0
        %v2042 = vrcp.pop %v2041
        %v2043 = vmul.f32 1.0, %v2042
        %v2044 = vadd.f32 %v1953, %v1993
        %v2045 = vxor.u32 %v2044, 2147483648
        %v2046 = vmul.f32 %v2045, 1.442695
        %v2047 = vpow.pop %v2046
        %v2048 = vadd.f32 %v2047, 1.0
        %v2049 = vrcp.pop %v2048
        %v2050 = vmul.f32 1.0, %v2049
        %v2051 = vadd.f32 %v2032, %v774
        %v2052 = vmul.f32 %v2043, %v2051
        %v2053 = vadd.f32 %v1954, %v2052
        %v2054 = vtanh.pop %v2053
        %v2055 = vsub.f32 %v1838, %v2054
        %v2056 = vmul.f32 %v2050, %v2055
        %v2057 = vadd.f32 %v2054, %v2056
        %vm2058 = vcmp.gt.s32.totalorder %v776, 5
        %v2059 = vsel %vm2058, 1, 0
        %2060 = vset.pattern.permute.xlu0 0
        %2061 = vperm.xlu0 %2060, %v2059
        %v2062 = vpop.permute.xlu0 %2061
        %vm2063 = vcmp.eq.s32.totalorder %v2062, 1
        %v2064 = vsel %vm2063, %v2057, %v1838
        %v2065 = vld [vmem:[#allocation3 + $0x108] sm:$0xff]
        %v2066 = vld [vmem:[#allocation3 + $0x110] sm:$0xff]
        %v2067 = vld [vmem:[#allocation3 + $0x118] sm:$0xff]
        %v2068 = vpack.c.bf16 %v1951, %v1951
        %2069 = vmatprep.subr.bf16.mxu0 %v862
        %2070 = vmatpush1.bf16.msra.mxu0 %v861
        %2071 = vmatprep.subr.bf16.mxu0 %v865
        %2072 = vmatpush1.bf16.msra.mxu0 %v864
        %2073 = vmatprep.subr.bf16.mxu0 %v868
        %2074 = vmatpush1.bf16.msra.mxu0 %v867
        %2075 = vmatprep.subr.bf16.mxu0 %v871
        %2076 = vmatpush1.bf16.msra.mxu0 %v870
        %2077 = vmatprep.subr.bf16.mxu0 %v874
        %2078 = vmatpush1.bf16.msra.mxu0 %v873
        %2079 = vmatprep.subr.bf16.mxu0 %v877
        %2080 = vmatpush1.bf16.msra.mxu0 %v876
        %2081 = vmatprep.subr.bf16.mxu0 %v880
        %2082 = vmatpush1.bf16.msra.mxu0 %v879
        %2083 = vmatprep.subr.bf16.mxu0 %v883
        %2084 = vmatpush1.bf16.msra.mxu0 %v882
        %2085 = vmatprep.subr.bf16.mxu0 0
        %2086 = vmatpush1.bf16.msra.mxu0 0
        %2087 = vmatprep.subr.bf16.mxu0 0
        %2088 = vmatpush1.bf16.msra.mxu0 0
        %2089 = vmatprep.subr.bf16.mxu0 0
        %2090 = vmatpush1.bf16.msra.mxu0 0
        %2091 = vmatprep.subr.bf16.mxu0 0
        %2092 = vmatpush1.bf16.msra.mxu0 0
        %2093 = vmatprep.subr.bf16.mxu0 0
        %2094 = vmatpush1.bf16.msra.mxu0 0
        %2095 = vmatprep.subr.bf16.mxu0 0
        %2096 = vmatpush1.bf16.msra.mxu0 0
        %2097 = vmatprep.subr.bf16.mxu0 0
        %2098 = vmatpush1.bf16.msra.mxu0 0
        %2099 = vmatprep.subr.bf16.mxu0 0
        %2100 = vmatpush1.bf16.msra.mxu0 0
        %2101 = vmatprep.mubr.bf16.mxu0 0
        %2102 = vmatmul.mubr.bf16.gmra.mrb[0].mxu0 %v2068
        %v2103 = vpop.f32.mrb[0].mxu0
        %v2104 = vadd.f32 0.0, %v2103
        %v2105 = vpop.f32.mrb[0].mxu0
        %v2106 = vadd.f32 0.0, %v2105
        %v2107 = vpop.f32.mrb[0].mxu0
        %v2108 = vpop.f32.mrb[0].mxu0
        %2109 = vdwg.mxu0
        %2110 = vmatprep.subr.bf16.mxu0 0
        %2111 = vmatpush1.bf16.msra.mxu0 %v863
        %2112 = vmatprep.subr.bf16.mxu0 0
        %2113 = vmatpush1.bf16.msra.mxu0 %v866
        %2114 = vmatprep.subr.bf16.mxu0 0
        %2115 = vmatpush1.bf16.msra.mxu0 %v869
        %2116 = vmatprep.subr.bf16.mxu0 0
        %2117 = vmatpush1.bf16.msra.mxu0 %v872
        %2118 = vmatprep.subr.bf16.mxu0 0
        %2119 = vmatpush1.bf16.msra.mxu0 %v875
        %2120 = vmatprep.subr.bf16.mxu0 0
        %2121 = vmatpush1.bf16.msra.mxu0 %v878
        %2122 = vmatprep.subr.bf16.mxu0 0
        %2123 = vmatpush1.bf16.msra.mxu0 %v881
        %2124 = vmatprep.subr.bf16.mxu0 0
        %2125 = vmatpush1.bf16.msra.mxu0 %v884
        %2126 = vmatprep.subr.bf16.mxu0 0
        %2127 = vmatpush1.bf16.msra.mxu0 0
        %2128 = vmatprep.subr.bf16.mxu0 0
        %2129 = vmatpush1.bf16.msra.mxu0 0
        %2130 = vmatprep.subr.bf16.mxu0 0
        %2131 = vmatpush1.bf16.msra.mxu0 0
        %2132 = vmatprep.subr.bf16.mxu0 0
        %2133 = vmatpush1.bf16.msra.mxu0 0
        %2134 = vmatprep.subr.bf16.mxu0 0
        %2135 = vmatpush1.bf16.msra.mxu0 0
        %2136 = vmatprep.subr.bf16.mxu0 0
        %2137 = vmatpush1.bf16.msra.mxu0 0
        %2138 = vmatprep.subr.bf16.mxu0 0
        %2139 = vmatpush1.bf16.msra.mxu0 0
        %2140 = vmatprep.subr.bf16.mxu0 0
        %2141 = vmatpush1.bf16.msra.mxu0 0
        %2142 = vmatprep.mubr.bf16.mxu0 0
        %2143 = vmatmul.mubr.bf16.gmra.mrb[0].mxu0 %v2068
        %v2144 = vpop.f32.mrb[0].mxu0
        %v2145 = vadd.f32 0.0, %v2144
        %v2146 = vpop.f32.mrb[0].mxu0
        %v2147 = vpop.f32.mrb[0].mxu0
        %v2148 = vpop.f32.mrb[0].mxu0
        %2149 = vdwg.mxu0
        %v2150 = vadd.f32 %v2065, %v2104
        %v2151 = vxor.u32 %v2150, 2147483648
        %v2152 = vmul.f32 %v2151, 1.442695
        %v2153 = vpow.pop %v2152
        %v2154 = vadd.f32 %v2153, 1.0
        %v2155 = vrcp.pop %v2154
        %v2156 = vmul.f32 1.0, %v2155
        %v2157 = vadd.f32 %v2066, %v2106
        %v2158 = vxor.u32 %v2157, 2147483648
        %v2159 = vmul.f32 %v2158, 1.442695
        %v2160 = vpow.pop %v2159
        %v2161 = vadd.f32 %v2160, 1.0
        %v2162 = vrcp.pop %v2161
        %v2163 = vmul.f32 1.0, %v2162
        %v2164 = vadd.f32 %v2145, %v774
        %v2165 = vmul.f32 %v2156, %v2164
        %v2166 = vadd.f32 %v2067, %v2165
        %v2167 = vtanh.pop %v2166
        %v2168 = vsub.f32 %v1951, %v2167
        %v2169 = vmul.f32 %v2163, %v2168
        %v2170 = vadd.f32 %v2167, %v2169
        %vm2171 = vcmp.gt.s32.totalorder %v777, 5
        %v2172 = vsel %vm2171, 1, 0
        %2173 = vset.pattern.permute.xlu0 0
        %2174 = vperm.xlu0 %2173, %v2172
        %v2175 = vpop.permute.xlu0 %2174
        %vm2176 = vcmp.eq.s32.totalorder %v2175, 1
        %v2177 = vsel %vm2176, %v2170, %v1951
        %v2178 = vld [vmem:[#allocation3 + $0x120] sm:$0xff]
        %v2179 = vld [vmem:[#allocation3 + $0x128] sm:$0xff]
        %v2180 = vld [vmem:[#allocation3 + $0x130] sm:$0xff]
        %v2181 = vpack.c.bf16 %v2064, %v2064
        %2182 = vmatprep.subr.bf16.mxu0 %v862
        %2183 = vmatpush1.bf16.msra.mxu0 %v861
        %2184 = vmatprep.subr.bf16.mxu0 %v865
        %2185 = vmatpush1.bf16.msra.mxu0 %v864
        %2186 = vmatprep.subr.bf16.mxu0 %v868
        %2187 = vmatpush1.bf16.msra.mxu0 %v867
        %2188 = vmatprep.subr.bf16.mxu0 %v871
        %2189 = vmatpush1.bf16.msra.mxu0 %v870
        %2190 = vmatprep.subr.bf16.mxu0 %v874
        %2191 = vmatpush1.bf16.msra.mxu0 %v873
        %2192 = vmatprep.subr.bf16.mxu0 %v877
        %2193 = vmatpush1.bf16.msra.mxu0 %v876
        %2194 = vmatprep.subr.bf16.mxu0 %v880
        %2195 = vmatpush1.bf16.msra.mxu0 %v879
        %2196 = vmatprep.subr.bf16.mxu0 %v883
        %2197 = vmatpush1.bf16.msra.mxu0 %v882
        %2198 = vmatprep.subr.bf16.mxu0 0
        %2199 = vmatpush1.bf16.msra.mxu0 0
        %2200 = vmatprep.subr.bf16.mxu0 0
        %2201 = vmatpush1.bf16.msra.mxu0 0
        %2202 = vmatprep.subr.bf16.mxu0 0
        %2203 = vmatpush1.bf16.msra.mxu0 0
        %2204 = vmatprep.subr.bf16.mxu0 0
        %2205 = vmatpush1.bf16.msra.mxu0 0
        %2206 = vmatprep.subr.bf16.mxu0 0
        %2207 = vmatpush1.bf16.msra.mxu0 0
        %2208 = vmatprep.subr.bf16.mxu0 0
        %2209 = vmatpush1.bf16.msra.mxu0 0
        %2210 = vmatprep.subr.bf16.mxu0 0
        %2211 = vmatpush1.bf16.msra.mxu0 0
        %2212 = vmatprep.subr.bf16.mxu0 0
        %2213 = vmatpush1.bf16.msra.mxu0 0
        %2214 = vmatprep.mubr.bf16.mxu0 0
        %2215 = vmatmul.mubr.bf16.gmra.mrb[0].mxu0 %v2181
        %v2216 = vpop.f32.mrb[0].mxu0
        %v2217 = vadd.f32 0.0, %v2216
        %v2218 = vpop.f32.mrb[0].mxu0
        %v2219 = vadd.f32 0.0, %v2218
        %v2220 = vpop.f32.mrb[0].mxu0
        %v2221 = vpop.f32.mrb[0].mxu0
        %2222 = vdwg.mxu0
        %2223 = vmatprep.subr.bf16.mxu0 0
        %2224 = vmatpush1.bf16.msra.mxu0 %v863
        %2225 = vmatprep.subr.bf16.mxu0 0
        %2226 = vmatpush1.bf16.msra.mxu0 %v866
        %2227 = vmatprep.subr.bf16.mxu0 0
        %2228 = vmatpush1.bf16.msra.mxu0 %v869
        %2229 = vmatprep.subr.bf16.mxu0 0
        %2230 = vmatpush1.bf16.msra.mxu0 %v872
        %2231 = vmatprep.subr.bf16.mxu0 0
        %2232 = vmatpush1.bf16.msra.mxu0 %v875
        %2233 = vmatprep.subr.bf16.mxu0 0
        %2234 = vmatpush1.bf16.msra.mxu0 %v878
        %2235 = vmatprep.subr.bf16.mxu0 0
        %2236 = vmatpush1.bf16.msra.mxu0 %v881
        %2237 = vmatprep.subr.bf16.mxu0 0
        %2238 = vmatpush1.bf16.msra.mxu0 %v884
        %2239 = vmatprep.subr.bf16.mxu0 0
        %2240 = vmatpush1.bf16.msra.mxu0 0
        %2241 = vmatprep.subr.bf16.mxu0 0
        %2242 = vmatpush1.bf16.msra.mxu0 0
        %2243 = vmatprep.subr.bf16.mxu0 0
        %2244 = vmatpush1.bf16.msra.mxu0 0
        %2245 = vmatprep.subr.bf16.mxu0 0
        %2246 = vmatpush1.bf16.msra.mxu0 0
        %2247 = vmatprep.subr.bf16.mxu0 0
        %2248 = vmatpush1.bf16.msra.mxu0 0
        %2249 = vmatprep.subr.bf16.mxu0 0
        %2250 = vmatpush1.bf16.msra.mxu0 0
        %2251 = vmatprep.subr.bf16.mxu0 0
        %2252 = vmatpush1.bf16.msra.mxu0 0
        %2253 = vmatprep.subr.bf16.mxu0 0
        %2254 = vmatpush1.bf16.msra.mxu0 0
        %2255 = vmatprep.mubr.bf16.mxu0 0
        %2256 = vmatmul.mubr.bf16.gmra.mrb[0].mxu0 %v2181
        %v2257 = vpop.f32.mrb[0].mxu0
        %v2258 = vadd.f32 0.0, %v2257
        %v2259 = vpop.f32.mrb[0].mxu0
        %v2260 = vpop.f32.mrb[0].mxu0
        %v2261 = vpop.f32.mrb[0].mxu0
        %2262 = vdwg.mxu0
        %v2263 = vadd.f32 %v2178, %v2217
        %v2264 = vxor.u32 %v2263, 2147483648
        %v2265 = vmul.f32 %v2264, 1.442695
        %v2266 = vpow.pop %v2265
        %v2267 = vadd.f32 %v2266, 1.0
        %v2268 = vrcp.pop %v2267
        %v2269 = vmul.f32 1.0, %v2268
        %v2270 = vadd.f32 %v2179, %v2219
        %v2271 = vxor.u32 %v2270, 2147483648
        %v2272 = vmul.f32 %v2271, 1.442695
        %v2273 = vpow.pop %v2272
        %v2274 = vadd.f32 %v2273, 1.0
        %v2275 = vrcp.pop %v2274
        %v2276 = vmul.f32 1.0, %v2275
        %v2277 = vadd.f32 %v2258, %v774
        %v2278 = vmul.f32 %v2269, %v2277
        %v2279 = vadd.f32 %v2180, %v2278
        %v2280 = vtanh.pop %v2279
        %v2281 = vsub.f32 %v2064, %v2280
        %v2282 = vmul.f32 %v2276, %v2281
        %v2283 = vadd.f32 %v2280, %v2282
        %vm2284 = vcmp.gt.s32.totalorder %v776, 6
        %v2285 = vsel %vm2284, 1, 0
        %2286 = vset.pattern.permute.xlu0 0
        %2287 = vperm.xlu0 %2286, %v2285
        %v2288 = vpop.permute.xlu0 %2287
        %vm2289 = vcmp.eq.s32.totalorder %v2288, 1
        %v2290 = vsel %vm2289, %v2283, %v2064
        %v2291 = vld [vmem:[#allocation3 + $0x138] sm:$0xff]
        %v2292 = vld [vmem:[#allocation3 + $0x140] sm:$0xff]
        %v2293 = vld [vmem:[#allocation3 + $0x148] sm:$0xff]
        %v2294 = vpack.c.bf16 %v2177, %v2177
        %2295 = vmatprep.subr.bf16.mxu0 %v862
        %2296 = vmatpush1.bf16.msra.mxu0 %v861
        %2297 = vmatprep.subr.bf16.mxu0 %v865
        %2298 = vmatpush1.bf16.msra.mxu0 %v864
        %2299 = vmatprep.subr.bf16.mxu0 %v868
        %2300 = vmatpush1.bf16.msra.mxu0 %v867
        %2301 = vmatprep.subr.bf16.mxu0 %v871
        %2302 = vmatpush1.bf16.msra.mxu0 %v870
        %2303 = vmatprep.subr.bf16.mxu0 %v874
        %2304 = vmatpush1.bf16.msra.mxu0 %v873
        %2305 = vmatprep.subr.bf16.mxu0 %v877
        %2306 = vmatpush1.bf16.msra.mxu0 %v876
        %2307 = vmatprep.subr.bf16.mxu0 %v880
        %2308 = vmatpush1.bf16.msra.mxu0 %v879
        %2309 = vmatprep.subr.bf16.mxu0 %v883
        %2310 = vmatpush1.bf16.msra.mxu0 %v882
        %2311 = vmatprep.subr.bf16.mxu0 0
        %2312 = vmatpush1.bf16.msra.mxu0 0
        %2313 = vmatprep.subr.bf16.mxu0 0
        %2314 = vmatpush1.bf16.msra.mxu0 0
        %2315 = vmatprep.subr.bf16.mxu0 0
        %2316 = vmatpush1.bf16.msra.mxu0 0
        %2317 = vmatprep.subr.bf16.mxu0 0
        %2318 = vmatpush1.bf16.msra.mxu0 0
        %2319 = vmatprep.subr.bf16.mxu0 0
        %2320 = vmatpush1.bf16.msra.mxu0 0
        %2321 = vmatprep.subr.bf16.mxu0 0
        %2322 = vmatpush1.bf16.msra.mxu0 0
        %2323 = vmatprep.subr.bf16.mxu0 0
        %2324 = vmatpush1.bf16.msra.mxu0 0
        %2325 = vmatprep.subr.bf16.mxu0 0
        %2326 = vmatpush1.bf16.msra.mxu0 0
        %2327 = vmatprep.mubr.bf16.mxu0 0
        %2328 = vmatmul.mubr.bf16.gmra.mrb[0].mxu0 %v2294
        %v2329 = vpop.f32.mrb[0].mxu0
        %v2330 = vadd.f32 0.0, %v2329
        %v2331 = vpop.f32.mrb[0].mxu0
        %v2332 = vadd.f32 0.0, %v2331
        %v2333 = vpop.f32.mrb[0].mxu0
        %v2334 = vpop.f32.mrb[0].mxu0
        %2335 = vdwg.mxu0
        %2336 = vmatprep.subr.bf16.mxu0 0
        %2337 = vmatpush1.bf16.msra.mxu0 %v863
        %2338 = vmatprep.subr.bf16.mxu0 0
        %2339 = vmatpush1.bf16.msra.mxu0 %v866
        %2340 = vmatprep.subr.bf16.mxu0 0
        %2341 = vmatpush1.bf16.msra.mxu0 %v869
        %2342 = vmatprep.subr.bf16.mxu0 0
        %2343 = vmatpush1.bf16.msra.mxu0 %v872
        %2344 = vmatprep.subr.bf16.mxu0 0
        %2345 = vmatpush1.bf16.msra.mxu0 %v875
        %2346 = vmatprep.subr.bf16.mxu0 0
        %2347 = vmatpush1.bf16.msra.mxu0 %v878
        %2348 = vmatprep.subr.bf16.mxu0 0
        %2349 = vmatpush1.bf16.msra.mxu0 %v881
        %2350 = vmatprep.subr.bf16.mxu0 0
        %2351 = vmatpush1.bf16.msra.mxu0 %v884
        %2352 = vmatprep.subr.bf16.mxu0 0
        %2353 = vmatpush1.bf16.msra.mxu0 0
        %2354 = vmatprep.subr.bf16.mxu0 0
        %2355 = vmatpush1.bf16.msra.mxu0 0
        %2356 = vmatprep.subr.bf16.mxu0 0
        %2357 = vmatpush1.bf16.msra.mxu0 0
        %2358 = vmatprep.subr.bf16.mxu0 0
        %2359 = vmatpush1.bf16.msra.mxu0 0
        %2360 = vmatprep.subr.bf16.mxu0 0
        %2361 = vmatpush1.bf16.msra.mxu0 0
        %2362 = vmatprep.subr.bf16.mxu0 0
        %2363 = vmatpush1.bf16.msra.mxu0 0
        %2364 = vmatprep.subr.bf16.mxu0 0
        %2365 = vmatpush1.bf16.msra.mxu0 0
        %2366 = vmatprep.subr.bf16.mxu0 0
        %2367 = vmatpush1.bf16.msra.mxu0 0
        %2368 = vmatprep.mubr.bf16.mxu0 0
        %2369 = vmatmul.mubr.bf16.gmra.mrb[0].mxu0 %v2294
        %v2370 = vpop.f32.mrb[0].mxu0
        %v2371 = vadd.f32 0.0, %v2370
        %v2372 = vpop.f32.mrb[0].mxu0
        %v2373 = vpop.f32.mrb[0].mxu0
        %v2374 = vpop.f32.mrb[0].mxu0
        %2375 = vdwg.mxu0
        %v2376 = vadd.f32 %v2291, %v2330
        %v2377 = vxor.u32 %v2376, 2147483648
        %v2378 = vmul.f32 %v2377, 1.442695
        %v2379 = vpow.pop %v2378
        %v2380 = vadd.f32 %v2379, 1.0
        %v2381 = vrcp.pop %v2380
        %v2382 = vmul.f32 1.0, %v2381
        %v2383 = vadd.f32 %v2292, %v2332
        %v2384 = vxor.u32 %v2383, 2147483648
        %v2385 = vmul.f32 %v2384, 1.442695
        %v2386 = vpow.pop %v2385
        %v2387 = vadd.f32 %v2386, 1.0
        %v2388 = vrcp.pop %v2387
        %v2389 = vmul.f32 1.0, %v2388
        %v2390 = vadd.f32 %v2371, %v774
        %v2391 = vmul.f32 %v2382, %v2390
        %v2392 = vadd.f32 %v2293, %v2391
        %v2393 = vtanh.pop %v2392
        %v2394 = vsub.f32 %v2177, %v2393
        %v2395 = vmul.f32 %v2389, %v2394
        %v2396 = vadd.f32 %v2393, %v2395
        %vm2397 = vcmp.gt.s32.totalorder %v777, 6
        %v2398 = vsel %vm2397, 1, 0
        %2399 = vset.pattern.permute.xlu0 0
        %2400 = vperm.xlu0 %2399, %v2398
        %v2401 = vpop.permute.xlu0 %2400
        %vm2402 = vcmp.eq.s32.totalorder %v2401, 1
        %v2403 = vsel %vm2402, %v2396, %v2177
        %v2404 = vld [vmem:[#allocation3 + $0x150] sm:$0xff]
        %v2405 = vld [vmem:[#allocation3 + $0x158] sm:$0xff]
        %v2406 = vld [vmem:[#allocation3 + $0x160] sm:$0xff]
        %v2407 = vpack.c.bf16 %v2290, %v2290
        %2408 = vmatprep.subr.bf16.mxu0 %v862
        %2409 = vmatpush1.bf16.msra.mxu0 %v861
        %2410 = vmatprep.subr.bf16.mxu0 %v865
        %2411 = vmatpush1.bf16.msra.mxu0 %v864
        %2412 = vmatprep.subr.bf16.mxu0 %v868
        %2413 = vmatpush1.bf16.msra.mxu0 %v867
        %2414 = vmatprep.subr.bf16.mxu0 %v871
        %2415 = vmatpush1.bf16.msra.mxu0 %v870
        %2416 = vmatprep.subr.bf16.mxu0 %v874
        %2417 = vmatpush1.bf16.msra.mxu0 %v873
        %2418 = vmatprep.subr.bf16.mxu0 %v877
        %2419 = vmatpush1.bf16.msra.mxu0 %v876
        %2420 = vmatprep.subr.bf16.mxu0 %v880
        %2421 = vmatpush1.bf16.msra.mxu0 %v879
        %2422 = vmatprep.subr.bf16.mxu0 %v883
        %2423 = vmatpush1.bf16.msra.mxu0 %v882
        %2424 = vmatprep.subr.bf16.mxu0 0
        %2425 = vmatpush1.bf16.msra.mxu0 0
        %2426 = vmatprep.subr.bf16.mxu0 0
        %2427 = vmatpush1.bf16.msra.mxu0 0
        %2428 = vmatprep.subr.bf16.mxu0 0
        %2429 = vmatpush1.bf16.msra.mxu0 0
        %2430 = vmatprep.subr.bf16.mxu0 0
        %2431 = vmatpush1.bf16.msra.mxu0 0
        %2432 = vmatprep.subr.bf16.mxu0 0
        %2433 = vmatpush1.bf16.msra.mxu0 0
        %2434 = vmatprep.subr.bf16.mxu0 0
        %2435 = vmatpush1.bf16.msra.mxu0 0
        %2436 = vmatprep.subr.bf16.mxu0 0
        %2437 = vmatpush1.bf16.msra.mxu0 0
        %2438 = vmatprep.subr.bf16.mxu0 0
        %2439 = vmatpush1.bf16.msra.mxu0 0
        %2440 = vmatprep.mubr.bf16.mxu0 0
        %2441 = vmatmul.mubr.bf16.gmra.mrb[0].mxu0 %v2407
        %v2442 = vpop.f32.mrb[0].mxu0
        %v2443 = vadd.f32 0.0, %v2442
        %v2444 = vpop.f32.mrb[0].mxu0
        %v2445 = vadd.f32 0.0, %v2444
        %v2446 = vpop.f32.mrb[0].mxu0
        %v2447 = vpop.f32.mrb[0].mxu0
        %2448 = vdwg.mxu0
        %2449 = vmatprep.subr.bf16.mxu0 0
        %2450 = vmatpush1.bf16.msra.mxu0 %v863
        %2451 = vmatprep.subr.bf16.mxu0 0
        %2452 = vmatpush1.bf16.msra.mxu0 %v866
        %2453 = vmatprep.subr.bf16.mxu0 0
        %2454 = vmatpush1.bf16.msra.mxu0 %v869
        %2455 = vmatprep.subr.bf16.mxu0 0
        %2456 = vmatpush1.bf16.msra.mxu0 %v872
        %2457 = vmatprep.subr.bf16.mxu0 0
        %2458 = vmatpush1.bf16.msra.mxu0 %v875
        %2459 = vmatprep.subr.bf16.mxu0 0
        %2460 = vmatpush1.bf16.msra.mxu0 %v878
        %2461 = vmatprep.subr.bf16.mxu0 0
        %2462 = vmatpush1.bf16.msra.mxu0 %v881
        %2463 = vmatprep.subr.bf16.mxu0 0
        %2464 = vmatpush1.bf16.msra.mxu0 %v884
        %2465 = vmatprep.subr.bf16.mxu0 0
        %2466 = vmatpush1.bf16.msra.mxu0 0
        %2467 = vmatprep.subr.bf16.mxu0 0
        %2468 = vmatpush1.bf16.msra.mxu0 0
        %2469 = vmatprep.subr.bf16.mxu0 0
        %2470 = vmatpush1.bf16.msra.mxu0 0
        %2471 = vmatprep.subr.bf16.mxu0 0
        %2472 = vmatpush1.bf16.msra.mxu0 0
        %2473 = vmatprep.subr.bf16.mxu0 0
        %2474 = vmatpush1.bf16.msra.mxu0 0
        %2475 = vmatprep.subr.bf16.mxu0 0
        %2476 = vmatpush1.bf16.msra.mxu0 0
        %2477 = vmatprep.subr.bf16.mxu0 0
        %2478 = vmatpush1.bf16.msra.mxu0 0
        %2479 = vmatprep.subr.bf16.mxu0 0
        %2480 = vmatpush1.bf16.msra.mxu0 0
        %2481 = vmatprep.mubr.bf16.mxu0 0
        %2482 = vmatmul.mubr.bf16.gmra.mrb[0].mxu0 %v2407
        %v2483 = vpop.f32.mrb[0].mxu0
        %v2484 = vadd.f32 0.0, %v2483
        %v2485 = vpop.f32.mrb[0].mxu0
        %v2486 = vpop.f32.mrb[0].mxu0
        %v2487 = vpop.f32.mrb[0].mxu0
        %2488 = vdwg.mxu0
        %v2489 = vadd.f32 %v2404, %v2443
        %v2490 = vxor.u32 %v2489, 2147483648
        %v2491 = vmul.f32 %v2490, 1.442695
        %v2492 = vpow.pop %v2491
        %v2493 = vadd.f32 %v2492, 1.0
        %v2494 = vrcp.pop %v2493
        %v2495 = vmul.f32 1.0, %v2494
        %v2496 = vadd.f32 %v2405, %v2445
        %v2497 = vxor.u32 %v2496, 2147483648
        %v2498 = vmul.f32 %v2497, 1.442695
        %v2499 = vpow.pop %v2498
        %v2500 = vadd.f32 %v2499, 1.0
        %v2501 = vrcp.pop %v2500
        %v2502 = vmul.f32 1.0, %v2501
        %v2503 = vadd.f32 %v2484, %v774
        %v2504 = vmul.f32 %v2495, %v2503
        %v2505 = vadd.f32 %v2406, %v2504
        %v2506 = vtanh.pop %v2505
        %v2507 = vsub.f32 %v2290, %v2506
        %v2508 = vmul.f32 %v2502, %v2507
        %v2509 = vadd.f32 %v2506, %v2508
        %vm2510 = vcmp.gt.s32.totalorder %v776, 7
        %v2511 = vsel %vm2510, 1, 0
        %2512 = vset.pattern.permute.xlu0 0
        %2513 = vperm.xlu0 %2512, %v2511
        %v2514 = vpop.permute.xlu0 %2513
        %vm2515 = vcmp.eq.s32.totalorder %v2514, 1
        %v2516 = vsel %vm2515, %v2509, %v2290
        %v2517 = vld [vmem:[#allocation3 + $0x168] sm:$0xff]
        %v2518 = vld [vmem:[#allocation3 + $0x170] sm:$0xff]
        %v2519 = vld [vmem:[#allocation3 + $0x178] sm:$0xff]
        %v2520 = vpack.c.bf16 %v2403, %v2403
        %2521 = vmatprep.subr.bf16.mxu0 %v862
        %2522 = vmatpush1.bf16.msra.mxu0 %v861
        %2523 = vmatprep.subr.bf16.mxu0 %v865
        %2524 = vmatpush1.bf16.msra.mxu0 %v864
        %2525 = vmatprep.subr.bf16.mxu0 %v868
        %2526 = vmatpush1.bf16.msra.mxu0 %v867
        %2527 = vmatprep.subr.bf16.mxu0 %v871
        %2528 = vmatpush1.bf16.msra.mxu0 %v870
        %2529 = vmatprep.subr.bf16.mxu0 %v874
        %2530 = vmatpush1.bf16.msra.mxu0 %v873
        %2531 = vmatprep.subr.bf16.mxu0 %v877
        %2532 = vmatpush1.bf16.msra.mxu0 %v876
        %2533 = vmatprep.subr.bf16.mxu0 %v880
        %2534 = vmatpush1.bf16.msra.mxu0 %v879
        %2535 = vmatprep.subr.bf16.mxu0 %v883
        %2536 = vmatpush1.bf16.msra.mxu0 %v882
        %2537 = vmatprep.subr.bf16.mxu0 0
        %2538 = vmatpush1.bf16.msra.mxu0 0
        %2539 = vmatprep.subr.bf16.mxu0 0
        %2540 = vmatpush1.bf16.msra.mxu0 0
        %2541 = vmatprep.subr.bf16.mxu0 0
        %2542 = vmatpush1.bf16.msra.mxu0 0
        %2543 = vmatprep.subr.bf16.mxu0 0
        %2544 = vmatpush1.bf16.msra.mxu0 0
        %2545 = vmatprep.subr.bf16.mxu0 0
        %2546 = vmatpush1.bf16.msra.mxu0 0
        %2547 = vmatprep.subr.bf16.mxu0 0
        %2548 = vmatpush1.bf16.msra.mxu0 0
        %2549 = vmatprep.subr.bf16.mxu0 0
        %2550 = vmatpush1.bf16.msra.mxu0 0
        %2551 = vmatprep.subr.bf16.mxu0 0
        %2552 = vmatpush1.bf16.msra.mxu0 0
        %2553 = vmatprep.mubr.bf16.mxu0 0
        %2554 = vmatmul.mubr.bf16.gmra.mrb[0].mxu0 %v2520
        %v2555 = vpop.f32.mrb[0].mxu0
        %v2556 = vadd.f32 0.0, %v2555
        %v2557 = vpop.f32.mrb[0].mxu0
        %v2558 = vadd.f32 0.0, %v2557
        %v2559 = vpop.f32.mrb[0].mxu0
        %v2560 = vpop.f32.mrb[0].mxu0
        %2561 = vdwg.mxu0
        %2562 = vmatprep.subr.bf16.mxu0 0
        %2563 = vmatpush1.bf16.msra.mxu0 %v863
        %2564 = vmatprep.subr.bf16.mxu0 0
        %2565 = vmatpush1.bf16.msra.mxu0 %v866
        %2566 = vmatprep.subr.bf16.mxu0 0
        %2567 = vmatpush1.bf16.msra.mxu0 %v869
        %2568 = vmatprep.subr.bf16.mxu0 0
        %2569 = vmatpush1.bf16.msra.mxu0 %v872
        %2570 = vmatprep.subr.bf16.mxu0 0
        %2571 = vmatpush1.bf16.msra.mxu0 %v875
        %2572 = vmatprep.subr.bf16.mxu0 0
        %2573 = vmatpush1.bf16.msra.mxu0 %v878
        %2574 = vmatprep.subr.bf16.mxu0 0
        %2575 = vmatpush1.bf16.msra.mxu0 %v881
        %2576 = vmatprep.subr.bf16.mxu0 0
        %2577 = vmatpush1.bf16.msra.mxu0 %v884
        %2578 = vmatprep.subr.bf16.mxu0 0
        %2579 = vmatpush1.bf16.msra.mxu0 0
        %2580 = vmatprep.subr.bf16.mxu0 0
        %2581 = vmatpush1.bf16.msra.mxu0 0
        %2582 = vmatprep.subr.bf16.mxu0 0
        %2583 = vmatpush1.bf16.msra.mxu0 0
        %2584 = vmatprep.subr.bf16.mxu0 0
        %2585 = vmatpush1.bf16.msra.mxu0 0
        %2586 = vmatprep.subr.bf16.mxu0 0
        %2587 = vmatpush1.bf16.msra.mxu0 0
        %2588 = vmatprep.subr.bf16.mxu0 0
        %2589 = vmatpush1.bf16.msra.mxu0 0
        %2590 = vmatprep.subr.bf16.mxu0 0
        %2591 = vmatpush1.bf16.msra.mxu0 0
        %2592 = vmatprep.subr.bf16.mxu0 0
        %2593 = vmatpush1.bf16.msra.mxu0 0
        %2594 = vmatprep.mubr.bf16.mxu0 0
        %2595 = vmatmul.mubr.bf16.gmra.mrb[0].mxu0 %v2520
        %v2596 = vpop.f32.mrb[0].mxu0
        %v2597 = vadd.f32 0.0, %v2596
        %v2598 = vpop.f32.mrb[0].mxu0
        %v2599 = vpop.f32.mrb[0].mxu0
        %v2600 = vpop.f32.mrb[0].mxu0
        %2601 = vdwg.mxu0
        %v2602 = vadd.f32 %v2517, %v2556
        %v2603 = vxor.u32 %v2602, 2147483648
        %v2604 = vmul.f32 %v2603, 1.442695
        %v2605 = vpow.pop %v2604
        %v2606 = vadd.f32 %v2605, 1.0
        %v2607 = vrcp.pop %v2606
        %v2608 = vmul.f32 1.0, %v2607
        %v2609 = vadd.f32 %v2518, %v2558
        %v2610 = vxor.u32 %v2609, 2147483648
        %v2611 = vmul.f32 %v2610, 1.442695
        %v2612 = vpow.pop %v2611
        %v2613 = vadd.f32 %v2612, 1.0
        %v2614 = vrcp.pop %v2613
        %v2615 = vmul.f32 1.0, %v2614
        %v2616 = vadd.f32 %v2597, %v774
        %v2617 = vmul.f32 %v2608, %v2616
        %v2618 = vadd.f32 %v2519, %v2617
        %v2619 = vtanh.pop %v2618
        %v2620 = vsub.f32 %v2403, %v2619
        %v2621 = vmul.f32 %v2615, %v2620
        %v2622 = vadd.f32 %v2619, %v2621
        %vm2623 = vcmp.gt.s32.totalorder %v777, 7
        %v2624 = vsel %vm2623, 1, 0
        %2625 = vset.pattern.permute.xlu0 0
        %2626 = vperm.xlu0 %2625, %v2624
        %v2627 = vpop.permute.xlu0 %2626
        %vm2628 = vcmp.eq.s32.totalorder %v2627, 1
        %v2629 = vsel %vm2628, %v2622, %v2403
        %v2630 = vld [vmem:[%s295] sm:$0xff]
        %v2631 = vadd.f32 %v2516, %v2630
        %2632 = vst [vmem:[%s284] sm:$0xff] %v2631
        %v2633 = vld [vmem:[%s295 + $0x8] sm:$0xff]
        %v2634 = vadd.f32 %v2629, %v2633
        %2635 = vst [vmem:[%s284 + $0x8] sm:$0xff] %v2634
        %s2636 = sand.u32 %s173, 1
        %s2637 = scalar_lea.sflag [#allocation9], %s2636
        %s2638 = sand.u32 %s173, 1
        %s2639 = smul.addr %s2638, 16
        %s2640 = scalar_lea.vmem [#allocation10], %s2639
        // Predicated region
        $region100: #{tpu_custom_call.1} parent=43 // pred_check
          %p2641 = pneg %p183
        $region101: #{tpu_custom_call.1} parent=43 // pred_check_branch
          %2643 = sbr.rel (%p2641) target = $region103
        $region102: #{tpu_custom_call.1} parent=43 // pred_region
          %s2644 = smul.u32 2, %s29
          %s2646 = ssub.s32 256, 256
          %2647 = vsyncadd %s2637, %s2646
          %s2648 = smul.addr %s2644, 128
          %s2649 = scalar_lea.hbm %s8, %s2648
          %s2650 = sshll.u32 %s2640, 4
          %s2651 = int_to_ptr.vmem [resolvable:$true] %s2650
          %2656 = dma.vmem_to_hbm [thread:$0]  %s2651, 256, %s2649, %s2637, 128, 128, 8
        $region103: #{tpu_custom_call.1} parent=43 // pred_fallthru
          _
      $region44: #{tpu_custom_call.1} parent=5 // pred_fallthru
        _
      %p2657 = scmp.le.s32.totalorder 2, %s24
      // Predicated region
      $region104: #{tpu_custom_call.1} parent=5 // pred_check
        %p2658 = pneg %p2657
      $region105: #{tpu_custom_call.1} parent=5 // pred_check_branch
        %2660 = sbr.rel (%p2658) target = $region107
      $region106: #{tpu_custom_call.1} parent=5 // pred_region
        %s2661 = ssub.s32 %s24, 2
        // Predicated region
        $region108: #{tpu_custom_call.1} parent=106 // pred_check
          %p2662 = pneg %p189
        $region109: #{tpu_custom_call.1} parent=106 // pred_check_branch
          %2664 = sbr.rel (%p2662) target = $region111
        $region110: #{tpu_custom_call.1} parent=106 // pred_region
          %s2665 = sand.u32 %s174, 1
          %s2666 = scalar_lea.sflag [#allocation9], %s2665
          %s2667 = sand.u32 %s174, 1
          %s2668 = smul.addr %s2667, 16
          %s2669 = scalar_lea.vmem [#allocation10], %s2668
          %2670 = dma.done %s2666, 256
        $region111: #{tpu_custom_call.1} parent=106 // pred_fallthru
          _
      $region107: #{tpu_custom_call.1} parent=5 // pred_fallthru
        _
    $region6: #{tpu_custom_call.1} parent=1 // loop_footer
      %s28 = sadd.s32 1, %s24
    $region7: #{tpu_custom_call.1} parent=1 // loop_footer_branch
      %23 = sbr.rel target = $region3
    $region8: #{tpu_custom_call.1} parent=1 // loop_exit
      _
    %2671 = vsyncpa [#allocation8], 1
    %s2672 = scalar_lea.sflag [#allocation8], 1
    %2673 = vsyncpa %s2672, 1
    %2674 = vsyncpa [#allocation9], 1
    %s2675 = scalar_lea.sflag [#allocation9], 1
    %2676 = vsyncpa %s2675, 1
  %2677 = vsyncmov [#allocation4]
  %s2678 = vpop.sfrf %2677
  %p2679 = scmp.eq.s32.totalorder %s2678, 0
  %p2680 = pneg %p2679
  %2682 = shalt.err (%p2680)

</llo_original>
